<compile_context>
chip_gen: v7x
topology: tpu7x:2x2x1
jax: 0.10.0
libtpu: 0.0.40
codegen_flags: <defaults>
</compile_context>

<pallas_src>
import functools
import math

import jax
import jax.numpy as jnp
from jax.experimental import pallas as pl
from jax.experimental.pallas import tpu as pltpu


# ----------------------------------------------------------------------------
# Pallas kernel: fused 3x3 conv + bias + ReLU + 1x1 conv (1 channel) + bias
# for a block of Bblk images.
# ----------------------------------------------------------------------------
def _half_ds_kernel(x_ref, wen_ref, ben_ref, wpr_ref, bpr_ref, out_ref, *,
                    Wp, Nout, Bblk):
    # x_ref  : (Bblk, C, Sp)  bf16  flattened zero-padded NCHW slab (Sp = Hp*Wp+2)
    # wen_ref: (9, Cmid, C)   bf16  3x3 conv weights, tap-major, (out, in)
    # ben_ref: (Cmid, 1)      f32   enlayer bias (channels on sublanes)
    # wpr_ref: (Cmid, 1)      f32   predlayer (1x1, single out channel) weight
    # bpr_ref: (1,)           f32   predlayer bias (SMEM scalar)
    # out_ref: (Bblk, Nout)   f32   flat single-channel prediction (lane-dense)
    ben = ben_ref[...]
    wpr = wpr_ref[...]
    bpr = bpr_ref[0]
    for b in range(Bblk):                      # static unroll; one image's acc live at a time
        # Tap 0 initializes the accumulator; taps 1..8 accumulate.  Each tap is
        # W_tap^T (Cmid, C) @ X^T (C, Nout) on the MXU, where the tap is simply
        # a static flat lane offset into the padded slab (pad absorbs wrap).
        acc = jnp.dot(wen_ref[0], x_ref[b, :, 0:Nout],
                      preferred_element_type=jnp.float32)
        for tap in range(1, 9):
            off = (tap // 3) * Wp + (tap % 3)
            acc = acc + jnp.dot(wen_ref[tap], x_ref[b, :, off:off + Nout],
                                preferred_element_type=jnp.float32)
        h = jnp.maximum(acc + ben, 0.0)                        # bias + ReLU (f32)
        # predlayer: 1x1 conv to one channel == sublane reduce over Cmid.
        pred = jnp.sum(h * wpr, axis=0, keepdims=True) + bpr   # (1, Nout) lane-dense
        out_ref[b:b + 1, :] = pred.astype(out_ref.dtype)


# ----------------------------------------------------------------------------
# Host wrapper
# ----------------------------------------------------------------------------
def half_ds_layer_forward(x, params, *, bblk_max=8):
    """x: (B, C, H, W) float32 (NCHW, like the torch module) -> (B, 1, H, W)."""
    B, C, H, W = x.shape
    Cmid = C // 4
    Hp, Wp = H + 2, W + 2
    Nout = H * Wp                 # flat output width; columns >= W of each row are junk
    Sp = Hp * Wp + 2              # flat padded slab + 2 tail zeros so every tap
                                  # slice off : off+Nout stays in range (max off = 2*Wp+2)

    # Batch block: largest divisor of B that is <= bblk_max.
    Bblk = min(B, bblk_max)
    while B % Bblk:
        Bblk -= 1
    grid = (B // Bblk,)

    # Host prep: zero-pad spatially (padding=1), flatten spatial, add 2 tail
    # zeros, cast the matmul operand to bf16.  No NCHW->NHWC transpose needed.
    xp = jnp.pad(x, ((0, 0), (0, 0), (1, 1), (1, 1))).reshape(B, C, Hp * Wp)
    xp = jnp.pad(xp, ((0, 0), (0, 0), (0, 2))).astype(jnp.bfloat16)

    kernel = functools.partial(_half_ds_kernel, Wp=Wp, Nout=Nout, Bblk=Bblk)

    in_block_bytes = Bblk * C * Sp * 2
    out_block_bytes = Bblk * Nout * 4
    w_bytes = params["w_en"].size * 2 + (params["b_en"].size
                                         + params["w_pr"].size
                                         + params["b_pr"].size) * 4
    # Double-buffered activation/out blocks + resident weights + headroom,
    # clamped to <= 48 MiB so the same setting is safe on v7x's 64 MiB VMEM.
    vmem_limit = int(min(max(2 * (in_block_bytes + out_block_bytes) + w_bytes
                             + (4 << 20), 32 << 20), 48 << 20))

    flops = 2 * B * Nout * Cmid * (9 * C + 1)
    bytes_accessed = int(xp.size * 2 + w_bytes + B * Nout * 4)

    out_flat = pl.pallas_call(
        kernel,
        out_shape=jax.ShapeDtypeStruct((B, Nout), jnp.float32),
        grid=grid,
        in_specs=[
            # batch-blocked activation slab (auto double-buffered by the grid)
            pl.BlockSpec((Bblk, C, Sp), lambda i: (i, 0, 0)),
            # weights / biases: constant index_map -> fetched once, kept resident
            pl.BlockSpec((9, Cmid, C), lambda i: (0, 0, 0)),
            pl.BlockSpec((Cmid, 1), lambda i: (0, 0)),
            pl.BlockSpec((Cmid, 1), lambda i: (0, 0)),
            pl.BlockSpec(memory_space=pltpu.MemorySpace.SMEM),
        ],
        out_specs=pl.BlockSpec((Bblk, Nout), lambda i: (i, 0)),
        compiler_params=pltpu.CompilerParams(
            dimension_semantics=("parallel",),
            vmem_limit_bytes=vmem_limit),
        cost_estimate=pl.CostEstimate(flops=flops, transcendentals=0,
                                      bytes_accessed=bytes_accessed),
    )(xp, params["w_en"], params["b_en"], params["w_pr"], params["b_pr"])

    # Valid interior: flat index f = y*Wp + x with y < H, x < W.
    out = out_flat.reshape(B, H, Wp)[:, :, :W]
    return out[:, None, :, :]


# ----------------------------------------------------------------------------
# Deterministic parameter init (shapes from half_DSLayer.__init__)
# ----------------------------------------------------------------------------
def init_params(key, C):
    Cmid = C // 4
    k1, k2, k3, k4 = jax.random.split(key, 4)
    w_en_oihw = jax.random.normal(k1, (Cmid, C, 3, 3), jnp.float32) * math.sqrt(2.0 / (9 * C))
    b_en = jax.random.normal(k2, (Cmid,), jnp.float32) * 0.05
    w_pr_oihw = jax.random.normal(k3, (1, Cmid, 1, 1), jnp.float32) * math.sqrt(2.0 / Cmid)
    b_pr = jax.random.normal(k4, (1,), jnp.float32) * 0.05

    # Kernel-friendly layouts: tap-major (dy*3+dx, Cout, Cin) transposed weights
    # in bf16 for the MXU; biases / predlayer weight stay f32, channel-on-sublane.
    kernel_params = dict(
        w_en=jnp.transpose(w_en_oihw, (2, 3, 0, 1)).reshape(9, Cmid, C).astype(jnp.bfloat16),
        b_en=b_en.reshape(Cmid, 1),
        w_pr=w_pr_oihw.reshape(Cmid, 1),
        b_pr=b_pr,
    )
    torch_layout_params = dict(w_en=w_en_oihw, b_en=b_en, w_pr=w_pr_oihw, b_pr=b_pr)
    return kernel_params, torch_layout_params


# ----------------------------------------------------------------------------
# Pure-JAX f32 reference (mirrors the torch module) for a correctness check.
# ----------------------------------------------------------------------------
def _half_ds_ref(x, p):
    y = jax.lax.conv_general_dilated(
        x, p["w_en"], window_strides=(1, 1), padding=((1, 1), (1, 1)),
        dimension_numbers=("NCHW", "OIHW", "NCHW"))
    y = jnp.maximum(y + p["b_en"].reshape(1, -1, 1, 1), 0.0)
    z = jax.lax.conv_general_dilated(
        y, p["w_pr"], window_strides=(1, 1), padding=((0, 0), (0, 0)),
        dimension_numbers=("NCHW", "OIHW", "NCHW"))
    return z + p["b_pr"].reshape(1, 1, 1, 1)


if __name__ == "__main__":
    key = jax.random.PRNGKey(0)
    k_x, k_p = jax.random.split(key)

    # Small shapes consistent with the module: batch=2, channel_in=128
    # (-> hidden 32 channels), 16x16 spatial.  Lane-aligned input channels.
    B, C, H, W = 2, 128, 16, 16
    x = jax.random.normal(k_x, (B, C, H, W), jnp.float32)
    kernel_params, torch_params = init_params(k_p, C)

    out = half_ds_layer_forward(x, kernel_params)
    jax.block_until_ready(out)
    assert out.shape == (B, 1, H, W)

    ref = _half_ds_ref(x, torch_params)
    max_err = float(jnp.max(jnp.abs(out - ref)))
    assert bool(jnp.allclose(out, ref, rtol=2e-2, atol=4e-2)), max_err

    print("KERNEL_OK")
</pallas_src>

<mosaic_0001>
module attributes {stable_mosaic.version = 11 : i64} {
  func.func @_half_ds_kernel(%arg0: i32, %arg1: memref<2x128x326xbf16, #tpu.memory_space<vmem>>, %arg2: memref<9x32x128xbf16, #tpu.memory_space<vmem>>, %arg3: memref<32x1xf32, #tpu.memory_space<vmem>>, %arg4: memref<32x1xf32, #tpu.memory_space<vmem>>, %arg5: memref<1xf32, #tpu.memory_space<smem>>, %arg6: memref<2x288xf32, #tpu.memory_space<vmem>>) attributes {dimension_semantics = [#tpu.dimension_semantics<parallel>], iteration_bounds = array<i64: 1>, scalar_prefetch = 0 : i64, scratch_operands = 0 : i64, tpu.core_type = #tpu.core_type<tc>, window_params = [{transform_indices = @transform_0, window_bounds = array<i64: 2, 128, 326>}, {pipeline_mode = #tpu.pipeline_mode<synchronous>, transform_indices = @transform_1, window_bounds = array<i64: 9, 32, 128>}, {pipeline_mode = #tpu.pipeline_mode<synchronous>, transform_indices = @transform_2, window_bounds = array<i64: 32, 1>}, {pipeline_mode = #tpu.pipeline_mode<synchronous>, transform_indices = @transform_3, window_bounds = array<i64: 32, 1>}, {transform_indices = @transform_4, window_bounds = array<i64: 1>}, {transform_indices = @transform_5, window_bounds = array<i64: 2, 288>}]} {
    %c0 = arith.constant 0 : index
    %c0_0 = arith.constant 0 : index
    %0 = vector.load %arg3[%c0, %c0_0] : memref<32x1xf32, #tpu.memory_space<vmem>>, vector<32x1xf32>
    %c0_1 = arith.constant 0 : index
    %c0_2 = arith.constant 0 : index
    %1 = vector.load %arg4[%c0_1, %c0_2] : memref<32x1xf32, #tpu.memory_space<vmem>>, vector<32x1xf32>
    %c0_3 = arith.constant 0 : index
    %2 = memref.load %arg5[%c0_3] : memref<1xf32, #tpu.memory_space<smem>>
    %c0_4 = arith.constant 0 : index
    %c0_5 = arith.constant 0 : index
    %c0_6 = arith.constant 0 : index
    %3 = vector.load %arg2[%c0_4, %c0_5, %c0_6] : memref<9x32x128xbf16, #tpu.memory_space<vmem>>, vector<1x32x128xbf16>
    %4 = vector.shape_cast %3 : vector<1x32x128xbf16> to vector<32x128xbf16>
    %c0_7 = arith.constant 0 : index
    %c0_8 = arith.constant 0 : index
    %c0_9 = arith.constant 0 : index
    %5 = vector.load %arg1[%c0_7, %c0_8, %c0_9] : memref<2x128x326xbf16, #tpu.memory_space<vmem>>, vector<1x128x288xbf16>
    %6 = vector.shape_cast %5 : vector<1x128x288xbf16> to vector<128x288xbf16>
    %cst = arith.constant dense<0.000000e+00> : vector<32x288xf32>
    %7 = tpu.matmul %4, %6, %cst {dimension_numbers = #tpu.dot_dimension_numbers<[1], [0], [0], [1], [0, 0, 1, 1], [], []>} : vector<32x128xbf16>, vector<128x288xbf16>, vector<32x288xf32> -> vector<32x288xf32>
    %c1 = arith.constant 1 : index
    %c0_10 = arith.constant 0 : index
    %c0_11 = arith.constant 0 : index
    %8 = vector.load %arg2[%c1, %c0_10, %c0_11] : memref<9x32x128xbf16, #tpu.memory_space<vmem>>, vector<1x32x128xbf16>
    %9 = vector.shape_cast %8 : vector<1x32x128xbf16> to vector<32x128xbf16>
    %c0_12 = arith.constant 0 : index
    %c0_13 = arith.constant 0 : index
    %c1_14 = arith.constant 1 : index
    %10 = vector.load %arg1[%c0_12, %c0_13, %c1_14] : memref<2x128x326xbf16, #tpu.memory_space<vmem>>, vector<1x128x288xbf16>
    %11 = vector.shape_cast %10 : vector<1x128x288xbf16> to vector<128x288xbf16>
    %cst_15 = arith.constant dense<0.000000e+00> : vector<32x288xf32>
    %12 = tpu.matmul %9, %11, %cst_15 {dimension_numbers = #tpu.dot_dimension_numbers<[1], [0], [0], [1], [0, 0, 1, 1], [], []>} : vector<32x128xbf16>, vector<128x288xbf16>, vector<32x288xf32> -> vector<32x288xf32>
    %13 = arith.addf %7, %12 : vector<32x288xf32>
    %c2 = arith.constant 2 : index
    %c0_16 = arith.constant 0 : index
    %c0_17 = arith.constant 0 : index
    %14 = vector.load %arg2[%c2, %c0_16, %c0_17] : memref<9x32x128xbf16, #tpu.memory_space<vmem>>, vector<1x32x128xbf16>
    %15 = vector.shape_cast %14 : vector<1x32x128xbf16> to vector<32x128xbf16>
    %c0_18 = arith.constant 0 : index
    %c0_19 = arith.constant 0 : index
    %c2_20 = arith.constant 2 : index
    %16 = vector.load %arg1[%c0_18, %c0_19, %c2_20] : memref<2x128x326xbf16, #tpu.memory_space<vmem>>, vector<1x128x288xbf16>
    %17 = vector.shape_cast %16 : vector<1x128x288xbf16> to vector<128x288xbf16>
    %cst_21 = arith.constant dense<0.000000e+00> : vector<32x288xf32>
    %18 = tpu.matmul %15, %17, %cst_21 {dimension_numbers = #tpu.dot_dimension_numbers<[1], [0], [0], [1], [0, 0, 1, 1], [], []>} : vector<32x128xbf16>, vector<128x288xbf16>, vector<32x288xf32> -> vector<32x288xf32>
    %19 = arith.addf %13, %18 : vector<32x288xf32>
    %c3 = arith.constant 3 : index
    %c0_22 = arith.constant 0 : index
    %c0_23 = arith.constant 0 : index
    %20 = vector.load %arg2[%c3, %c0_22, %c0_23] : memref<9x32x128xbf16, #tpu.memory_space<vmem>>, vector<1x32x128xbf16>
    %21 = vector.shape_cast %20 : vector<1x32x128xbf16> to vector<32x128xbf16>
    %c0_24 = arith.constant 0 : index
    %c0_25 = arith.constant 0 : index
    %c18 = arith.constant 18 : index
    %22 = vector.load %arg1[%c0_24, %c0_25, %c18] : memref<2x128x326xbf16, #tpu.memory_space<vmem>>, vector<1x128x288xbf16>
    %23 = vector.shape_cast %22 : vector<1x128x288xbf16> to vector<128x288xbf16>
    %cst_26 = arith.constant dense<0.000000e+00> : vector<32x288xf32>
    %24 = tpu.matmul %21, %23, %cst_26 {dimension_numbers = #tpu.dot_dimension_numbers<[1], [0], [0], [1], [0, 0, 1, 1], [], []>} : vector<32x128xbf16>, vector<128x288xbf16>, vector<32x288xf32> -> vector<32x288xf32>
    %25 = arith.addf %19, %24 : vector<32x288xf32>
    %c4 = arith.constant 4 : index
    %c0_27 = arith.constant 0 : index
    %c0_28 = arith.constant 0 : index
    %26 = vector.load %arg2[%c4, %c0_27, %c0_28] : memref<9x32x128xbf16, #tpu.memory_space<vmem>>, vector<1x32x128xbf16>
    %27 = vector.shape_cast %26 : vector<1x32x128xbf16> to vector<32x128xbf16>
    %c0_29 = arith.constant 0 : index
    %c0_30 = arith.constant 0 : index
    %c19 = arith.constant 19 : index
    %28 = vector.load %arg1[%c0_29, %c0_30, %c19] : memref<2x128x326xbf16, #tpu.memory_space<vmem>>, vector<1x128x288xbf16>
    %29 = vector.shape_cast %28 : vector<1x128x288xbf16> to vector<128x288xbf16>
    %cst_31 = arith.constant dense<0.000000e+00> : vector<32x288xf32>
    %30 = tpu.matmul %27, %29, %cst_31 {dimension_numbers = #tpu.dot_dimension_numbers<[1], [0], [0], [1], [0, 0, 1, 1], [], []>} : vector<32x128xbf16>, vector<128x288xbf16>, vector<32x288xf32> -> vector<32x288xf32>
    %31 = arith.addf %25, %30 : vector<32x288xf32>
    %c5 = arith.constant 5 : index
    %c0_32 = arith.constant 0 : index
    %c0_33 = arith.constant 0 : index
    %32 = vector.load %arg2[%c5, %c0_32, %c0_33] : memref<9x32x128xbf16, #tpu.memory_space<vmem>>, vector<1x32x128xbf16>
    %33 = vector.shape_cast %32 : vector<1x32x128xbf16> to vector<32x128xbf16>
    %c0_34 = arith.constant 0 : index
    %c0_35 = arith.constant 0 : index
    %c20 = arith.constant 20 : index
    %34 = vector.load %arg1[%c0_34, %c0_35, %c20] : memref<2x128x326xbf16, #tpu.memory_space<vmem>>, vector<1x128x288xbf16>
    %35 = vector.shape_cast %34 : vector<1x128x288xbf16> to vector<128x288xbf16>
    %cst_36 = arith.constant dense<0.000000e+00> : vector<32x288xf32>
    %36 = tpu.matmul %33, %35, %cst_36 {dimension_numbers = #tpu.dot_dimension_numbers<[1], [0], [0], [1], [0, 0, 1, 1], [], []>} : vector<32x128xbf16>, vector<128x288xbf16>, vector<32x288xf32> -> vector<32x288xf32>
    %37 = arith.addf %31, %36 : vector<32x288xf32>
    %c6 = arith.constant 6 : index
    %c0_37 = arith.constant 0 : index
    %c0_38 = arith.constant 0 : index
    %38 = vector.load %arg2[%c6, %c0_37, %c0_38] : memref<9x32x128xbf16, #tpu.memory_space<vmem>>, vector<1x32x128xbf16>
    %39 = vector.shape_cast %38 : vector<1x32x128xbf16> to vector<32x128xbf16>
    %c0_39 = arith.constant 0 : index
    %c0_40 = arith.constant 0 : index
    %c36 = arith.constant 36 : index
    %40 = vector.load %arg1[%c0_39, %c0_40, %c36] : memref<2x128x326xbf16, #tpu.memory_space<vmem>>, vector<1x128x288xbf16>
    %41 = vector.shape_cast %40 : vector<1x128x288xbf16> to vector<128x288xbf16>
    %cst_41 = arith.constant dense<0.000000e+00> : vector<32x288xf32>
    %42 = tpu.matmul %39, %41, %cst_41 {dimension_numbers = #tpu.dot_dimension_numbers<[1], [0], [0], [1], [0, 0, 1, 1], [], []>} : vector<32x128xbf16>, vector<128x288xbf16>, vector<32x288xf32> -> vector<32x288xf32>
    %43 = arith.addf %37, %42 : vector<32x288xf32>
    %c7 = arith.constant 7 : index
    %c0_42 = arith.constant 0 : index
    %c0_43 = arith.constant 0 : index
    %44 = vector.load %arg2[%c7, %c0_42, %c0_43] : memref<9x32x128xbf16, #tpu.memory_space<vmem>>, vector<1x32x128xbf16>
    %45 = vector.shape_cast %44 : vector<1x32x128xbf16> to vector<32x128xbf16>
    %c0_44 = arith.constant 0 : index
    %c0_45 = arith.constant 0 : index
    %c37 = arith.constant 37 : index
    %46 = vector.load %arg1[%c0_44, %c0_45, %c37] : memref<2x128x326xbf16, #tpu.memory_space<vmem>>, vector<1x128x288xbf16>
    %47 = vector.shape_cast %46 : vector<1x128x288xbf16> to vector<128x288xbf16>
    %cst_46 = arith.constant dense<0.000000e+00> : vector<32x288xf32>
    %48 = tpu.matmul %45, %47, %cst_46 {dimension_numbers = #tpu.dot_dimension_numbers<[1], [0], [0], [1], [0, 0, 1, 1], [], []>} : vector<32x128xbf16>, vector<128x288xbf16>, vector<32x288xf32> -> vector<32x288xf32>
    %49 = arith.addf %43, %48 : vector<32x288xf32>
    %c8 = arith.constant 8 : index
    %c0_47 = arith.constant 0 : index
    %c0_48 = arith.constant 0 : index
    %50 = vector.load %arg2[%c8, %c0_47, %c0_48] : memref<9x32x128xbf16, #tpu.memory_space<vmem>>, vector<1x32x128xbf16>
    %51 = vector.shape_cast %50 : vector<1x32x128xbf16> to vector<32x128xbf16>
    %c0_49 = arith.constant 0 : index
    %c0_50 = arith.constant 0 : index
    %c38 = arith.constant 38 : index
    %52 = vector.load %arg1[%c0_49, %c0_50, %c38] : memref<2x128x326xbf16, #tpu.memory_space<vmem>>, vector<1x128x288xbf16>
    %53 = vector.shape_cast %52 : vector<1x128x288xbf16> to vector<128x288xbf16>
    %cst_51 = arith.constant dense<0.000000e+00> : vector<32x288xf32>
    %54 = tpu.matmul %51, %53, %cst_51 {dimension_numbers = #tpu.dot_dimension_numbers<[1], [0], [0], [1], [0, 0, 1, 1], [], []>} : vector<32x128xbf16>, vector<128x288xbf16>, vector<32x288xf32> -> vector<32x288xf32>
    %55 = arith.addf %49, %54 : vector<32x288xf32>
    %56 = vector.broadcast %0 : vector<32x1xf32> to vector<32x288xf32>
    %57 = arith.addf %55, %56 : vector<32x288xf32>
    %cst_52 = arith.constant 0.000000e+00 : f32
    %58 = vector.broadcast %cst_52 : f32 to vector<32x288xf32>
    %59 = arith.maximumf %57, %58 : vector<32x288xf32>
    %60 = vector.broadcast %1 : vector<32x1xf32> to vector<32x288xf32>
    %61 = arith.mulf %59, %60 : vector<32x288xf32>
    %cst_53 = arith.constant dense<0.000000e+00> : vector<288xf32>
    %62 = vector.multi_reduction <add>, %61, %cst_53 [0] : vector<32x288xf32> to vector<288xf32>
    %63 = vector.shape_cast %62 : vector<288xf32> to vector<1x288xf32>
    %64 = vector.broadcast %2 : f32 to vector<1x288xf32>
    %65 = arith.addf %63, %64 : vector<1x288xf32>
    %c0_54 = arith.constant 0 : index
    %c0_55 = arith.constant 0 : index
    %66 = vector.load %arg6[%c0_54, %c0_55] : memref<2x288xf32, #tpu.memory_space<vmem>>, vector<1x288xf32>
    tpu.vector_store %arg6[%c0_54, %c0_55], %65 {strides = array<i32>} : memref<2x288xf32, #tpu.memory_space<vmem>>, vector<1x288xf32>,
    %c0_56 = arith.constant 0 : index
    %c0_57 = arith.constant 0 : index
    %c0_58 = arith.constant 0 : index
    %67 = vector.load %arg2[%c0_56, %c0_57, %c0_58] : memref<9x32x128xbf16, #tpu.memory_space<vmem>>, vector<1x32x128xbf16>
    %68 = vector.shape_cast %67 : vector<1x32x128xbf16> to vector<32x128xbf16>
    %c1_59 = arith.constant 1 : index
    %c0_60 = arith.constant 0 : index
    %c0_61 = arith.constant 0 : index
    %69 = vector.load %arg1[%c1_59, %c0_60, %c0_61] : memref<2x128x326xbf16, #tpu.memory_space<vmem>>, vector<1x128x288xbf16>
    %70 = vector.shape_cast %69 : vector<1x128x288xbf16> to vector<128x288xbf16>
    %cst_62 = arith.constant dense<0.000000e+00> : vector<32x288xf32>
    %71 = tpu.matmul %68, %70, %cst_62 {dimension_numbers = #tpu.dot_dimension_numbers<[1], [0], [0], [1], [0, 0, 1, 1], [], []>} : vector<32x128xbf16>, vector<128x288xbf16>, vector<32x288xf32> -> vector<32x288xf32>
    %c1_63 = arith.constant 1 : index
    %c0_64 = arith.constant 0 : index
    %c0_65 = arith.constant 0 : index
    %72 = vector.load %arg2[%c1_63, %c0_64, %c0_65] : memref<9x32x128xbf16, #tpu.memory_space<vmem>>, vector<1x32x128xbf16>
    %73 = vector.shape_cast %72 : vector<1x32x128xbf16> to vector<32x128xbf16>
    %c1_66 = arith.constant 1 : index
    %c0_67 = arith.constant 0 : index
    %c1_68 = arith.constant 1 : index
    %74 = vector.load %arg1[%c1_66, %c0_67, %c1_68] : memref<2x128x326xbf16, #tpu.memory_space<vmem>>, vector<1x128x288xbf16>
    %75 = vector.shape_cast %74 : vector<1x128x288xbf16> to vector<128x288xbf16>
    %cst_69 = arith.constant dense<0.000000e+00> : vector<32x288xf32>
    %76 = tpu.matmul %73, %75, %cst_69 {dimension_numbers = #tpu.dot_dimension_numbers<[1], [0], [0], [1], [0, 0, 1, 1], [], []>} : vector<32x128xbf16>, vector<128x288xbf16>, vector<32x288xf32> -> vector<32x288xf32>
    %77 = arith.addf %71, %76 : vector<32x288xf32>
    %c2_70 = arith.constant 2 : index
    %c0_71 = arith.constant 0 : index
    %c0_72 = arith.constant 0 : index
    %78 = vector.load %arg2[%c2_70, %c0_71, %c0_72] : memref<9x32x128xbf16, #tpu.memory_space<vmem>>, vector<1x32x128xbf16>
    %79 = vector.shape_cast %78 : vector<1x32x128xbf16> to vector<32x128xbf16>
    %c1_73 = arith.constant 1 : index
    %c0_74 = arith.constant 0 : index
    %c2_75 = arith.constant 2 : index
    %80 = vector.load %arg1[%c1_73, %c0_74, %c2_75] : memref<2x128x326xbf16, #tpu.memory_space<vmem>>, vector<1x128x288xbf16>
    %81 = vector.shape_cast %80 : vector<1x128x288xbf16> to vector<128x288xbf16>
    %cst_76 = arith.constant dense<0.000000e+00> : vector<32x288xf32>
    %82 = tpu.matmul %79, %81, %cst_76 {dimension_numbers = #tpu.dot_dimension_numbers<[1], [0], [0], [1], [0, 0, 1, 1], [], []>} : vector<32x128xbf16>, vector<128x288xbf16>, vector<32x288xf32> -> vector<32x288xf32>
    %83 = arith.addf %77, %82 : vector<32x288xf32>
    %c3_77 = arith.constant 3 : index
    %c0_78 = arith.constant 0 : index
    %c0_79 = arith.constant 0 : index
    %84 = vector.load %arg2[%c3_77, %c0_78, %c0_79] : memref<9x32x128xbf16, #tpu.memory_space<vmem>>, vector<1x32x128xbf16>
    %85 = vector.shape_cast %84 : vector<1x32x128xbf16> to vector<32x128xbf16>
    %c1_80 = arith.constant 1 : index
    %c0_81 = arith.constant 0 : index
    %c18_82 = arith.constant 18 : index
    %86 = vector.load %arg1[%c1_80, %c0_81, %c18_82] : memref<2x128x326xbf16, #tpu.memory_space<vmem>>, vector<1x128x288xbf16>
    %87 = vector.shape_cast %86 : vector<1x128x288xbf16> to vector<128x288xbf16>
    %cst_83 = arith.constant dense<0.000000e+00> : vector<32x288xf32>
    %88 = tpu.matmul %85, %87, %cst_83 {dimension_numbers = #tpu.dot_dimension_numbers<[1], [0], [0], [1], [0, 0, 1, 1], [], []>} : vector<32x128xbf16>, vector<128x288xbf16>, vector<32x288xf32> -> vector<32x288xf32>
    %89 = arith.addf %83, %88 : vector<32x288xf32>
    %c4_84 = arith.constant 4 : index
    %c0_85 = arith.constant 0 : index
    %c0_86 = arith.constant 0 : index
    %90 = vector.load %arg2[%c4_84, %c0_85, %c0_86] : memref<9x32x128xbf16, #tpu.memory_space<vmem>>, vector<1x32x128xbf16>
    %91 = vector.shape_cast %90 : vector<1x32x128xbf16> to vector<32x128xbf16>
    %c1_87 = arith.constant 1 : index
    %c0_88 = arith.constant 0 : index
    %c19_89 = arith.constant 19 : index
    %92 = vector.load %arg1[%c1_87, %c0_88, %c19_89] : memref<2x128x326xbf16, #tpu.memory_space<vmem>>, vector<1x128x288xbf16>
    %93 = vector.shape_cast %92 : vector<1x128x288xbf16> to vector<128x288xbf16>
    %cst_90 = arith.constant dense<0.000000e+00> : vector<32x288xf32>
    %94 = tpu.matmul %91, %93, %cst_90 {dimension_numbers = #tpu.dot_dimension_numbers<[1], [0], [0], [1], [0, 0, 1, 1], [], []>} : vector<32x128xbf16>, vector<128x288xbf16>, vector<32x288xf32> -> vector<32x288xf32>
    %95 = arith.addf %89, %94 : vector<32x288xf32>
    %c5_91 = arith.constant 5 : index
    %c0_92 = arith.constant 0 : index
    %c0_93 = arith.constant 0 : index
    %96 = vector.load %arg2[%c5_91, %c0_92, %c0_93] : memref<9x32x128xbf16, #tpu.memory_space<vmem>>, vector<1x32x128xbf16>
    %97 = vector.shape_cast %96 : vector<1x32x128xbf16> to vector<32x128xbf16>
    %c1_94 = arith.constant 1 : index
    %c0_95 = arith.constant 0 : index
    %c20_96 = arith.constant 20 : index
    %98 = vector.load %arg1[%c1_94, %c0_95, %c20_96] : memref<2x128x326xbf16, #tpu.memory_space<vmem>>, vector<1x128x288xbf16>
    %99 = vector.shape_cast %98 : vector<1x128x288xbf16> to vector<128x288xbf16>
    %cst_97 = arith.constant dense<0.000000e+00> : vector<32x288xf32>
    %100 = tpu.matmul %97, %99, %cst_97 {dimension_numbers = #tpu.dot_dimension_numbers<[1], [0], [0], [1], [0, 0, 1, 1], [], []>} : vector<32x128xbf16>, vector<128x288xbf16>, vector<32x288xf32> -> vector<32x288xf32>
    %101 = arith.addf %95, %100 : vector<32x288xf32>
    %c6_98 = arith.constant 6 : index
    %c0_99 = arith.constant 0 : index
    %c0_100 = arith.constant 0 : index
    %102 = vector.load %arg2[%c6_98, %c0_99, %c0_100] : memref<9x32x128xbf16, #tpu.memory_space<vmem>>, vector<1x32x128xbf16>
    %103 = vector.shape_cast %102 : vector<1x32x128xbf16> to vector<32x128xbf16>
    %c1_101 = arith.constant 1 : index
    %c0_102 = arith.constant 0 : index
    %c36_103 = arith.constant 36 : index
    %104 = vector.load %arg1[%c1_101, %c0_102, %c36_103] : memref<2x128x326xbf16, #tpu.memory_space<vmem>>, vector<1x128x288xbf16>
    %105 = vector.shape_cast %104 : vector<1x128x288xbf16> to vector<128x288xbf16>
    %cst_104 = arith.constant dense<0.000000e+00> : vector<32x288xf32>
    %106 = tpu.matmul %103, %105, %cst_104 {dimension_numbers = #tpu.dot_dimension_numbers<[1], [0], [0], [1], [0, 0, 1, 1], [], []>} : vector<32x128xbf16>, vector<128x288xbf16>, vector<32x288xf32> -> vector<32x288xf32>
    %107 = arith.addf %101, %106 : vector<32x288xf32>
    %c7_105 = arith.constant 7 : index
    %c0_106 = arith.constant 0 : index
    %c0_107 = arith.constant 0 : index
    %108 = vector.load %arg2[%c7_105, %c0_106, %c0_107] : memref<9x32x128xbf16, #tpu.memory_space<vmem>>, vector<1x32x128xbf16>
    %109 = vector.shape_cast %108 : vector<1x32x128xbf16> to vector<32x128xbf16>
    %c1_108 = arith.constant 1 : index
    %c0_109 = arith.constant 0 : index
    %c37_110 = arith.constant 37 : index
    %110 = vector.load %arg1[%c1_108, %c0_109, %c37_110] : memref<2x128x326xbf16, #tpu.memory_space<vmem>>, vector<1x128x288xbf16>
    %111 = vector.shape_cast %110 : vector<1x128x288xbf16> to vector<128x288xbf16>
    %cst_111 = arith.constant dense<0.000000e+00> : vector<32x288xf32>
    %112 = tpu.matmul %109, %111, %cst_111 {dimension_numbers = #tpu.dot_dimension_numbers<[1], [0], [0], [1], [0, 0, 1, 1], [], []>} : vector<32x128xbf16>, vector<128x288xbf16>, vector<32x288xf32> -> vector<32x288xf32>
    %113 = arith.addf %107, %112 : vector<32x288xf32>
    %c8_112 = arith.constant 8 : index
    %c0_113 = arith.constant 0 : index
    %c0_114 = arith.constant 0 : index
    %114 = vector.load %arg2[%c8_112, %c0_113, %c0_114] : memref<9x32x128xbf16, #tpu.memory_space<vmem>>, vector<1x32x128xbf16>
    %115 = vector.shape_cast %114 : vector<1x32x128xbf16> to vector<32x128xbf16>
    %c1_115 = arith.constant 1 : index
    %c0_116 = arith.constant 0 : index
    %c38_117 = arith.constant 38 : index
    %116 = vector.load %arg1[%c1_115, %c0_116, %c38_117] : memref<2x128x326xbf16, #tpu.memory_space<vmem>>, vector<1x128x288xbf16>
    %117 = vector.shape_cast %116 : vector<1x128x288xbf16> to vector<128x288xbf16>
    %cst_118 = arith.constant dense<0.000000e+00> : vector<32x288xf32>
    %118 = tpu.matmul %115, %117, %cst_118 {dimension_numbers = #tpu.dot_dimension_numbers<[1], [0], [0], [1], [0, 0, 1, 1], [], []>} : vector<32x128xbf16>, vector<128x288xbf16>, vector<32x288xf32> -> vector<32x288xf32>
    %119 = arith.addf %113, %118 : vector<32x288xf32>
    %120 = vector.broadcast %0 : vector<32x1xf32> to vector<32x288xf32>
    %121 = arith.addf %119, %120 : vector<32x288xf32>
    %cst_119 = arith.constant 0.000000e+00 : f32
    %122 = vector.broadcast %cst_119 : f32 to vector<32x288xf32>
    %123 = arith.maximumf %121, %122 : vector<32x288xf32>
    %124 = vector.broadcast %1 : vector<32x1xf32> to vector<32x288xf32>
    %125 = arith.mulf %123, %124 : vector<32x288xf32>
    %cst_120 = arith.constant dense<0.000000e+00> : vector<288xf32>
    %126 = vector.multi_reduction <add>, %125, %cst_120 [0] : vector<32x288xf32> to vector<288xf32>
    %127 = vector.shape_cast %126 : vector<288xf32> to vector<1x288xf32>
    %128 = vector.broadcast %2 : f32 to vector<1x288xf32>
    %129 = arith.addf %127, %128 : vector<1x288xf32>
    %c1_121 = arith.constant 1 : index
    %c0_122 = arith.constant 0 : index
    %130 = vector.load %arg6[%c1_121, %c0_122] : memref<2x288xf32, #tpu.memory_space<vmem>>, vector<1x288xf32>
    tpu.vector_store %arg6[%c1_121, %c0_122], %129 {strides = array<i32>} : memref<2x288xf32, #tpu.memory_space<vmem>>, vector<1x288xf32>,
    return
  }
  func.func @transform_0(%arg0: i32) -> (i32, i32, i32) {
    %c0_i32 = arith.constant 0 : i32
    %c0_i32_0 = arith.constant 0 : i32
    %c0_i32_1 = arith.constant 0 : i32
    return %arg0, %c0_i32, %c0_i32_0 : i32, i32, i32
  }
  func.func @transform_1(%arg0: i32) -> (i32, i32, i32) {
    %c0_i32 = arith.constant 0 : i32
    %c0_i32_0 = arith.constant 0 : i32
    %c0_i32_1 = arith.constant 0 : i32
    %c0_i32_2 = arith.constant 0 : i32
    return %c0_i32, %c0_i32_0, %c0_i32_1 : i32, i32, i32
  }
  func.func @transform_2(%arg0: i32) -> (i32, i32) {
    %c0_i32 = arith.constant 0 : i32
    %c0_i32_0 = arith.constant 0 : i32
    %c0_i32_1 = arith.constant 0 : i32
    return %c0_i32, %c0_i32_0 : i32, i32
  }
  func.func @transform_3(%arg0: i32) -> (i32, i32) {
    %c0_i32 = arith.constant 0 : i32
    %c0_i32_0 = arith.constant 0 : i32
    %c0_i32_1 = arith.constant 0 : i32
    return %c0_i32, %c0_i32_0 : i32, i32
  }
  func.func @transform_4(%arg0: i32) -> i32 {
    %c0_i32 = arith.constant 0 : i32
    %c0_i32_0 = arith.constant 0 : i32
    return %c0_i32 : i32
  }
  func.func @transform_5(%arg0: i32) -> (i32, i32) {
    %c0_i32 = arith.constant 0 : i32
    %c0_i32_0 = arith.constant 0 : i32
    return %arg0, %c0_i32 : i32, i32
  }
}

</mosaic_0001>

<llo_original>
// kernel: tpu_custom_call.1
$region0: #{tpu_custom_call.1}
  #allocation0 [shape = 'u32[]', space=smem, size = 0x4, offset = 0x4, fixed_abs, tag = 'smem constant byte address 0x4 - core index']
  #allocation1 [shape = 'u32[144,128]{1,0:T(1,128)}', space=vmem, size = 0x12000, scoped, tag = 'internal scratch']
  #allocation2 [shape = 'f32[1]{0:T(128)S(6)}', space=smem, size = 0x200, scoped, tag = 'scoped memory for tpu_custom_call.1']
  %s0 = inlined_call_operand.vmem [shape: bf16[2,128,326], index: 0, kind: input, shape index: {}]
  %s1 = inlined_call_operand.vmem [shape: bf16[9,32,128], index: 1, kind: input, shape index: {}]
  %s2 = inlined_call_operand.vmem [shape: f32[32,1], index: 2, kind: input, shape index: {}]
  %s3 = inlined_call_operand.vmem [shape: f32[32,1], index: 3, kind: input, shape index: {}]
  %s4 = inlined_call_operand.<no memory space> [shape: f32[1], index: 4, kind: input, shape index: {}]
  %s5 = inlined_call_operand.hbm [shape: f32[2,288], index: 5, kind: output, shape index: {}]
  %s6 = sld [smem:[#allocation0]]
  $region30: #{tpu_custom_call.1} parent=0
    _
  %s8 = ssub.s32 1, %s6
  %s9 = scalar_select 0, %s8, %s6
  %10 = sst [smem:[#allocation2]] %s4
  $region1: #{tpu_custom_call.1} parent=0
    #allocation3 [shape = 'u8[3072]{0}', space=vmem, size = 0xc00, scoped, tag = 'output window, operand 0, single buffered']
    #allocation4 [shape = 's32[1]{0}', space=sflag, size = 0x4, scoped, tag = 'scoped memory for tpu_custom_call.1']
    %11 = vsyncpa [#allocation4], 0
    // Predicated region
    $region2: #{tpu_custom_call.1} parent=1 // pred_check
      _
    $region3: #{tpu_custom_call.1} parent=1 // pred_check_branch
      %13 = sbr.rel (0) target = $region5
    $region4: #{tpu_custom_call.1} parent=1 // pred_region
      _
    $region5: #{tpu_custom_call.1} parent=1 // pred_fallthru
      _
    // Predicated region
    $region6: #{tpu_custom_call.1} parent=1 // pred_check
      _
    $region7: #{tpu_custom_call.1} parent=1 // pred_check_branch
      %15 = sbr.rel (0) target = $region9
    $region8: #{tpu_custom_call.1} parent=1 // pred_region
      _
    $region9: #{tpu_custom_call.1} parent=1 // pred_fallthru
      _
    // Predicated region
    $region10: #{tpu_custom_call.1} parent=1 // pred_check
      _
    $region11: #{tpu_custom_call.1} parent=1 // pred_check_branch
      %17 = sbr.rel (0) target = $region13
    $region12: #{tpu_custom_call.1} parent=1 // pred_region
      _
    $region13: #{tpu_custom_call.1} parent=1 // pred_fallthru
      _
    // Predicated region
    $region14: #{tpu_custom_call.1} parent=1 // pred_check
      _
    $region15: #{tpu_custom_call.1} parent=1 // pred_check_branch
      %19 = sbr.rel (0) target = $region17
    $region16: #{tpu_custom_call.1} parent=1 // pred_region
      _
    $region17: #{tpu_custom_call.1} parent=1 // pred_fallthru
      _
    // Predicated region
    $region18: #{tpu_custom_call.1} parent=1 // pred_check
      _
    $region19: #{tpu_custom_call.1} parent=1 // pred_check_branch
      %21 = sbr.rel (0) target = $region21
    $region20: #{tpu_custom_call.1} parent=1 // pred_region
      _
    $region21: #{tpu_custom_call.1} parent=1 // pred_fallthru
      _
    %v23 = vld [vmem:[%s2] sm:$0xff]
    %v24 = vld [vmem:[%s2 + $0x8] sm:$0xff]
    %v25 = vld [vmem:[%s2 + $0x10] sm:$0xff]
    %v26 = vld [vmem:[%s2 + $0x18] sm:$0xff]
    %v27 = vld [vmem:[%s3] sm:$0xff]
    %v28 = vld [vmem:[%s3 + $0x8] sm:$0xff]
    %v29 = vld [vmem:[%s3 + $0x10] sm:$0xff]
    %v30 = vld [vmem:[%s3 + $0x18] sm:$0xff]
    %s31 = sld [smem:[#allocation2]]
    %v32 = vld [vmem:[%s1] sm:$0xf]
    %v33 = vld [vmem:[%s1 + $0x4] sm:$0xf]
    %v34 = vld [vmem:[%s1 + $0x8] sm:$0xf]
    %v35 = vld [vmem:[%s1 + $0xc] sm:$0xf]
    %v36 = vld [vmem:[%s0] sm:$0xff]
    %v37 = vld [vmem:[%s0 + $0x8] sm:$0xf]
    %v38 = vld [vmem:[%s0 + $0xc] sm:$0xff]
    %v39 = vld [vmem:[%s0 + $0x14] sm:$0xf]
    %v40 = vld [vmem:[%s0 + $0x18] sm:$0xff]
    %v41 = vld [vmem:[%s0 + $0x20] sm:$0xf]
    %v42 = vld [vmem:[%s0 + $0x24] sm:$0xff]
    %v43 = vld [vmem:[%s0 + $0x2c] sm:$0xf]
    %v44 = vld [vmem:[%s0 + $0x30] sm:$0xff]
    %v45 = vld [vmem:[%s0 + $0x38] sm:$0xf]
    %v46 = vld [vmem:[%s0 + $0x3c] sm:$0xff]
    %v47 = vld [vmem:[%s0 + $0x44] sm:$0xf]
    %v48 = vld [vmem:[%s0 + $0x48] sm:$0xff]
    %v49 = vld [vmem:[%s0 + $0x50] sm:$0xf]
    %v50 = vld [vmem:[%s0 + $0x54] sm:$0xff]
    %v51 = vld [vmem:[%s0 + $0x5c] sm:$0xf]
    %v52 = vld [vmem:[%s0 + $0x60] sm:$0xff]
    %v53 = vld [vmem:[%s0 + $0x68] sm:$0xf]
    %v54 = vld [vmem:[%s0 + $0x6c] sm:$0xff]
    %v55 = vld [vmem:[%s0 + $0x74] sm:$0xf]
    %v56 = vld [vmem:[%s0 + $0x78] sm:$0xff]
    %v57 = vld [vmem:[%s0 + $0x80] sm:$0xf]
    %v58 = vld [vmem:[%s0 + $0x84] sm:$0xff]
    %v59 = vld [vmem:[%s0 + $0x8c] sm:$0xf]
    %v60 = vld [vmem:[%s0 + $0x90] sm:$0xff]
    %v61 = vld [vmem:[%s0 + $0x98] sm:$0xf]
    %v62 = vld [vmem:[%s0 + $0x9c] sm:$0xff]
    %v63 = vld [vmem:[%s0 + $0xa4] sm:$0xf]
    %v64 = vld [vmem:[%s0 + $0xa8] sm:$0xff]
    %v65 = vld [vmem:[%s0 + $0xb0] sm:$0xf]
    %v66 = vld [vmem:[%s0 + $0xb4] sm:$0xff]
    %v67 = vld [vmem:[%s0 + $0xbc] sm:$0xf]
    %s68 = scalar_lea.vmem %s1, 16
    %v69 = vld [vmem:[%s68] sm:$0xf]
    %v70 = vld [vmem:[%s68 + $0x4] sm:$0xf]
    %v71 = vld [vmem:[%s68 + $0x8] sm:$0xf]
    %v72 = vld [vmem:[%s68 + $0xc] sm:$0xf]
    %v77 = vunpack.c.l.b16 %v69
    %v78 = vunpack.c.l.b16 %v70
    %v79 = vunpack.c.l.b16 %v71
    %v80 = vunpack.c.l.b16 %v72
    %v81 = vpack.c.b16 %v78, %v77
    %v82 = vpack.c.b16 %v80, %v79
    %v117 = vunpack.c.l.b16 %v36
    %v118 = vunpack.c.h.b16 %v36
    %v119 = vunpack.c.l.b16 %v37
    %v120 = vunpack.c.l.b16 %v38
    %v121 = vunpack.c.h.b16 %v38
    %v122 = vunpack.c.l.b16 %v39
    %v123 = vunpack.c.l.b16 %v40
    %v124 = vunpack.c.h.b16 %v40
    %v125 = vunpack.c.l.b16 %v41
    %v126 = vunpack.c.l.b16 %v42
    %v127 = vunpack.c.h.b16 %v42
    %v128 = vunpack.c.l.b16 %v43
    %v129 = vunpack.c.l.b16 %v44
    %v130 = vunpack.c.h.b16 %v44
    %v131 = vunpack.c.l.b16 %v45
    %v132 = vunpack.c.l.b16 %v46
    %v133 = vunpack.c.h.b16 %v46
    %v134 = vunpack.c.l.b16 %v47
    %v135 = vunpack.c.l.b16 %v48
    %v136 = vunpack.c.h.b16 %v48
    %v137 = vunpack.c.l.b16 %v49
    %v138 = vunpack.c.l.b16 %v50
    %v139 = vunpack.c.h.b16 %v50
    %v140 = vunpack.c.l.b16 %v51
    %v141 = vunpack.c.l.b16 %v52
    %v142 = vunpack.c.h.b16 %v52
    %v143 = vunpack.c.l.b16 %v53
    %v144 = vunpack.c.l.b16 %v54
    %v145 = vunpack.c.h.b16 %v54
    %v146 = vunpack.c.l.b16 %v55
    %v147 = vunpack.c.l.b16 %v56
    %v148 = vunpack.c.h.b16 %v56
    %v149 = vunpack.c.l.b16 %v57
    %v150 = vunpack.c.l.b16 %v58
    %v151 = vunpack.c.h.b16 %v58
    %v152 = vunpack.c.l.b16 %v59
    %v153 = vunpack.c.l.b16 %v60
    %v154 = vunpack.c.h.b16 %v60
    %v155 = vunpack.c.l.b16 %v61
    %v156 = vunpack.c.l.b16 %v62
    %v157 = vunpack.c.h.b16 %v62
    %v158 = vunpack.c.l.b16 %v63
    %v159 = vunpack.c.l.b16 %v64
    %v160 = vunpack.c.h.b16 %v64
    %v161 = vunpack.c.l.b16 %v65
    %v162 = vunpack.c.l.b16 %v66
    %v163 = vunpack.c.h.b16 %v66
    %v164 = vunpack.c.l.b16 %v67
    %v165 = vpack.c.b16 %v120, %v117
    %v166 = vpack.c.b16 %v121, %v118
    %v167 = vpack.c.b16 %v122, %v119
    %v168 = vpack.c.b16 %v126, %v123
    %v169 = vpack.c.b16 %v127, %v124
    %v170 = vpack.c.b16 %v128, %v125
    %v171 = vpack.c.b16 %v132, %v129
    %v172 = vpack.c.b16 %v133, %v130
    %v173 = vpack.c.b16 %v134, %v131
    %v174 = vpack.c.b16 %v138, %v135
    %v175 = vpack.c.b16 %v139, %v136
    %v176 = vpack.c.b16 %v140, %v137
    %v177 = vpack.c.b16 %v144, %v141
    %v178 = vpack.c.b16 %v145, %v142
    %v179 = vpack.c.b16 %v146, %v143
    %v180 = vpack.c.b16 %v150, %v147
    %v181 = vpack.c.b16 %v151, %v148
    %v182 = vpack.c.b16 %v152, %v149
    %v183 = vpack.c.b16 %v156, %v153
    %v184 = vpack.c.b16 %v157, %v154
    %v185 = vpack.c.b16 %v158, %v155
    %v186 = vpack.c.b16 %v162, %v159
    %v187 = vpack.c.b16 %v163, %v160
    %v188 = vpack.c.b16 %v164, %v161
    %189 = vrot.lane.b32.xlu0 %v165, 127
    %v190 = vpop.permute.xlu0 %189
    %191 = vrot.lane.b32.xlu0 %v166, 127
    %v192 = vpop.permute.xlu0 %191
    %193 = vrot.lane.b32.xlu0 %v167, 127
    %v194 = vpop.permute.xlu0 %193
    %195 = vrot.lane.b32.xlu0 %v168, 127
    %v196 = vpop.permute.xlu0 %195
    %197 = vrot.lane.b32.xlu0 %v169, 127
    %v198 = vpop.permute.xlu0 %197
    %199 = vrot.lane.b32.xlu0 %v170, 127
    %v200 = vpop.permute.xlu0 %199
    %201 = vrot.lane.b32.xlu0 %v171, 127
    %v202 = vpop.permute.xlu0 %201
    %203 = vrot.lane.b32.xlu0 %v172, 127
    %v204 = vpop.permute.xlu0 %203
    %205 = vrot.lane.b32.xlu0 %v173, 127
    %v206 = vpop.permute.xlu0 %205
    %207 = vrot.lane.b32.xlu0 %v174, 127
    %v208 = vpop.permute.xlu0 %207
    %209 = vrot.lane.b32.xlu0 %v175, 127
    %v210 = vpop.permute.xlu0 %209
    %211 = vrot.lane.b32.xlu0 %v176, 127
    %v212 = vpop.permute.xlu0 %211
    %213 = vrot.lane.b32.xlu0 %v177, 127
    %v214 = vpop.permute.xlu0 %213
    %215 = vrot.lane.b32.xlu0 %v178, 127
    %v216 = vpop.permute.xlu0 %215
    %217 = vrot.lane.b32.xlu0 %v179, 127
    %v218 = vpop.permute.xlu0 %217
    %219 = vrot.lane.b32.xlu0 %v180, 127
    %v220 = vpop.permute.xlu0 %219
    %221 = vrot.lane.b32.xlu0 %v181, 127
    %v222 = vpop.permute.xlu0 %221
    %223 = vrot.lane.b32.xlu0 %v182, 127
    %v224 = vpop.permute.xlu0 %223
    %225 = vrot.lane.b32.xlu0 %v183, 127
    %v226 = vpop.permute.xlu0 %225
    %227 = vrot.lane.b32.xlu0 %v184, 127
    %v228 = vpop.permute.xlu0 %227
    %229 = vrot.lane.b32.xlu0 %v185, 127
    %v230 = vpop.permute.xlu0 %229
    %231 = vrot.lane.b32.xlu0 %v186, 127
    %v232 = vpop.permute.xlu0 %231
    %233 = vrot.lane.b32.xlu0 %v187, 127
    %v234 = vpop.permute.xlu0 %233
    %235 = vrot.lane.b32.xlu0 %v188, 127
    %v236 = vpop.permute.xlu0 %235
    %vm237 = vcmask 1039360
    %v238 = vsel %vm237, %v190, %v192
    %v239 = vsel %vm237, %v192, %v194
    %v240 = vsel %vm237, %v196, %v198
    %v241 = vsel %vm237, %v198, %v200
    %v242 = vsel %vm237, %v202, %v204
    %v243 = vsel %vm237, %v204, %v206
    %v244 = vsel %vm237, %v208, %v210
    %v245 = vsel %vm237, %v210, %v212
    %v246 = vsel %vm237, %v214, %v216
    %v247 = vsel %vm237, %v216, %v218
    %v248 = vsel %vm237, %v220, %v222
    %v249 = vsel %vm237, %v222, %v224
    %v250 = vsel %vm237, %v226, %v228
    %v251 = vsel %vm237, %v228, %v230
    %v252 = vsel %vm237, %v232, %v234
    %v253 = vsel %vm237, %v234, %v236
    %278 = vmatprep.subr.bf16.mxu0 %v239
    %279 = vmatpush1.bf16.msra.mxu0 %v238
    %280 = vmatprep.subr.bf16.mxu0 %v241
    %281 = vmatpush1.bf16.msra.mxu0 %v240
    %282 = vmatprep.subr.bf16.mxu0 %v243
    %283 = vmatpush1.bf16.msra.mxu0 %v242
    %284 = vmatprep.subr.bf16.mxu0 %v245
    %285 = vmatpush1.bf16.msra.mxu0 %v244
    %286 = vmatprep.subr.bf16.mxu0 %v247
    %287 = vmatpush1.bf16.msra.mxu0 %v246
    %288 = vmatprep.subr.bf16.mxu0 %v249
    %289 = vmatpush1.bf16.msra.mxu0 %v248
    %290 = vmatprep.subr.bf16.mxu0 %v251
    %291 = vmatpush1.bf16.msra.mxu0 %v250
    %292 = vmatprep.subr.bf16.mxu0 %v253
    %293 = vmatpush1.bf16.msra.mxu0 %v252
    %294 = vmatprep.subr.bf16.mxu0 0
    %295 = vmatpush1.bf16.msra.mxu0 0
    %296 = vmatprep.subr.bf16.mxu0 0
    %297 = vmatpush1.bf16.msra.mxu0 0
    %298 = vmatprep.subr.bf16.mxu0 0
    %299 = vmatpush1.bf16.msra.mxu0 0
    %300 = vmatprep.subr.bf16.mxu0 0
    %301 = vmatpush1.bf16.msra.mxu0 0
    %302 = vmatprep.subr.bf16.mxu0 0
    %303 = vmatpush1.bf16.msra.mxu0 0
    %304 = vmatprep.subr.bf16.mxu0 0
    %305 = vmatpush1.bf16.msra.mxu0 0
    %306 = vmatprep.subr.bf16.mxu0 0
    %307 = vmatpush1.bf16.msra.mxu0 0
    %308 = vmatprep.subr.bf16.mxu0 0
    %309 = vmatpush1.bf16.msra.mxu0 0
    %310 = vmatprep.mubr.bf16.mxu0 0
    %311 = vmatmul.mubr.bf16.gmra.mrb[0].mxu0 %v81
    %v312 = vpop.f32.mrb[0].mxu0
    %v313 = vadd.f32 0.0, %v312
    %v314 = vpop.f32.mrb[0].mxu0
    %v315 = vadd.f32 0.0, %v314
    %v316 = vpop.f32.mrb[0].mxu0
    %v317 = vadd.f32 0.0, %v316
    %v318 = vpop.f32.mrb[0].mxu0
    %v319 = vadd.f32 0.0, %v318
    %320 = vmatprep.mubr.bf16.mxu0 0
    %321 = vmatmul.mubr.bf16.gmra.mrb[0].mxu0 %v82
    %v322 = vpop.f32.mrb[0].mxu0
    %v323 = vadd.f32 0.0, %v322
    %v324 = vpop.f32.mrb[0].mxu0
    %v325 = vadd.f32 0.0, %v324
    %v326 = vpop.f32.mrb[0].mxu0
    %v327 = vadd.f32 0.0, %v326
    %v328 = vpop.f32.mrb[0].mxu0
    %v329 = vadd.f32 0.0, %v328
    %330 = vdwg.mxu0
    %331 = vmatprep.subr.bf16.mxu0 0
    %332 = vmatpush1.bf16.msra.mxu0 %v194
    %333 = vmatprep.subr.bf16.mxu0 0
    %334 = vmatpush1.bf16.msra.mxu0 %v200
    %335 = vmatprep.subr.bf16.mxu0 0
    %336 = vmatpush1.bf16.msra.mxu0 %v206
    %337 = vmatprep.subr.bf16.mxu0 0
    %338 = vmatpush1.bf16.msra.mxu0 %v212
    %339 = vmatprep.subr.bf16.mxu0 0
    %340 = vmatpush1.bf16.msra.mxu0 %v218
    %341 = vmatprep.subr.bf16.mxu0 0
    %342 = vmatpush1.bf16.msra.mxu0 %v224
    %343 = vmatprep.subr.bf16.mxu0 0
    %344 = vmatpush1.bf16.msra.mxu0 %v230
    %345 = vmatprep.subr.bf16.mxu0 0
    %346 = vmatpush1.bf16.msra.mxu0 %v236
    %347 = vmatprep.subr.bf16.mxu0 0
    %348 = vmatpush1.bf16.msra.mxu0 0
    %349 = vmatprep.subr.bf16.mxu0 0
    %350 = vmatpush1.bf16.msra.mxu0 0
    %351 = vmatprep.subr.bf16.mxu0 0
    %352 = vmatpush1.bf16.msra.mxu0 0
    %353 = vmatprep.subr.bf16.mxu0 0
    %354 = vmatpush1.bf16.msra.mxu0 0
    %355 = vmatprep.subr.bf16.mxu0 0
    %356 = vmatpush1.bf16.msra.mxu0 0
    %357 = vmatprep.subr.bf16.mxu0 0
    %358 = vmatpush1.bf16.msra.mxu0 0
    %359 = vmatprep.subr.bf16.mxu0 0
    %360 = vmatpush1.bf16.msra.mxu0 0
    %361 = vmatprep.subr.bf16.mxu0 0
    %362 = vmatpush1.bf16.msra.mxu0 0
    %363 = vmatprep.mubr.bf16.mxu0 0
    %364 = vmatmul.mubr.bf16.gmra.mrb[0].mxu0 %v81
    %v365 = vpop.f32.mrb[0].mxu0
    %v366 = vadd.f32 0.0, %v365
    %v367 = vpop.f32.mrb[0].mxu0
    %v368 = vpop.f32.mrb[0].mxu0
    %v369 = vadd.f32 0.0, %v368
    %v370 = vpop.f32.mrb[0].mxu0
    %371 = vmatprep.mubr.bf16.mxu0 0
    %372 = vmatmul.mubr.bf16.gmra.mrb[0].mxu0 %v82
    %v373 = vpop.f32.mrb[0].mxu0
    %v374 = vadd.f32 0.0, %v373
    %v375 = vpop.f32.mrb[0].mxu0
    %v376 = vpop.f32.mrb[0].mxu0
    %v377 = vadd.f32 0.0, %v376
    %v378 = vpop.f32.mrb[0].mxu0
    %379 = vdwg.mxu0
    %v384 = vunpack.c.l.b16 %v32
    %v385 = vunpack.c.l.b16 %v33
    %v386 = vunpack.c.l.b16 %v34
    %v387 = vunpack.c.l.b16 %v35
    %v388 = vpack.c.b16 %v385, %v384
    %v389 = vpack.c.b16 %v387, %v386
    %416 = vmatprep.subr.bf16.mxu0 %v166
    %417 = vmatpush1.bf16.msra.mxu0 %v165
    %418 = vmatprep.subr.bf16.mxu0 %v169
    %419 = vmatpush1.bf16.msra.mxu0 %v168
    %420 = vmatprep.subr.bf16.mxu0 %v172
    %421 = vmatpush1.bf16.msra.mxu0 %v171
    %422 = vmatprep.subr.bf16.mxu0 %v175
    %423 = vmatpush1.bf16.msra.mxu0 %v174
    %424 = vmatprep.subr.bf16.mxu0 %v178
    %425 = vmatpush1.bf16.msra.mxu0 %v177
    %426 = vmatprep.subr.bf16.mxu0 %v181
    %427 = vmatpush1.bf16.msra.mxu0 %v180
    %428 = vmatprep.subr.bf16.mxu0 %v184
    %429 = vmatpush1.bf16.msra.mxu0 %v183
    %430 = vmatprep.subr.bf16.mxu0 %v187
    %431 = vmatpush1.bf16.msra.mxu0 %v186
    %432 = vmatprep.subr.bf16.mxu0 0
    %433 = vmatpush1.bf16.msra.mxu0 0
    %434 = vmatprep.subr.bf16.mxu0 0
    %435 = vmatpush1.bf16.msra.mxu0 0
    %436 = vmatprep.subr.bf16.mxu0 0
    %437 = vmatpush1.bf16.msra.mxu0 0
    %438 = vmatprep.subr.bf16.mxu0 0
    %439 = vmatpush1.bf16.msra.mxu0 0
    %440 = vmatprep.subr.bf16.mxu0 0
    %441 = vmatpush1.bf16.msra.mxu0 0
    %442 = vmatprep.subr.bf16.mxu0 0
    %443 = vmatpush1.bf16.msra.mxu0 0
    %444 = vmatprep.subr.bf16.mxu0 0
    %445 = vmatpush1.bf16.msra.mxu0 0
    %446 = vmatprep.subr.bf16.mxu0 0
    %447 = vmatpush1.bf16.msra.mxu0 0
    %448 = vmatprep.mubr.bf16.mxu0 0
    %449 = vmatmul.mubr.bf16.gmra.mrb[0].mxu0 %v388
    %v450 = vpop.f32.mrb[0].mxu0
    %v451 = vadd.f32 %v313, %v450
    %v452 = vpop.f32.mrb[0].mxu0
    %v453 = vadd.f32 %v315, %v452
    %v454 = vpop.f32.mrb[0].mxu0
    %v455 = vadd.f32 %v317, %v454
    %v456 = vpop.f32.mrb[0].mxu0
    %v457 = vadd.f32 %v319, %v456
    %458 = vmatprep.mubr.bf16.mxu0 0
    %459 = vmatmul.mubr.bf16.gmra.mrb[0].mxu0 %v389
    %v460 = vpop.f32.mrb[0].mxu0
    %v461 = vadd.f32 %v323, %v460
    %v462 = vpop.f32.mrb[0].mxu0
    %v463 = vadd.f32 %v325, %v462
    %v464 = vpop.f32.mrb[0].mxu0
    %v465 = vadd.f32 %v327, %v464
    %v466 = vpop.f32.mrb[0].mxu0
    %v467 = vadd.f32 %v329, %v466
    %468 = vdwg.mxu0
    %469 = vmatprep.subr.bf16.mxu0 0
    %470 = vmatpush1.bf16.msra.mxu0 %v167
    %471 = vmatprep.subr.bf16.mxu0 0
    %472 = vmatpush1.bf16.msra.mxu0 %v170
    %473 = vmatprep.subr.bf16.mxu0 0
    %474 = vmatpush1.bf16.msra.mxu0 %v173
    %475 = vmatprep.subr.bf16.mxu0 0
    %476 = vmatpush1.bf16.msra.mxu0 %v176
    %477 = vmatprep.subr.bf16.mxu0 0
    %478 = vmatpush1.bf16.msra.mxu0 %v179
    %479 = vmatprep.subr.bf16.mxu0 0
    %480 = vmatpush1.bf16.msra.mxu0 %v182
    %481 = vmatprep.subr.bf16.mxu0 0
    %482 = vmatpush1.bf16.msra.mxu0 %v185
    %483 = vmatprep.subr.bf16.mxu0 0
    %484 = vmatpush1.bf16.msra.mxu0 %v188
    %485 = vmatprep.subr.bf16.mxu0 0
    %486 = vmatpush1.bf16.msra.mxu0 0
    %487 = vmatprep.subr.bf16.mxu0 0
    %488 = vmatpush1.bf16.msra.mxu0 0
    %489 = vmatprep.subr.bf16.mxu0 0
    %490 = vmatpush1.bf16.msra.mxu0 0
    %491 = vmatprep.subr.bf16.mxu0 0
    %492 = vmatpush1.bf16.msra.mxu0 0
    %493 = vmatprep.subr.bf16.mxu0 0
    %494 = vmatpush1.bf16.msra.mxu0 0
    %495 = vmatprep.subr.bf16.mxu0 0
    %496 = vmatpush1.bf16.msra.mxu0 0
    %497 = vmatprep.subr.bf16.mxu0 0
    %498 = vmatpush1.bf16.msra.mxu0 0
    %499 = vmatprep.subr.bf16.mxu0 0
    %500 = vmatpush1.bf16.msra.mxu0 0
    %501 = vmatprep.mubr.bf16.mxu0 0
    %502 = vmatmul.mubr.bf16.gmra.mrb[0].mxu0 %v388
    %v503 = vpop.f32.mrb[0].mxu0
    %v504 = vadd.f32 %v366, %v503
    %v505 = vpop.f32.mrb[0].mxu0
    %v506 = vpop.f32.mrb[0].mxu0
    %v507 = vadd.f32 %v369, %v506
    %v508 = vpop.f32.mrb[0].mxu0
    %509 = vmatprep.mubr.bf16.mxu0 0
    %510 = vmatmul.mubr.bf16.gmra.mrb[0].mxu0 %v389
    %v511 = vpop.f32.mrb[0].mxu0
    %v512 = vadd.f32 %v374, %v511
    %v513 = vpop.f32.mrb[0].mxu0
    %v514 = vpop.f32.mrb[0].mxu0
    %v515 = vadd.f32 %v377, %v514
    %v516 = vpop.f32.mrb[0].mxu0
    %517 = vdwg.mxu0
    %s518 = scalar_lea.vmem %s1, 32
    %v519 = vld [vmem:[%s518] sm:$0xf]
    %v520 = vld [vmem:[%s518 + $0x4] sm:$0xf]
    %v521 = vld [vmem:[%s518 + $0x8] sm:$0xf]
    %v522 = vld [vmem:[%s518 + $0xc] sm:$0xf]
    %v527 = vunpack.c.l.b16 %v519
    %v528 = vunpack.c.l.b16 %v520
    %v529 = vunpack.c.l.b16 %v521
    %v530 = vunpack.c.l.b16 %v522
    %v531 = vpack.c.b16 %v528, %v527
    %v532 = vpack.c.b16 %v530, %v529
    %535 = vrot.lane.b32.xlu0 %v165, 126
    %v536 = vpop.permute.xlu0 %535
    %537 = vrot.lane.b32.xlu0 %v166, 126
    %v538 = vpop.permute.xlu0 %537
    %539 = vrot.lane.b32.xlu0 %v167, 126
    %v540 = vpop.permute.xlu0 %539
    %541 = vrot.lane.b32.xlu0 %v168, 126
    %v542 = vpop.permute.xlu0 %541
    %543 = vrot.lane.b32.xlu0 %v169, 126
    %v544 = vpop.permute.xlu0 %543
    %545 = vrot.lane.b32.xlu0 %v170, 126
    %v546 = vpop.permute.xlu0 %545
    %547 = vrot.lane.b32.xlu0 %v171, 126
    %v548 = vpop.permute.xlu0 %547
    %549 = vrot.lane.b32.xlu0 %v172, 126
    %v550 = vpop.permute.xlu0 %549
    %551 = vrot.lane.b32.xlu0 %v173, 126
    %v552 = vpop.permute.xlu0 %551
    %553 = vrot.lane.b32.xlu0 %v174, 126
    %v554 = vpop.permute.xlu0 %553
    %555 = vrot.lane.b32.xlu0 %v175, 126
    %v556 = vpop.permute.xlu0 %555
    %557 = vrot.lane.b32.xlu0 %v176, 126
    %v558 = vpop.permute.xlu0 %557
    %559 = vrot.lane.b32.xlu0 %v177, 126
    %v560 = vpop.permute.xlu0 %559
    %561 = vrot.lane.b32.xlu0 %v178, 126
    %v562 = vpop.permute.xlu0 %561
    %563 = vrot.lane.b32.xlu0 %v179, 126
    %v564 = vpop.permute.xlu0 %563
    %565 = vrot.lane.b32.xlu0 %v180, 126
    %v566 = vpop.permute.xlu0 %565
    %567 = vrot.lane.b32.xlu0 %v181, 126
    %v568 = vpop.permute.xlu0 %567
    %569 = vrot.lane.b32.xlu0 %v182, 126
    %v570 = vpop.permute.xlu0 %569
    %571 = vrot.lane.b32.xlu0 %v183, 126
    %v572 = vpop.permute.xlu0 %571
    %573 = vrot.lane.b32.xlu0 %v184, 126
    %v574 = vpop.permute.xlu0 %573
    %575 = vrot.lane.b32.xlu0 %v185, 126
    %v576 = vpop.permute.xlu0 %575
    %577 = vrot.lane.b32.xlu0 %v186, 126
    %v578 = vpop.permute.xlu0 %577
    %579 = vrot.lane.b32.xlu0 %v187, 126
    %v580 = vpop.permute.xlu0 %579
    %581 = vrot.lane.b32.xlu0 %v188, 126
    %v582 = vpop.permute.xlu0 %581
    %vm583 = vcmask 1031168
    %v584 = vsel %vm583, %v536, %v538
    %v585 = vsel %vm583, %v538, %v540
    %v586 = vsel %vm583, %v542, %v544
    %v587 = vsel %vm583, %v544, %v546
    %v588 = vsel %vm583, %v548, %v550
    %v589 = vsel %vm583, %v550, %v552
    %v590 = vsel %vm583, %v554, %v556
    %v591 = vsel %vm583, %v556, %v558
    %v592 = vsel %vm583, %v560, %v562
    %v593 = vsel %vm583, %v562, %v564
    %v594 = vsel %vm583, %v566, %v568
    %v595 = vsel %vm583, %v568, %v570
    %v596 = vsel %vm583, %v572, %v574
    %v597 = vsel %vm583, %v574, %v576
    %v598 = vsel %vm583, %v578, %v580
    %v599 = vsel %vm583, %v580, %v582
    %624 = vmatprep.subr.bf16.mxu0 %v585
    %625 = vmatpush1.bf16.msra.mxu0 %v584
    %626 = vmatprep.subr.bf16.mxu0 %v587
    %627 = vmatpush1.bf16.msra.mxu0 %v586
    %628 = vmatprep.subr.bf16.mxu0 %v589
    %629 = vmatpush1.bf16.msra.mxu0 %v588
    %630 = vmatprep.subr.bf16.mxu0 %v591
    %631 = vmatpush1.bf16.msra.mxu0 %v590
    %632 = vmatprep.subr.bf16.mxu0 %v593
    %633 = vmatpush1.bf16.msra.mxu0 %v592
    %634 = vmatprep.subr.bf16.mxu0 %v595
    %635 = vmatpush1.bf16.msra.mxu0 %v594
    %636 = vmatprep.subr.bf16.mxu0 %v597
    %637 = vmatpush1.bf16.msra.mxu0 %v596
    %638 = vmatprep.subr.bf16.mxu0 %v599
    %639 = vmatpush1.bf16.msra.mxu0 %v598
    %640 = vmatprep.subr.bf16.mxu0 0
    %641 = vmatpush1.bf16.msra.mxu0 0
    %642 = vmatprep.subr.bf16.mxu0 0
    %643 = vmatpush1.bf16.msra.mxu0 0
    %644 = vmatprep.subr.bf16.mxu0 0
    %645 = vmatpush1.bf16.msra.mxu0 0
    %646 = vmatprep.subr.bf16.mxu0 0
    %647 = vmatpush1.bf16.msra.mxu0 0
    %648 = vmatprep.subr.bf16.mxu0 0
    %649 = vmatpush1.bf16.msra.mxu0 0
    %650 = vmatprep.subr.bf16.mxu0 0
    %651 = vmatpush1.bf16.msra.mxu0 0
    %652 = vmatprep.subr.bf16.mxu0 0
    %653 = vmatpush1.bf16.msra.mxu0 0
    %654 = vmatprep.subr.bf16.mxu0 0
    %655 = vmatpush1.bf16.msra.mxu0 0
    %656 = vmatprep.mubr.bf16.mxu0 0
    %657 = vmatmul.mubr.bf16.gmra.mrb[0].mxu0 %v531
    %v658 = vpop.f32.mrb[0].mxu0
    %v659 = vadd.f32 0.0, %v658
    %v660 = vpop.f32.mrb[0].mxu0
    %v661 = vadd.f32 0.0, %v660
    %v662 = vpop.f32.mrb[0].mxu0
    %v663 = vadd.f32 0.0, %v662
    %v664 = vpop.f32.mrb[0].mxu0
    %v665 = vadd.f32 0.0, %v664
    %666 = vmatprep.mubr.bf16.mxu0 0
    %667 = vmatmul.mubr.bf16.gmra.mrb[0].mxu0 %v532
    %v668 = vpop.f32.mrb[0].mxu0
    %v669 = vadd.f32 0.0, %v668
    %v670 = vpop.f32.mrb[0].mxu0
    %v671 = vadd.f32 0.0, %v670
    %v672 = vpop.f32.mrb[0].mxu0
    %v673 = vadd.f32 0.0, %v672
    %v674 = vpop.f32.mrb[0].mxu0
    %v675 = vadd.f32 0.0, %v674
    %676 = vdwg.mxu0
    %677 = vmatprep.subr.bf16.mxu0 0
    %678 = vmatpush1.bf16.msra.mxu0 %v540
    %679 = vmatprep.subr.bf16.mxu0 0
    %680 = vmatpush1.bf16.msra.mxu0 %v546
    %681 = vmatprep.subr.bf16.mxu0 0
    %682 = vmatpush1.bf16.msra.mxu0 %v552
    %683 = vmatprep.subr.bf16.mxu0 0
    %684 = vmatpush1.bf16.msra.mxu0 %v558
    %685 = vmatprep.subr.bf16.mxu0 0
    %686 = vmatpush1.bf16.msra.mxu0 %v564
    %687 = vmatprep.subr.bf16.mxu0 0
    %688 = vmatpush1.bf16.msra.mxu0 %v570
    %689 = vmatprep.subr.bf16.mxu0 0
    %690 = vmatpush1.bf16.msra.mxu0 %v576
    %691 = vmatprep.subr.bf16.mxu0 0
    %692 = vmatpush1.bf16.msra.mxu0 %v582
    %693 = vmatprep.subr.bf16.mxu0 0
    %694 = vmatpush1.bf16.msra.mxu0 0
    %695 = vmatprep.subr.bf16.mxu0 0
    %696 = vmatpush1.bf16.msra.mxu0 0
    %697 = vmatprep.subr.bf16.mxu0 0
    %698 = vmatpush1.bf16.msra.mxu0 0
    %699 = vmatprep.subr.bf16.mxu0 0
    %700 = vmatpush1.bf16.msra.mxu0 0
    %701 = vmatprep.subr.bf16.mxu0 0
    %702 = vmatpush1.bf16.msra.mxu0 0
    %703 = vmatprep.subr.bf16.mxu0 0
    %704 = vmatpush1.bf16.msra.mxu0 0
    %705 = vmatprep.subr.bf16.mxu0 0
    %706 = vmatpush1.bf16.msra.mxu0 0
    %707 = vmatprep.subr.bf16.mxu0 0
    %708 = vmatpush1.bf16.msra.mxu0 0
    %709 = vmatprep.mubr.bf16.mxu0 0
    %710 = vmatmul.mubr.bf16.gmra.mrb[0].mxu0 %v531
    %v711 = vpop.f32.mrb[0].mxu0
    %v712 = vadd.f32 0.0, %v711
    %v713 = vpop.f32.mrb[0].mxu0
    %v714 = vpop.f32.mrb[0].mxu0
    %v715 = vadd.f32 0.0, %v714
    %v716 = vpop.f32.mrb[0].mxu0
    %717 = vmatprep.mubr.bf16.mxu0 0
    %718 = vmatmul.mubr.bf16.gmra.mrb[0].mxu0 %v532
    %v719 = vpop.f32.mrb[0].mxu0
    %v720 = vadd.f32 0.0, %v719
    %v721 = vpop.f32.mrb[0].mxu0
    %v722 = vpop.f32.mrb[0].mxu0
    %v723 = vadd.f32 0.0, %v722
    %v724 = vpop.f32.mrb[0].mxu0
    %725 = vdwg.mxu0
    %v726 = vadd.f32 %v451, %v659
    %v727 = vadd.f32 %v453, %v661
    %v728 = vadd.f32 %v504, %v712
    %v729 = vadd.f32 %v455, %v663
    %v730 = vadd.f32 %v457, %v665
    %v731 = vadd.f32 %v507, %v715
    %v732 = vadd.f32 %v461, %v669
    %v733 = vadd.f32 %v463, %v671
    %v734 = vadd.f32 %v512, %v720
    %v735 = vadd.f32 %v465, %v673
    %v736 = vadd.f32 %v467, %v675
    %v737 = vadd.f32 %v515, %v723
    %s738 = scalar_lea.vmem %s1, 48
    %v739 = vld [vmem:[%s738] sm:$0xf]
    %v740 = vld [vmem:[%s738 + $0x4] sm:$0xf]
    %v741 = vld [vmem:[%s738 + $0x8] sm:$0xf]
    %v742 = vld [vmem:[%s738 + $0xc] sm:$0xf]
    %v747 = vunpack.c.l.b16 %v739
    %v748 = vunpack.c.l.b16 %v740
    %v749 = vunpack.c.l.b16 %v741
    %v750 = vunpack.c.l.b16 %v742
    %v751 = vpack.c.b16 %v748, %v747
    %v752 = vpack.c.b16 %v750, %v749
    %755 = vrot.lane.b32.xlu0 %v165, 110
    %v756 = vpop.permute.xlu0 %755
    %757 = vrot.lane.b32.xlu0 %v166, 110
    %v758 = vpop.permute.xlu0 %757
    %759 = vrot.lane.b32.xlu0 %v167, 110
    %v760 = vpop.permute.xlu0 %759
    %761 = vrot.lane.b32.xlu0 %v168, 110
    %v762 = vpop.permute.xlu0 %761
    %763 = vrot.lane.b32.xlu0 %v169, 110
    %v764 = vpop.permute.xlu0 %763
    %765 = vrot.lane.b32.xlu0 %v170, 110
    %v766 = vpop.permute.xlu0 %765
    %767 = vrot.lane.b32.xlu0 %v171, 110
    %v768 = vpop.permute.xlu0 %767
    %769 = vrot.lane.b32.xlu0 %v172, 110
    %v770 = vpop.permute.xlu0 %769
    %771 = vrot.lane.b32.xlu0 %v173, 110
    %v772 = vpop.permute.xlu0 %771
    %773 = vrot.lane.b32.xlu0 %v174, 110
    %v774 = vpop.permute.xlu0 %773
    %775 = vrot.lane.b32.xlu0 %v175, 110
    %v776 = vpop.permute.xlu0 %775
    %777 = vrot.lane.b32.xlu0 %v176, 110
    %v778 = vpop.permute.xlu0 %777
    %779 = vrot.lane.b32.xlu0 %v177, 110
    %v780 = vpop.permute.xlu0 %779
    %781 = vrot.lane.b32.xlu0 %v178, 110
    %v782 = vpop.permute.xlu0 %781
    %783 = vrot.lane.b32.xlu0 %v179, 110
    %v784 = vpop.permute.xlu0 %783
    %785 = vrot.lane.b32.xlu0 %v180, 110
    %v786 = vpop.permute.xlu0 %785
    %787 = vrot.lane.b32.xlu0 %v181, 110
    %v788 = vpop.permute.xlu0 %787
    %789 = vrot.lane.b32.xlu0 %v182, 110
    %v790 = vpop.permute.xlu0 %789
    %791 = vrot.lane.b32.xlu0 %v183, 110
    %v792 = vpop.permute.xlu0 %791
    %793 = vrot.lane.b32.xlu0 %v184, 110
    %v794 = vpop.permute.xlu0 %793
    %795 = vrot.lane.b32.xlu0 %v185, 110
    %v796 = vpop.permute.xlu0 %795
    %797 = vrot.lane.b32.xlu0 %v186, 110
    %v798 = vpop.permute.xlu0 %797
    %799 = vrot.lane.b32.xlu0 %v187, 110
    %v800 = vpop.permute.xlu0 %799
    %801 = vrot.lane.b32.xlu0 %v188, 110
    %v802 = vpop.permute.xlu0 %801
    %vm803 = vcmask 900096
    %v804 = vsel %vm803, %v756, %v758
    %v805 = vsel %vm803, %v758, %v760
    %v806 = vsel %vm803, %v762, %v764
    %v807 = vsel %vm803, %v764, %v766
    %v808 = vsel %vm803, %v768, %v770
    %v809 = vsel %vm803, %v770, %v772
    %v810 = vsel %vm803, %v774, %v776
    %v811 = vsel %vm803, %v776, %v778
    %v812 = vsel %vm803, %v780, %v782
    %v813 = vsel %vm803, %v782, %v784
    %v814 = vsel %vm803, %v786, %v788
    %v815 = vsel %vm803, %v788, %v790
    %v816 = vsel %vm803, %v792, %v794
    %v817 = vsel %vm803, %v794, %v796
    %v818 = vsel %vm803, %v798, %v800
    %v819 = vsel %vm803, %v800, %v802
    %844 = vmatprep.subr.bf16.mxu0 %v805
    %845 = vmatpush1.bf16.msra.mxu0 %v804
    %846 = vmatprep.subr.bf16.mxu0 %v807
    %847 = vmatpush1.bf16.msra.mxu0 %v806
    %848 = vmatprep.subr.bf16.mxu0 %v809
    %849 = vmatpush1.bf16.msra.mxu0 %v808
    %850 = vmatprep.subr.bf16.mxu0 %v811
    %851 = vmatpush1.bf16.msra.mxu0 %v810
    %852 = vmatprep.subr.bf16.mxu0 %v813
    %853 = vmatpush1.bf16.msra.mxu0 %v812
    %854 = vmatprep.subr.bf16.mxu0 %v815
    %855 = vmatpush1.bf16.msra.mxu0 %v814
    %856 = vmatprep.subr.bf16.mxu0 %v817
    %857 = vmatpush1.bf16.msra.mxu0 %v816
    %858 = vmatprep.subr.bf16.mxu0 %v819
    %859 = vmatpush1.bf16.msra.mxu0 %v818
    %860 = vmatprep.subr.bf16.mxu0 0
    %861 = vmatpush1.bf16.msra.mxu0 0
    %862 = vmatprep.subr.bf16.mxu0 0
    %863 = vmatpush1.bf16.msra.mxu0 0
    %864 = vmatprep.subr.bf16.mxu0 0
    %865 = vmatpush1.bf16.msra.mxu0 0
    %866 = vmatprep.subr.bf16.mxu0 0
    %867 = vmatpush1.bf16.msra.mxu0 0
    %868 = vmatprep.subr.bf16.mxu0 0
    %869 = vmatpush1.bf16.msra.mxu0 0
    %870 = vmatprep.subr.bf16.mxu0 0
    %871 = vmatpush1.bf16.msra.mxu0 0
    %872 = vmatprep.subr.bf16.mxu0 0
    %873 = vmatpush1.bf16.msra.mxu0 0
    %874 = vmatprep.subr.bf16.mxu0 0
    %875 = vmatpush1.bf16.msra.mxu0 0
    %876 = vmatprep.mubr.bf16.mxu0 0
    %877 = vmatmul.mubr.bf16.gmra.mrb[0].mxu0 %v751
    %v878 = vpop.f32.mrb[0].mxu0
    %v879 = vadd.f32 0.0, %v878
    %v880 = vpop.f32.mrb[0].mxu0
    %v881 = vadd.f32 0.0, %v880
    %v882 = vpop.f32.mrb[0].mxu0
    %v883 = vadd.f32 0.0, %v882
    %v884 = vpop.f32.mrb[0].mxu0
    %v885 = vadd.f32 0.0, %v884
    %886 = vmatprep.mubr.bf16.mxu0 0
    %887 = vmatmul.mubr.bf16.gmra.mrb[0].mxu0 %v752
    %v888 = vpop.f32.mrb[0].mxu0
    %v889 = vadd.f32 0.0, %v888
    %v890 = vpop.f32.mrb[0].mxu0
    %v891 = vadd.f32 0.0, %v890
    %v892 = vpop.f32.mrb[0].mxu0
    %v893 = vadd.f32 0.0, %v892
    %v894 = vpop.f32.mrb[0].mxu0
    %v895 = vadd.f32 0.0, %v894
    %896 = vdwg.mxu0
    %897 = vmatprep.subr.bf16.mxu0 0
    %898 = vmatpush1.bf16.msra.mxu0 %v760
    %899 = vmatprep.subr.bf16.mxu0 0
    %900 = vmatpush1.bf16.msra.mxu0 %v766
    %901 = vmatprep.subr.bf16.mxu0 0
    %902 = vmatpush1.bf16.msra.mxu0 %v772
    %903 = vmatprep.subr.bf16.mxu0 0
    %904 = vmatpush1.bf16.msra.mxu0 %v778
    %905 = vmatprep.subr.bf16.mxu0 0
    %906 = vmatpush1.bf16.msra.mxu0 %v784
    %907 = vmatprep.subr.bf16.mxu0 0
    %908 = vmatpush1.bf16.msra.mxu0 %v790
    %909 = vmatprep.subr.bf16.mxu0 0
    %910 = vmatpush1.bf16.msra.mxu0 %v796
    %911 = vmatprep.subr.bf16.mxu0 0
    %912 = vmatpush1.bf16.msra.mxu0 %v802
    %913 = vmatprep.subr.bf16.mxu0 0
    %914 = vmatpush1.bf16.msra.mxu0 0
    %915 = vmatprep.subr.bf16.mxu0 0
    %916 = vmatpush1.bf16.msra.mxu0 0
    %917 = vmatprep.subr.bf16.mxu0 0
    %918 = vmatpush1.bf16.msra.mxu0 0
    %919 = vmatprep.subr.bf16.mxu0 0
    %920 = vmatpush1.bf16.msra.mxu0 0
    %921 = vmatprep.subr.bf16.mxu0 0
    %922 = vmatpush1.bf16.msra.mxu0 0
    %923 = vmatprep.subr.bf16.mxu0 0
    %924 = vmatpush1.bf16.msra.mxu0 0
    %925 = vmatprep.subr.bf16.mxu0 0
    %926 = vmatpush1.bf16.msra.mxu0 0
    %927 = vmatprep.subr.bf16.mxu0 0
    %928 = vmatpush1.bf16.msra.mxu0 0
    %929 = vmatprep.mubr.bf16.mxu0 0
    %930 = vmatmul.mubr.bf16.gmra.mrb[0].mxu0 %v751
    %v931 = vpop.f32.mrb[0].mxu0
    %v932 = vadd.f32 0.0, %v931
    %v933 = vpop.f32.mrb[0].mxu0
    %v934 = vpop.f32.mrb[0].mxu0
    %v935 = vadd.f32 0.0, %v934
    %v936 = vpop.f32.mrb[0].mxu0
    %937 = vmatprep.mubr.bf16.mxu0 0
    %938 = vmatmul.mubr.bf16.gmra.mrb[0].mxu0 %v752
    %v939 = vpop.f32.mrb[0].mxu0
    %v940 = vadd.f32 0.0, %v939
    %v941 = vpop.f32.mrb[0].mxu0
    %v942 = vpop.f32.mrb[0].mxu0
    %v943 = vadd.f32 0.0, %v942
    %v944 = vpop.f32.mrb[0].mxu0
    %945 = vdwg.mxu0
    %v946 = vadd.f32 %v726, %v879
    %v947 = vadd.f32 %v727, %v881
    %v948 = vadd.f32 %v728, %v932
    %v949 = vadd.f32 %v729, %v883
    %v950 = vadd.f32 %v730, %v885
    %v951 = vadd.f32 %v731, %v935
    %v952 = vadd.f32 %v732, %v889
    %v953 = vadd.f32 %v733, %v891
    %v954 = vadd.f32 %v734, %v940
    %v955 = vadd.f32 %v735, %v893
    %v956 = vadd.f32 %v736, %v895
    %v957 = vadd.f32 %v737, %v943
    %s958 = scalar_lea.vmem %s1, 64
    %v959 = vld [vmem:[%s958] sm:$0xf]
    %v960 = vld [vmem:[%s958 + $0x4] sm:$0xf]
    %v961 = vld [vmem:[%s958 + $0x8] sm:$0xf]
    %v962 = vld [vmem:[%s958 + $0xc] sm:$0xf]
    %v967 = vunpack.c.l.b16 %v959
    %v968 = vunpack.c.l.b16 %v960
    %v969 = vunpack.c.l.b16 %v961
    %v970 = vunpack.c.l.b16 %v962
    %v971 = vpack.c.b16 %v968, %v967
    %v972 = vpack.c.b16 %v970, %v969
    %975 = vrot.lane.b32.xlu0 %v165, 109
    %v976 = vpop.permute.xlu0 %975
    %977 = vrot.lane.b32.xlu0 %v166, 109
    %v978 = vpop.permute.xlu0 %977
    %979 = vrot.lane.b32.xlu0 %v167, 109
    %v980 = vpop.permute.xlu0 %979
    %981 = vrot.lane.b32.xlu0 %v168, 109
    %v982 = vpop.permute.xlu0 %981
    %983 = vrot.lane.b32.xlu0 %v169, 109
    %v984 = vpop.permute.xlu0 %983
    %985 = vrot.lane.b32.xlu0 %v170, 109
    %v986 = vpop.permute.xlu0 %985
    %987 = vrot.lane.b32.xlu0 %v171, 109
    %v988 = vpop.permute.xlu0 %987
    %989 = vrot.lane.b32.xlu0 %v172, 109
    %v990 = vpop.permute.xlu0 %989
    %991 = vrot.lane.b32.xlu0 %v173, 109
    %v992 = vpop.permute.xlu0 %991
    %993 = vrot.lane.b32.xlu0 %v174, 109
    %v994 = vpop.permute.xlu0 %993
    %995 = vrot.lane.b32.xlu0 %v175, 109
    %v996 = vpop.permute.xlu0 %995
    %997 = vrot.lane.b32.xlu0 %v176, 109
    %v998 = vpop.permute.xlu0 %997
    %999 = vrot.lane.b32.xlu0 %v177, 109
    %v1000 = vpop.permute.xlu0 %999
    %1001 = vrot.lane.b32.xlu0 %v178, 109
    %v1002 = vpop.permute.xlu0 %1001
    %1003 = vrot.lane.b32.xlu0 %v179, 109
    %v1004 = vpop.permute.xlu0 %1003
    %1005 = vrot.lane.b32.xlu0 %v180, 109
    %v1006 = vpop.permute.xlu0 %1005
    %1007 = vrot.lane.b32.xlu0 %v181, 109
    %v1008 = vpop.permute.xlu0 %1007
    %1009 = vrot.lane.b32.xlu0 %v182, 109
    %v1010 = vpop.permute.xlu0 %1009
    %1011 = vrot.lane.b32.xlu0 %v183, 109
    %v1012 = vpop.permute.xlu0 %1011
    %1013 = vrot.lane.b32.xlu0 %v184, 109
    %v1014 = vpop.permute.xlu0 %1013
    %1015 = vrot.lane.b32.xlu0 %v185, 109
    %v1016 = vpop.permute.xlu0 %1015
    %1017 = vrot.lane.b32.xlu0 %v186, 109
    %v1018 = vpop.permute.xlu0 %1017
    %1019 = vrot.lane.b32.xlu0 %v187, 109
    %v1020 = vpop.permute.xlu0 %1019
    %1021 = vrot.lane.b32.xlu0 %v188, 109
    %v1022 = vpop.permute.xlu0 %1021
    %vm1023 = vcmask 891904
    %v1024 = vsel %vm1023, %v976, %v978
    %v1025 = vsel %vm1023, %v978, %v980
    %v1026 = vsel %vm1023, %v982, %v984
    %v1027 = vsel %vm1023, %v984, %v986
    %v1028 = vsel %vm1023, %v988, %v990
    %v1029 = vsel %vm1023, %v990, %v992
    %v1030 = vsel %vm1023, %v994, %v996
    %v1031 = vsel %vm1023, %v996, %v998
    %v1032 = vsel %vm1023, %v1000, %v1002
    %v1033 = vsel %vm1023, %v1002, %v1004
    %v1034 = vsel %vm1023, %v1006, %v1008
    %v1035 = vsel %vm1023, %v1008, %v1010
    %v1036 = vsel %vm1023, %v1012, %v1014
    %v1037 = vsel %vm1023, %v1014, %v1016
    %v1038 = vsel %vm1023, %v1018, %v1020
    %v1039 = vsel %vm1023, %v1020, %v1022
    %1064 = vmatprep.subr.bf16.mxu0 %v1025
    %1065 = vmatpush1.bf16.msra.mxu0 %v1024
    %1066 = vmatprep.subr.bf16.mxu0 %v1027
    %1067 = vmatpush1.bf16.msra.mxu0 %v1026
    %1068 = vmatprep.subr.bf16.mxu0 %v1029
    %1069 = vmatpush1.bf16.msra.mxu0 %v1028
    %1070 = vmatprep.subr.bf16.mxu0 %v1031
    %1071 = vmatpush1.bf16.msra.mxu0 %v1030
    %1072 = vmatprep.subr.bf16.mxu0 %v1033
    %1073 = vmatpush1.bf16.msra.mxu0 %v1032
    %1074 = vmatprep.subr.bf16.mxu0 %v1035
    %1075 = vmatpush1.bf16.msra.mxu0 %v1034
    %1076 = vmatprep.subr.bf16.mxu0 %v1037
    %1077 = vmatpush1.bf16.msra.mxu0 %v1036
    %1078 = vmatprep.subr.bf16.mxu0 %v1039
    %1079 = vmatpush1.bf16.msra.mxu0 %v1038
    %1080 = vmatprep.subr.bf16.mxu0 0
    %1081 = vmatpush1.bf16.msra.mxu0 0
    %1082 = vmatprep.subr.bf16.mxu0 0
    %1083 = vmatpush1.bf16.msra.mxu0 0
    %1084 = vmatprep.subr.bf16.mxu0 0
    %1085 = vmatpush1.bf16.msra.mxu0 0
    %1086 = vmatprep.subr.bf16.mxu0 0
    %1087 = vmatpush1.bf16.msra.mxu0 0
    %1088 = vmatprep.subr.bf16.mxu0 0
    %1089 = vmatpush1.bf16.msra.mxu0 0
    %1090 = vmatprep.subr.bf16.mxu0 0
    %1091 = vmatpush1.bf16.msra.mxu0 0
    %1092 = vmatprep.subr.bf16.mxu0 0
    %1093 = vmatpush1.bf16.msra.mxu0 0
    %1094 = vmatprep.subr.bf16.mxu0 0
    %1095 = vmatpush1.bf16.msra.mxu0 0
    %1096 = vmatprep.mubr.bf16.mxu0 0
    %1097 = vmatmul.mubr.bf16.gmra.mrb[0].mxu0 %v971
    %v1098 = vpop.f32.mrb[0].mxu0
    %v1099 = vadd.f32 0.0, %v1098
    %v1100 = vpop.f32.mrb[0].mxu0
    %v1101 = vadd.f32 0.0, %v1100
    %v1102 = vpop.f32.mrb[0].mxu0
    %v1103 = vadd.f32 0.0, %v1102
    %v1104 = vpop.f32.mrb[0].mxu0
    %v1105 = vadd.f32 0.0, %v1104
    %1106 = vmatprep.mubr.bf16.mxu0 0
    %1107 = vmatmul.mubr.bf16.gmra.mrb[0].mxu0 %v972
    %v1108 = vpop.f32.mrb[0].mxu0
    %v1109 = vadd.f32 0.0, %v1108
    %v1110 = vpop.f32.mrb[0].mxu0
    %v1111 = vadd.f32 0.0, %v1110
    %v1112 = vpop.f32.mrb[0].mxu0
    %v1113 = vadd.f32 0.0, %v1112
    %v1114 = vpop.f32.mrb[0].mxu0
    %v1115 = vadd.f32 0.0, %v1114
    %1116 = vdwg.mxu0
    %1117 = vmatprep.subr.bf16.mxu0 0
    %1118 = vmatpush1.bf16.msra.mxu0 %v980
    %1119 = vmatprep.subr.bf16.mxu0 0
    %1120 = vmatpush1.bf16.msra.mxu0 %v986
    %1121 = vmatprep.subr.bf16.mxu0 0
    %1122 = vmatpush1.bf16.msra.mxu0 %v992
    %1123 = vmatprep.subr.bf16.mxu0 0
    %1124 = vmatpush1.bf16.msra.mxu0 %v998
    %1125 = vmatprep.subr.bf16.mxu0 0
    %1126 = vmatpush1.bf16.msra.mxu0 %v1004
    %1127 = vmatprep.subr.bf16.mxu0 0
    %1128 = vmatpush1.bf16.msra.mxu0 %v1010
    %1129 = vmatprep.subr.bf16.mxu0 0
    %1130 = vmatpush1.bf16.msra.mxu0 %v1016
    %1131 = vmatprep.subr.bf16.mxu0 0
    %1132 = vmatpush1.bf16.msra.mxu0 %v1022
    %1133 = vmatprep.subr.bf16.mxu0 0
    %1134 = vmatpush1.bf16.msra.mxu0 0
    %1135 = vmatprep.subr.bf16.mxu0 0
    %1136 = vmatpush1.bf16.msra.mxu0 0
    %1137 = vmatprep.subr.bf16.mxu0 0
    %1138 = vmatpush1.bf16.msra.mxu0 0
    %1139 = vmatprep.subr.bf16.mxu0 0
    %1140 = vmatpush1.bf16.msra.mxu0 0
    %1141 = vmatprep.subr.bf16.mxu0 0
    %1142 = vmatpush1.bf16.msra.mxu0 0
    %1143 = vmatprep.subr.bf16.mxu0 0
    %1144 = vmatpush1.bf16.msra.mxu0 0
    %1145 = vmatprep.subr.bf16.mxu0 0
    %1146 = vmatpush1.bf16.msra.mxu0 0
    %1147 = vmatprep.subr.bf16.mxu0 0
    %1148 = vmatpush1.bf16.msra.mxu0 0
    %1149 = vmatprep.mubr.bf16.mxu0 0
    %1150 = vmatmul.mubr.bf16.gmra.mrb[0].mxu0 %v971
    %v1151 = vpop.f32.mrb[0].mxu0
    %v1152 = vadd.f32 0.0, %v1151
    %v1153 = vpop.f32.mrb[0].mxu0
    %v1154 = vpop.f32.mrb[0].mxu0
    %v1155 = vadd.f32 0.0, %v1154
    %v1156 = vpop.f32.mrb[0].mxu0
    %1157 = vmatprep.mubr.bf16.mxu0 0
    %1158 = vmatmul.mubr.bf16.gmra.mrb[0].mxu0 %v972
    %v1159 = vpop.f32.mrb[0].mxu0
    %v1160 = vadd.f32 0.0, %v1159
    %v1161 = vpop.f32.mrb[0].mxu0
    %v1162 = vpop.f32.mrb[0].mxu0
    %v1163 = vadd.f32 0.0, %v1162
    %v1164 = vpop.f32.mrb[0].mxu0
    %1165 = vdwg.mxu0
    %v1166 = vadd.f32 %v946, %v1099
    %v1167 = vadd.f32 %v947, %v1101
    %v1168 = vadd.f32 %v948, %v1152
    %v1169 = vadd.f32 %v949, %v1103
    %v1170 = vadd.f32 %v950, %v1105
    %v1171 = vadd.f32 %v951, %v1155
    %v1172 = vadd.f32 %v952, %v1109
    %v1173 = vadd.f32 %v953, %v1111
    %v1174 = vadd.f32 %v954, %v1160
    %v1175 = vadd.f32 %v955, %v1113
    %v1176 = vadd.f32 %v956, %v1115
    %v1177 = vadd.f32 %v957, %v1163
    %s1178 = scalar_lea.vmem %s1, 80
    %v1179 = vld [vmem:[%s1178] sm:$0xf]
    %v1180 = vld [vmem:[%s1178 + $0x4] sm:$0xf]
    %v1181 = vld [vmem:[%s1178 + $0x8] sm:$0xf]
    %v1182 = vld [vmem:[%s1178 + $0xc] sm:$0xf]
    %v1187 = vunpack.c.l.b16 %v1179
    %v1188 = vunpack.c.l.b16 %v1180
    %v1189 = vunpack.c.l.b16 %v1181
    %v1190 = vunpack.c.l.b16 %v1182
    %v1191 = vpack.c.b16 %v1188, %v1187
    %v1192 = vpack.c.b16 %v1190, %v1189
    %1195 = vrot.lane.b32.xlu0 %v165, 108
    %v1196 = vpop.permute.xlu0 %1195
    %1197 = vrot.lane.b32.xlu0 %v166, 108
    %v1198 = vpop.permute.xlu0 %1197
    %1199 = vrot.lane.b32.xlu0 %v167, 108
    %v1200 = vpop.permute.xlu0 %1199
    %1201 = vrot.lane.b32.xlu0 %v168, 108
    %v1202 = vpop.permute.xlu0 %1201
    %1203 = vrot.lane.b32.xlu0 %v169, 108
    %v1204 = vpop.permute.xlu0 %1203
    %1205 = vrot.lane.b32.xlu0 %v170, 108
    %v1206 = vpop.permute.xlu0 %1205
    %1207 = vrot.lane.b32.xlu0 %v171, 108
    %v1208 = vpop.permute.xlu0 %1207
    %1209 = vrot.lane.b32.xlu0 %v172, 108
    %v1210 = vpop.permute.xlu0 %1209
    %1211 = vrot.lane.b32.xlu0 %v173, 108
    %v1212 = vpop.permute.xlu0 %1211
    %1213 = vrot.lane.b32.xlu0 %v174, 108
    %v1214 = vpop.permute.xlu0 %1213
    %1215 = vrot.lane.b32.xlu0 %v175, 108
    %v1216 = vpop.permute.xlu0 %1215
    %1217 = vrot.lane.b32.xlu0 %v176, 108
    %v1218 = vpop.permute.xlu0 %1217
    %1219 = vrot.lane.b32.xlu0 %v177, 108
    %v1220 = vpop.permute.xlu0 %1219
    %1221 = vrot.lane.b32.xlu0 %v178, 108
    %v1222 = vpop.permute.xlu0 %1221
    %1223 = vrot.lane.b32.xlu0 %v179, 108
    %v1224 = vpop.permute.xlu0 %1223
    %1225 = vrot.lane.b32.xlu0 %v180, 108
    %v1226 = vpop.permute.xlu0 %1225
    %1227 = vrot.lane.b32.xlu0 %v181, 108
    %v1228 = vpop.permute.xlu0 %1227
    %1229 = vrot.lane.b32.xlu0 %v182, 108
    %v1230 = vpop.permute.xlu0 %1229
    %1231 = vrot.lane.b32.xlu0 %v183, 108
    %v1232 = vpop.permute.xlu0 %1231
    %1233 = vrot.lane.b32.xlu0 %v184, 108
    %v1234 = vpop.permute.xlu0 %1233
    %1235 = vrot.lane.b32.xlu0 %v185, 108
    %v1236 = vpop.permute.xlu0 %1235
    %1237 = vrot.lane.b32.xlu0 %v186, 108
    %v1238 = vpop.permute.xlu0 %1237
    %1239 = vrot.lane.b32.xlu0 %v187, 108
    %v1240 = vpop.permute.xlu0 %1239
    %1241 = vrot.lane.b32.xlu0 %v188, 108
    %v1242 = vpop.permute.xlu0 %1241
    %vm1243 = vcmask 883712
    %v1244 = vsel %vm1243, %v1196, %v1198
    %v1245 = vsel %vm1243, %v1198, %v1200
    %v1246 = vsel %vm1243, %v1202, %v1204
    %v1247 = vsel %vm1243, %v1204, %v1206
    %v1248 = vsel %vm1243, %v1208, %v1210
    %v1249 = vsel %vm1243, %v1210, %v1212
    %v1250 = vsel %vm1243, %v1214, %v1216
    %v1251 = vsel %vm1243, %v1216, %v1218
    %v1252 = vsel %vm1243, %v1220, %v1222
    %v1253 = vsel %vm1243, %v1222, %v1224
    %v1254 = vsel %vm1243, %v1226, %v1228
    %v1255 = vsel %vm1243, %v1228, %v1230
    %v1256 = vsel %vm1243, %v1232, %v1234
    %v1257 = vsel %vm1243, %v1234, %v1236
    %v1258 = vsel %vm1243, %v1238, %v1240
    %v1259 = vsel %vm1243, %v1240, %v1242
    %1284 = vmatprep.subr.bf16.mxu0 %v1245
    %1285 = vmatpush1.bf16.msra.mxu0 %v1244
    %1286 = vmatprep.subr.bf16.mxu0 %v1247
    %1287 = vmatpush1.bf16.msra.mxu0 %v1246
    %1288 = vmatprep.subr.bf16.mxu0 %v1249
    %1289 = vmatpush1.bf16.msra.mxu0 %v1248
    %1290 = vmatprep.subr.bf16.mxu0 %v1251
    %1291 = vmatpush1.bf16.msra.mxu0 %v1250
    %1292 = vmatprep.subr.bf16.mxu0 %v1253
    %1293 = vmatpush1.bf16.msra.mxu0 %v1252
    %1294 = vmatprep.subr.bf16.mxu0 %v1255
    %1295 = vmatpush1.bf16.msra.mxu0 %v1254
    %1296 = vmatprep.subr.bf16.mxu0 %v1257
    %1297 = vmatpush1.bf16.msra.mxu0 %v1256
    %1298 = vmatprep.subr.bf16.mxu0 %v1259
    %1299 = vmatpush1.bf16.msra.mxu0 %v1258
    %1300 = vmatprep.subr.bf16.mxu0 0
    %1301 = vmatpush1.bf16.msra.mxu0 0
    %1302 = vmatprep.subr.bf16.mxu0 0
    %1303 = vmatpush1.bf16.msra.mxu0 0
    %1304 = vmatprep.subr.bf16.mxu0 0
    %1305 = vmatpush1.bf16.msra.mxu0 0
    %1306 = vmatprep.subr.bf16.mxu0 0
    %1307 = vmatpush1.bf16.msra.mxu0 0
    %1308 = vmatprep.subr.bf16.mxu0 0
    %1309 = vmatpush1.bf16.msra.mxu0 0
    %1310 = vmatprep.subr.bf16.mxu0 0
    %1311 = vmatpush1.bf16.msra.mxu0 0
    %1312 = vmatprep.subr.bf16.mxu0 0
    %1313 = vmatpush1.bf16.msra.mxu0 0
    %1314 = vmatprep.subr.bf16.mxu0 0
    %1315 = vmatpush1.bf16.msra.mxu0 0
    %1316 = vmatprep.mubr.bf16.mxu0 0
    %1317 = vmatmul.mubr.bf16.gmra.mrb[0].mxu0 %v1191
    %v1318 = vpop.f32.mrb[0].mxu0
    %v1319 = vadd.f32 0.0, %v1318
    %v1320 = vpop.f32.mrb[0].mxu0
    %v1321 = vadd.f32 0.0, %v1320
    %v1322 = vpop.f32.mrb[0].mxu0
    %v1323 = vadd.f32 0.0, %v1322
    %v1324 = vpop.f32.mrb[0].mxu0
    %v1325 = vadd.f32 0.0, %v1324
    %1326 = vmatprep.mubr.bf16.mxu0 0
    %1327 = vmatmul.mubr.bf16.gmra.mrb[0].mxu0 %v1192
    %v1328 = vpop.f32.mrb[0].mxu0
    %v1329 = vadd.f32 0.0, %v1328
    %v1330 = vpop.f32.mrb[0].mxu0
    %v1331 = vadd.f32 0.0, %v1330
    %v1332 = vpop.f32.mrb[0].mxu0
    %v1333 = vadd.f32 0.0, %v1332
    %v1334 = vpop.f32.mrb[0].mxu0
    %v1335 = vadd.f32 0.0, %v1334
    %1336 = vdwg.mxu0
    %1337 = vmatprep.subr.bf16.mxu0 0
    %1338 = vmatpush1.bf16.msra.mxu0 %v1200
    %1339 = vmatprep.subr.bf16.mxu0 0
    %1340 = vmatpush1.bf16.msra.mxu0 %v1206
    %1341 = vmatprep.subr.bf16.mxu0 0
    %1342 = vmatpush1.bf16.msra.mxu0 %v1212
    %1343 = vmatprep.subr.bf16.mxu0 0
    %1344 = vmatpush1.bf16.msra.mxu0 %v1218
    %1345 = vmatprep.subr.bf16.mxu0 0
    %1346 = vmatpush1.bf16.msra.mxu0 %v1224
    %1347 = vmatprep.subr.bf16.mxu0 0
    %1348 = vmatpush1.bf16.msra.mxu0 %v1230
    %1349 = vmatprep.subr.bf16.mxu0 0
    %1350 = vmatpush1.bf16.msra.mxu0 %v1236
    %1351 = vmatprep.subr.bf16.mxu0 0
    %1352 = vmatpush1.bf16.msra.mxu0 %v1242
    %1353 = vmatprep.subr.bf16.mxu0 0
    %1354 = vmatpush1.bf16.msra.mxu0 0
    %1355 = vmatprep.subr.bf16.mxu0 0
    %1356 = vmatpush1.bf16.msra.mxu0 0
    %1357 = vmatprep.subr.bf16.mxu0 0
    %1358 = vmatpush1.bf16.msra.mxu0 0
    %1359 = vmatprep.subr.bf16.mxu0 0
    %1360 = vmatpush1.bf16.msra.mxu0 0
    %1361 = vmatprep.subr.bf16.mxu0 0
    %1362 = vmatpush1.bf16.msra.mxu0 0
    %1363 = vmatprep.subr.bf16.mxu0 0
    %1364 = vmatpush1.bf16.msra.mxu0 0
    %1365 = vmatprep.subr.bf16.mxu0 0
    %1366 = vmatpush1.bf16.msra.mxu0 0
    %1367 = vmatprep.subr.bf16.mxu0 0
    %1368 = vmatpush1.bf16.msra.mxu0 0
    %1369 = vmatprep.mubr.bf16.mxu0 0
    %1370 = vmatmul.mubr.bf16.gmra.mrb[0].mxu0 %v1191
    %v1371 = vpop.f32.mrb[0].mxu0
    %v1372 = vadd.f32 0.0, %v1371
    %v1373 = vpop.f32.mrb[0].mxu0
    %v1374 = vpop.f32.mrb[0].mxu0
    %v1375 = vadd.f32 0.0, %v1374
    %v1376 = vpop.f32.mrb[0].mxu0
    %1377 = vmatprep.mubr.bf16.mxu0 0
    %1378 = vmatmul.mubr.bf16.gmra.mrb[0].mxu0 %v1192
    %v1379 = vpop.f32.mrb[0].mxu0
    %v1380 = vadd.f32 0.0, %v1379
    %v1381 = vpop.f32.mrb[0].mxu0
    %v1382 = vpop.f32.mrb[0].mxu0
    %v1383 = vadd.f32 0.0, %v1382
    %v1384 = vpop.f32.mrb[0].mxu0
    %1385 = vdwg.mxu0
    %v1386 = vadd.f32 %v1166, %v1319
    %v1387 = vadd.f32 %v1167, %v1321
    %v1388 = vadd.f32 %v1168, %v1372
    %v1389 = vadd.f32 %v1169, %v1323
    %v1390 = vadd.f32 %v1170, %v1325
    %v1391 = vadd.f32 %v1171, %v1375
    %v1392 = vadd.f32 %v1172, %v1329
    %v1393 = vadd.f32 %v1173, %v1331
    %v1394 = vadd.f32 %v1174, %v1380
    %v1395 = vadd.f32 %v1175, %v1333
    %v1396 = vadd.f32 %v1176, %v1335
    %v1397 = vadd.f32 %v1177, %v1383
    %s1398 = scalar_lea.vmem %s1, 96
    %v1399 = vld [vmem:[%s1398] sm:$0xf]
    %v1400 = vld [vmem:[%s1398 + $0x4] sm:$0xf]
    %v1401 = vld [vmem:[%s1398 + $0x8] sm:$0xf]
    %v1402 = vld [vmem:[%s1398 + $0xc] sm:$0xf]
    %v1407 = vunpack.c.l.b16 %v1399
    %v1408 = vunpack.c.l.b16 %v1400
    %v1409 = vunpack.c.l.b16 %v1401
    %v1410 = vunpack.c.l.b16 %v1402
    %v1411 = vpack.c.b16 %v1408, %v1407
    %v1412 = vpack.c.b16 %v1410, %v1409
    %1415 = vrot.lane.b32.xlu0 %v165, 92
    %v1416 = vpop.permute.xlu0 %1415
    %1417 = vrot.lane.b32.xlu0 %v166, 92
    %v1418 = vpop.permute.xlu0 %1417
    %1419 = vrot.lane.b32.xlu0 %v167, 92
    %v1420 = vpop.permute.xlu0 %1419
    %1421 = vrot.lane.b32.xlu0 %v168, 92
    %v1422 = vpop.permute.xlu0 %1421
    %1423 = vrot.lane.b32.xlu0 %v169, 92
    %v1424 = vpop.permute.xlu0 %1423
    %1425 = vrot.lane.b32.xlu0 %v170, 92
    %v1426 = vpop.permute.xlu0 %1425
    %1427 = vrot.lane.b32.xlu0 %v171, 92
    %v1428 = vpop.permute.xlu0 %1427
    %1429 = vrot.lane.b32.xlu0 %v172, 92
    %v1430 = vpop.permute.xlu0 %1429
    %1431 = vrot.lane.b32.xlu0 %v173, 92
    %v1432 = vpop.permute.xlu0 %1431
    %1433 = vrot.lane.b32.xlu0 %v174, 92
    %v1434 = vpop.permute.xlu0 %1433
    %1435 = vrot.lane.b32.xlu0 %v175, 92
    %v1436 = vpop.permute.xlu0 %1435
    %1437 = vrot.lane.b32.xlu0 %v176, 92
    %v1438 = vpop.permute.xlu0 %1437
    %1439 = vrot.lane.b32.xlu0 %v177, 92
    %v1440 = vpop.permute.xlu0 %1439
    %1441 = vrot.lane.b32.xlu0 %v178, 92
    %v1442 = vpop.permute.xlu0 %1441
    %1443 = vrot.lane.b32.xlu0 %v179, 92
    %v1444 = vpop.permute.xlu0 %1443
    %1445 = vrot.lane.b32.xlu0 %v180, 92
    %v1446 = vpop.permute.xlu0 %1445
    %1447 = vrot.lane.b32.xlu0 %v181, 92
    %v1448 = vpop.permute.xlu0 %1447
    %1449 = vrot.lane.b32.xlu0 %v182, 92
    %v1450 = vpop.permute.xlu0 %1449
    %1451 = vrot.lane.b32.xlu0 %v183, 92
    %v1452 = vpop.permute.xlu0 %1451
    %1453 = vrot.lane.b32.xlu0 %v184, 92
    %v1454 = vpop.permute.xlu0 %1453
    %1455 = vrot.lane.b32.xlu0 %v185, 92
    %v1456 = vpop.permute.xlu0 %1455
    %1457 = vrot.lane.b32.xlu0 %v186, 92
    %v1458 = vpop.permute.xlu0 %1457
    %1459 = vrot.lane.b32.xlu0 %v187, 92
    %v1460 = vpop.permute.xlu0 %1459
    %1461 = vrot.lane.b32.xlu0 %v188, 92
    %v1462 = vpop.permute.xlu0 %1461
    %vm1463 = vcmask 752640
    %v1464 = vsel %vm1463, %v1416, %v1418
    %v1465 = vsel %vm1463, %v1418, %v1420
    %v1466 = vsel %vm1463, %v1422, %v1424
    %v1467 = vsel %vm1463, %v1424, %v1426
    %v1468 = vsel %vm1463, %v1428, %v1430
    %v1469 = vsel %vm1463, %v1430, %v1432
    %v1470 = vsel %vm1463, %v1434, %v1436
    %v1471 = vsel %vm1463, %v1436, %v1438
    %v1472 = vsel %vm1463, %v1440, %v1442
    %v1473 = vsel %vm1463, %v1442, %v1444
    %v1474 = vsel %vm1463, %v1446, %v1448
    %v1475 = vsel %vm1463, %v1448, %v1450
    %v1476 = vsel %vm1463, %v1452, %v1454
    %v1477 = vsel %vm1463, %v1454, %v1456
    %v1478 = vsel %vm1463, %v1458, %v1460
    %v1479 = vsel %vm1463, %v1460, %v1462
    %1504 = vmatprep.subr.bf16.mxu0 %v1465
    %1505 = vmatpush1.bf16.msra.mxu0 %v1464
    %1506 = vmatprep.subr.bf16.mxu0 %v1467
    %1507 = vmatpush1.bf16.msra.mxu0 %v1466
    %1508 = vmatprep.subr.bf16.mxu0 %v1469
    %1509 = vmatpush1.bf16.msra.mxu0 %v1468
    %1510 = vmatprep.subr.bf16.mxu0 %v1471
    %1511 = vmatpush1.bf16.msra.mxu0 %v1470
    %1512 = vmatprep.subr.bf16.mxu0 %v1473
    %1513 = vmatpush1.bf16.msra.mxu0 %v1472
    %1514 = vmatprep.subr.bf16.mxu0 %v1475
    %1515 = vmatpush1.bf16.msra.mxu0 %v1474
    %1516 = vmatprep.subr.bf16.mxu0 %v1477
    %1517 = vmatpush1.bf16.msra.mxu0 %v1476
    %1518 = vmatprep.subr.bf16.mxu0 %v1479
    %1519 = vmatpush1.bf16.msra.mxu0 %v1478
    %1520 = vmatprep.subr.bf16.mxu0 0
    %1521 = vmatpush1.bf16.msra.mxu0 0
    %1522 = vmatprep.subr.bf16.mxu0 0
    %1523 = vmatpush1.bf16.msra.mxu0 0
    %1524 = vmatprep.subr.bf16.mxu0 0
    %1525 = vmatpush1.bf16.msra.mxu0 0
    %1526 = vmatprep.subr.bf16.mxu0 0
    %1527 = vmatpush1.bf16.msra.mxu0 0
    %1528 = vmatprep.subr.bf16.mxu0 0
    %1529 = vmatpush1.bf16.msra.mxu0 0
    %1530 = vmatprep.subr.bf16.mxu0 0
    %1531 = vmatpush1.bf16.msra.mxu0 0
    %1532 = vmatprep.subr.bf16.mxu0 0
    %1533 = vmatpush1.bf16.msra.mxu0 0
    %1534 = vmatprep.subr.bf16.mxu0 0
    %1535 = vmatpush1.bf16.msra.mxu0 0
    %1536 = vmatprep.mubr.bf16.mxu0 0
    %1537 = vmatmul.mubr.bf16.gmra.mrb[0].mxu0 %v1411
    %v1538 = vpop.f32.mrb[0].mxu0
    %v1539 = vadd.f32 0.0, %v1538
    %v1540 = vpop.f32.mrb[0].mxu0
    %v1541 = vadd.f32 0.0, %v1540
    %v1542 = vpop.f32.mrb[0].mxu0
    %v1543 = vadd.f32 0.0, %v1542
    %v1544 = vpop.f32.mrb[0].mxu0
    %v1545 = vadd.f32 0.0, %v1544
    %1546 = vmatprep.mubr.bf16.mxu0 0
    %1547 = vmatmul.mubr.bf16.gmra.mrb[0].mxu0 %v1412
    %v1548 = vpop.f32.mrb[0].mxu0
    %v1549 = vadd.f32 0.0, %v1548
    %v1550 = vpop.f32.mrb[0].mxu0
    %v1551 = vadd.f32 0.0, %v1550
    %v1552 = vpop.f32.mrb[0].mxu0
    %v1553 = vadd.f32 0.0, %v1552
    %v1554 = vpop.f32.mrb[0].mxu0
    %v1555 = vadd.f32 0.0, %v1554
    %1556 = vdwg.mxu0
    %1557 = vmatprep.subr.bf16.mxu0 0
    %1558 = vmatpush1.bf16.msra.mxu0 %v1420
    %1559 = vmatprep.subr.bf16.mxu0 0
    %1560 = vmatpush1.bf16.msra.mxu0 %v1426
    %1561 = vmatprep.subr.bf16.mxu0 0
    %1562 = vmatpush1.bf16.msra.mxu0 %v1432
    %1563 = vmatprep.subr.bf16.mxu0 0
    %1564 = vmatpush1.bf16.msra.mxu0 %v1438
    %1565 = vmatprep.subr.bf16.mxu0 0
    %1566 = vmatpush1.bf16.msra.mxu0 %v1444
    %1567 = vmatprep.subr.bf16.mxu0 0
    %1568 = vmatpush1.bf16.msra.mxu0 %v1450
    %1569 = vmatprep.subr.bf16.mxu0 0
    %1570 = vmatpush1.bf16.msra.mxu0 %v1456
    %1571 = vmatprep.subr.bf16.mxu0 0
    %1572 = vmatpush1.bf16.msra.mxu0 %v1462
    %1573 = vmatprep.subr.bf16.mxu0 0
    %1574 = vmatpush1.bf16.msra.mxu0 0
    %1575 = vmatprep.subr.bf16.mxu0 0
    %1576 = vmatpush1.bf16.msra.mxu0 0
    %1577 = vmatprep.subr.bf16.mxu0 0
    %1578 = vmatpush1.bf16.msra.mxu0 0
    %1579 = vmatprep.subr.bf16.mxu0 0
    %1580 = vmatpush1.bf16.msra.mxu0 0
    %1581 = vmatprep.subr.bf16.mxu0 0
    %1582 = vmatpush1.bf16.msra.mxu0 0
    %1583 = vmatprep.subr.bf16.mxu0 0
    %1584 = vmatpush1.bf16.msra.mxu0 0
    %1585 = vmatprep.subr.bf16.mxu0 0
    %1586 = vmatpush1.bf16.msra.mxu0 0
    %1587 = vmatprep.subr.bf16.mxu0 0
    %1588 = vmatpush1.bf16.msra.mxu0 0
    %1589 = vmatprep.mubr.bf16.mxu0 0
    %1590 = vmatmul.mubr.bf16.gmra.mrb[0].mxu0 %v1411
    %v1591 = vpop.f32.mrb[0].mxu0
    %v1592 = vadd.f32 0.0, %v1591
    %v1593 = vpop.f32.mrb[0].mxu0
    %v1594 = vpop.f32.mrb[0].mxu0
    %v1595 = vadd.f32 0.0, %v1594
    %v1596 = vpop.f32.mrb[0].mxu0
    %1597 = vmatprep.mubr.bf16.mxu0 0
    %1598 = vmatmul.mubr.bf16.gmra.mrb[0].mxu0 %v1412
    %v1599 = vpop.f32.mrb[0].mxu0
    %v1600 = vadd.f32 0.0, %v1599
    %v1601 = vpop.f32.mrb[0].mxu0
    %v1602 = vpop.f32.mrb[0].mxu0
    %v1603 = vadd.f32 0.0, %v1602
    %v1604 = vpop.f32.mrb[0].mxu0
    %1605 = vdwg.mxu0
    %v1606 = vadd.f32 %v1386, %v1539
    %v1607 = vadd.f32 %v1387, %v1541
    %v1608 = vadd.f32 %v1388, %v1592
    %v1609 = vadd.f32 %v1389, %v1543
    %v1610 = vadd.f32 %v1390, %v1545
    %v1611 = vadd.f32 %v1391, %v1595
    %v1612 = vadd.f32 %v1392, %v1549
    %v1613 = vadd.f32 %v1393, %v1551
    %v1614 = vadd.f32 %v1394, %v1600
    %v1615 = vadd.f32 %v1395, %v1553
    %v1616 = vadd.f32 %v1396, %v1555
    %v1617 = vadd.f32 %v1397, %v1603
    %s1618 = scalar_lea.vmem %s1, 112
    %v1619 = vld [vmem:[%s1618] sm:$0xf]
    %v1620 = vld [vmem:[%s1618 + $0x4] sm:$0xf]
    %v1621 = vld [vmem:[%s1618 + $0x8] sm:$0xf]
    %v1622 = vld [vmem:[%s1618 + $0xc] sm:$0xf]
    %v1627 = vunpack.c.l.b16 %v1619
    %v1628 = vunpack.c.l.b16 %v1620
    %v1629 = vunpack.c.l.b16 %v1621
    %v1630 = vunpack.c.l.b16 %v1622
    %v1631 = vpack.c.b16 %v1628, %v1627
    %v1632 = vpack.c.b16 %v1630, %v1629
    %1635 = vrot.lane.b32.xlu0 %v165, 91
    %v1636 = vpop.permute.xlu0 %1635
    %1637 = vrot.lane.b32.xlu0 %v166, 91
    %v1638 = vpop.permute.xlu0 %1637
    %1639 = vrot.lane.b32.xlu0 %v167, 91
    %v1640 = vpop.permute.xlu0 %1639
    %1641 = vrot.lane.b32.xlu0 %v168, 91
    %v1642 = vpop.permute.xlu0 %1641
    %1643 = vrot.lane.b32.xlu0 %v169, 91
    %v1644 = vpop.permute.xlu0 %1643
    %1645 = vrot.lane.b32.xlu0 %v170, 91
    %v1646 = vpop.permute.xlu0 %1645
    %1647 = vrot.lane.b32.xlu0 %v171, 91
    %v1648 = vpop.permute.xlu0 %1647
    %1649 = vrot.lane.b32.xlu0 %v172, 91
    %v1650 = vpop.permute.xlu0 %1649
    %1651 = vrot.lane.b32.xlu0 %v173, 91
    %v1652 = vpop.permute.xlu0 %1651
    %1653 = vrot.lane.b32.xlu0 %v174, 91
    %v1654 = vpop.permute.xlu0 %1653
    %1655 = vrot.lane.b32.xlu0 %v175, 91
    %v1656 = vpop.permute.xlu0 %1655
    %1657 = vrot.lane.b32.xlu0 %v176, 91
    %v1658 = vpop.permute.xlu0 %1657
    %1659 = vrot.lane.b32.xlu0 %v177, 91
    %v1660 = vpop.permute.xlu0 %1659
    %1661 = vrot.lane.b32.xlu0 %v178, 91
    %v1662 = vpop.permute.xlu0 %1661
    %1663 = vrot.lane.b32.xlu0 %v179, 91
    %v1664 = vpop.permute.xlu0 %1663
    %1665 = vrot.lane.b32.xlu0 %v180, 91
    %v1666 = vpop.permute.xlu0 %1665
    %1667 = vrot.lane.b32.xlu0 %v181, 91
    %v1668 = vpop.permute.xlu0 %1667
    %1669 = vrot.lane.b32.xlu0 %v182, 91
    %v1670 = vpop.permute.xlu0 %1669
    %1671 = vrot.lane.b32.xlu0 %v183, 91
    %v1672 = vpop.permute.xlu0 %1671
    %1673 = vrot.lane.b32.xlu0 %v184, 91
    %v1674 = vpop.permute.xlu0 %1673
    %1675 = vrot.lane.b32.xlu0 %v185, 91
    %v1676 = vpop.permute.xlu0 %1675
    %1677 = vrot.lane.b32.xlu0 %v186, 91
    %v1678 = vpop.permute.xlu0 %1677
    %1679 = vrot.lane.b32.xlu0 %v187, 91
    %v1680 = vpop.permute.xlu0 %1679
    %1681 = vrot.lane.b32.xlu0 %v188, 91
    %v1682 = vpop.permute.xlu0 %1681
    %vm1683 = vcmask 744448
    %v1684 = vsel %vm1683, %v1636, %v1638
    %v1685 = vsel %vm1683, %v1638, %v1640
    %v1686 = vsel %vm1683, %v1642, %v1644
    %v1687 = vsel %vm1683, %v1644, %v1646
    %v1688 = vsel %vm1683, %v1648, %v1650
    %v1689 = vsel %vm1683, %v1650, %v1652
    %v1690 = vsel %vm1683, %v1654, %v1656
    %v1691 = vsel %vm1683, %v1656, %v1658
    %v1692 = vsel %vm1683, %v1660, %v1662
    %v1693 = vsel %vm1683, %v1662, %v1664
    %v1694 = vsel %vm1683, %v1666, %v1668
    %v1695 = vsel %vm1683, %v1668, %v1670
    %v1696 = vsel %vm1683, %v1672, %v1674
    %v1697 = vsel %vm1683, %v1674, %v1676
    %v1698 = vsel %vm1683, %v1678, %v1680
    %v1699 = vsel %vm1683, %v1680, %v1682
    %1724 = vmatprep.subr.bf16.mxu0 %v1685
    %1725 = vmatpush1.bf16.msra.mxu0 %v1684
    %1726 = vmatprep.subr.bf16.mxu0 %v1687
    %1727 = vmatpush1.bf16.msra.mxu0 %v1686
    %1728 = vmatprep.subr.bf16.mxu0 %v1689
    %1729 = vmatpush1.bf16.msra.mxu0 %v1688
    %1730 = vmatprep.subr.bf16.mxu0 %v1691
    %1731 = vmatpush1.bf16.msra.mxu0 %v1690
    %1732 = vmatprep.subr.bf16.mxu0 %v1693
    %1733 = vmatpush1.bf16.msra.mxu0 %v1692
    %1734 = vmatprep.subr.bf16.mxu0 %v1695
    %1735 = vmatpush1.bf16.msra.mxu0 %v1694
    %1736 = vmatprep.subr.bf16.mxu0 %v1697
    %1737 = vmatpush1.bf16.msra.mxu0 %v1696
    %1738 = vmatprep.subr.bf16.mxu0 %v1699
    %1739 = vmatpush1.bf16.msra.mxu0 %v1698
    %1740 = vmatprep.subr.bf16.mxu0 0
    %1741 = vmatpush1.bf16.msra.mxu0 0
    %1742 = vmatprep.subr.bf16.mxu0 0
    %1743 = vmatpush1.bf16.msra.mxu0 0
    %1744 = vmatprep.subr.bf16.mxu0 0
    %1745 = vmatpush1.bf16.msra.mxu0 0
    %1746 = vmatprep.subr.bf16.mxu0 0
    %1747 = vmatpush1.bf16.msra.mxu0 0
    %1748 = vmatprep.subr.bf16.mxu0 0
    %1749 = vmatpush1.bf16.msra.mxu0 0
    %1750 = vmatprep.subr.bf16.mxu0 0
    %1751 = vmatpush1.bf16.msra.mxu0 0
    %1752 = vmatprep.subr.bf16.mxu0 0
    %1753 = vmatpush1.bf16.msra.mxu0 0
    %1754 = vmatprep.subr.bf16.mxu0 0
    %1755 = vmatpush1.bf16.msra.mxu0 0
    %1756 = vmatprep.mubr.bf16.mxu0 0
    %1757 = vmatmul.mubr.bf16.gmra.mrb[0].mxu0 %v1631
    %v1758 = vpop.f32.mrb[0].mxu0
    %v1759 = vadd.f32 0.0, %v1758
    %v1760 = vpop.f32.mrb[0].mxu0
    %v1761 = vadd.f32 0.0, %v1760
    %v1762 = vpop.f32.mrb[0].mxu0
    %v1763 = vadd.f32 0.0, %v1762
    %v1764 = vpop.f32.mrb[0].mxu0
    %v1765 = vadd.f32 0.0, %v1764
    %1766 = vmatprep.mubr.bf16.mxu0 0
    %1767 = vmatmul.mubr.bf16.gmra.mrb[0].mxu0 %v1632
    %v1768 = vpop.f32.mrb[0].mxu0
    %v1769 = vadd.f32 0.0, %v1768
    %v1770 = vpop.f32.mrb[0].mxu0
    %v1771 = vadd.f32 0.0, %v1770
    %v1772 = vpop.f32.mrb[0].mxu0
    %v1773 = vadd.f32 0.0, %v1772
    %v1774 = vpop.f32.mrb[0].mxu0
    %v1775 = vadd.f32 0.0, %v1774
    %1776 = vdwg.mxu0
    %1777 = vmatprep.subr.bf16.mxu0 0
    %1778 = vmatpush1.bf16.msra.mxu0 %v1640
    %1779 = vmatprep.subr.bf16.mxu0 0
    %1780 = vmatpush1.bf16.msra.mxu0 %v1646
    %1781 = vmatprep.subr.bf16.mxu0 0
    %1782 = vmatpush1.bf16.msra.mxu0 %v1652
    %1783 = vmatprep.subr.bf16.mxu0 0
    %1784 = vmatpush1.bf16.msra.mxu0 %v1658
    %1785 = vmatprep.subr.bf16.mxu0 0
    %1786 = vmatpush1.bf16.msra.mxu0 %v1664
    %1787 = vmatprep.subr.bf16.mxu0 0
    %1788 = vmatpush1.bf16.msra.mxu0 %v1670
    %1789 = vmatprep.subr.bf16.mxu0 0
    %1790 = vmatpush1.bf16.msra.mxu0 %v1676
    %1791 = vmatprep.subr.bf16.mxu0 0
    %1792 = vmatpush1.bf16.msra.mxu0 %v1682
    %1793 = vmatprep.subr.bf16.mxu0 0
    %1794 = vmatpush1.bf16.msra.mxu0 0
    %1795 = vmatprep.subr.bf16.mxu0 0
    %1796 = vmatpush1.bf16.msra.mxu0 0
    %1797 = vmatprep.subr.bf16.mxu0 0
    %1798 = vmatpush1.bf16.msra.mxu0 0
    %1799 = vmatprep.subr.bf16.mxu0 0
    %1800 = vmatpush1.bf16.msra.mxu0 0
    %1801 = vmatprep.subr.bf16.mxu0 0
    %1802 = vmatpush1.bf16.msra.mxu0 0
    %1803 = vmatprep.subr.bf16.mxu0 0
    %1804 = vmatpush1.bf16.msra.mxu0 0
    %1805 = vmatprep.subr.bf16.mxu0 0
    %1806 = vmatpush1.bf16.msra.mxu0 0
    %1807 = vmatprep.subr.bf16.mxu0 0
    %1808 = vmatpush1.bf16.msra.mxu0 0
    %1809 = vmatprep.mubr.bf16.mxu0 0
    %1810 = vmatmul.mubr.bf16.gmra.mrb[0].mxu0 %v1631
    %v1811 = vpop.f32.mrb[0].mxu0
    %v1812 = vadd.f32 0.0, %v1811
    %v1813 = vpop.f32.mrb[0].mxu0
    %v1814 = vpop.f32.mrb[0].mxu0
    %v1815 = vadd.f32 0.0, %v1814
    %v1816 = vpop.f32.mrb[0].mxu0
    %1817 = vmatprep.mubr.bf16.mxu0 0
    %1818 = vmatmul.mubr.bf16.gmra.mrb[0].mxu0 %v1632
    %v1819 = vpop.f32.mrb[0].mxu0
    %v1820 = vadd.f32 0.0, %v1819
    %v1821 = vpop.f32.mrb[0].mxu0
    %v1822 = vpop.f32.mrb[0].mxu0
    %v1823 = vadd.f32 0.0, %v1822
    %v1824 = vpop.f32.mrb[0].mxu0
    %1825 = vdwg.mxu0
    %v1826 = vadd.f32 %v1606, %v1759
    %v1827 = vadd.f32 %v1607, %v1761
    %v1828 = vadd.f32 %v1608, %v1812
    %v1829 = vadd.f32 %v1609, %v1763
    %v1830 = vadd.f32 %v1610, %v1765
    %v1831 = vadd.f32 %v1611, %v1815
    %v1832 = vadd.f32 %v1612, %v1769
    %v1833 = vadd.f32 %v1613, %v1771
    %v1834 = vadd.f32 %v1614, %v1820
    %v1835 = vadd.f32 %v1615, %v1773
    %v1836 = vadd.f32 %v1616, %v1775
    %v1837 = vadd.f32 %v1617, %v1823
    %s1838 = scalar_lea.vmem %s1, 128
    %v1839 = vld [vmem:[%s1838] sm:$0xf]
    %v1840 = vld [vmem:[%s1838 + $0x4] sm:$0xf]
    %v1841 = vld [vmem:[%s1838 + $0x8] sm:$0xf]
    %v1842 = vld [vmem:[%s1838 + $0xc] sm:$0xf]
    %v1847 = vunpack.c.l.b16 %v1839
    %v1848 = vunpack.c.l.b16 %v1840
    %v1849 = vunpack.c.l.b16 %v1841
    %v1850 = vunpack.c.l.b16 %v1842
    %v1851 = vpack.c.b16 %v1848, %v1847
    %v1852 = vpack.c.b16 %v1850, %v1849
    %1855 = vrot.lane.b32.xlu0 %v165, 90
    %v1856 = vpop.permute.xlu0 %1855
    %1857 = vrot.lane.b32.xlu0 %v166, 90
    %v1858 = vpop.permute.xlu0 %1857
    %1859 = vrot.lane.b32.xlu0 %v167, 90
    %v1860 = vpop.permute.xlu0 %1859
    %1861 = vrot.lane.b32.xlu0 %v168, 90
    %v1862 = vpop.permute.xlu0 %1861
    %1863 = vrot.lane.b32.xlu0 %v169, 90
    %v1864 = vpop.permute.xlu0 %1863
    %1865 = vrot.lane.b32.xlu0 %v170, 90
    %v1866 = vpop.permute.xlu0 %1865
    %1867 = vrot.lane.b32.xlu0 %v171, 90
    %v1868 = vpop.permute.xlu0 %1867
    %1869 = vrot.lane.b32.xlu0 %v172, 90
    %v1870 = vpop.permute.xlu0 %1869
    %1871 = vrot.lane.b32.xlu0 %v173, 90
    %v1872 = vpop.permute.xlu0 %1871
    %1873 = vrot.lane.b32.xlu0 %v174, 90
    %v1874 = vpop.permute.xlu0 %1873
    %1875 = vrot.lane.b32.xlu0 %v175, 90
    %v1876 = vpop.permute.xlu0 %1875
    %1877 = vrot.lane.b32.xlu0 %v176, 90
    %v1878 = vpop.permute.xlu0 %1877
    %1879 = vrot.lane.b32.xlu0 %v177, 90
    %v1880 = vpop.permute.xlu0 %1879
    %1881 = vrot.lane.b32.xlu0 %v178, 90
    %v1882 = vpop.permute.xlu0 %1881
    %1883 = vrot.lane.b32.xlu0 %v179, 90
    %v1884 = vpop.permute.xlu0 %1883
    %1885 = vrot.lane.b32.xlu0 %v180, 90
    %v1886 = vpop.permute.xlu0 %1885
    %1887 = vrot.lane.b32.xlu0 %v181, 90
    %v1888 = vpop.permute.xlu0 %1887
    %1889 = vrot.lane.b32.xlu0 %v182, 90
    %v1890 = vpop.permute.xlu0 %1889
    %1891 = vrot.lane.b32.xlu0 %v183, 90
    %v1892 = vpop.permute.xlu0 %1891
    %1893 = vrot.lane.b32.xlu0 %v184, 90
    %v1894 = vpop.permute.xlu0 %1893
    %1895 = vrot.lane.b32.xlu0 %v185, 90
    %v1896 = vpop.permute.xlu0 %1895
    %1897 = vrot.lane.b32.xlu0 %v186, 90
    %v1898 = vpop.permute.xlu0 %1897
    %1899 = vrot.lane.b32.xlu0 %v187, 90
    %v1900 = vpop.permute.xlu0 %1899
    %1901 = vrot.lane.b32.xlu0 %v188, 90
    %v1902 = vpop.permute.xlu0 %1901
    %vm1903 = vcmask 736256
    %v1904 = vsel %vm1903, %v1856, %v1858
    %v1905 = vsel %vm1903, %v1858, %v1860
    %v1906 = vsel %vm1903, %v1862, %v1864
    %v1907 = vsel %vm1903, %v1864, %v1866
    %v1908 = vsel %vm1903, %v1868, %v1870
    %v1909 = vsel %vm1903, %v1870, %v1872
    %v1910 = vsel %vm1903, %v1874, %v1876
    %v1911 = vsel %vm1903, %v1876, %v1878
    %v1912 = vsel %vm1903, %v1880, %v1882
    %v1913 = vsel %vm1903, %v1882, %v1884
    %v1914 = vsel %vm1903, %v1886, %v1888
    %v1915 = vsel %vm1903, %v1888, %v1890
    %v1916 = vsel %vm1903, %v1892, %v1894
    %v1917 = vsel %vm1903, %v1894, %v1896
    %v1918 = vsel %vm1903, %v1898, %v1900
    %v1919 = vsel %vm1903, %v1900, %v1902
    %1944 = vmatprep.subr.bf16.mxu0 %v1905
    %1945 = vmatpush1.bf16.msra.mxu0 %v1904
    %1946 = vmatprep.subr.bf16.mxu0 %v1907
    %1947 = vmatpush1.bf16.msra.mxu0 %v1906
    %1948 = vmatprep.subr.bf16.mxu0 %v1909
    %1949 = vmatpush1.bf16.msra.mxu0 %v1908
    %1950 = vmatprep.subr.bf16.mxu0 %v1911
    %1951 = vmatpush1.bf16.msra.mxu0 %v1910
    %1952 = vmatprep.subr.bf16.mxu0 %v1913
    %1953 = vmatpush1.bf16.msra.mxu0 %v1912
    %1954 = vmatprep.subr.bf16.mxu0 %v1915
    %1955 = vmatpush1.bf16.msra.mxu0 %v1914
    %1956 = vmatprep.subr.bf16.mxu0 %v1917
    %1957 = vmatpush1.bf16.msra.mxu0 %v1916
    %1958 = vmatprep.subr.bf16.mxu0 %v1919
    %1959 = vmatpush1.bf16.msra.mxu0 %v1918
    %1960 = vmatprep.subr.bf16.mxu0 0
    %1961 = vmatpush1.bf16.msra.mxu0 0
    %1962 = vmatprep.subr.bf16.mxu0 0
    %1963 = vmatpush1.bf16.msra.mxu0 0
    %1964 = vmatprep.subr.bf16.mxu0 0
    %1965 = vmatpush1.bf16.msra.mxu0 0
    %1966 = vmatprep.subr.bf16.mxu0 0
    %1967 = vmatpush1.bf16.msra.mxu0 0
    %1968 = vmatprep.subr.bf16.mxu0 0
    %1969 = vmatpush1.bf16.msra.mxu0 0
    %1970 = vmatprep.subr.bf16.mxu0 0
    %1971 = vmatpush1.bf16.msra.mxu0 0
    %1972 = vmatprep.subr.bf16.mxu0 0
    %1973 = vmatpush1.bf16.msra.mxu0 0
    %1974 = vmatprep.subr.bf16.mxu0 0
    %1975 = vmatpush1.bf16.msra.mxu0 0
    %1976 = vmatprep.mubr.bf16.mxu0 0
    %1977 = vmatmul.mubr.bf16.gmra.mrb[0].mxu0 %v1851
    %v1978 = vpop.f32.mrb[0].mxu0
    %v1979 = vadd.f32 0.0, %v1978
    %v1980 = vpop.f32.mrb[0].mxu0
    %v1981 = vadd.f32 0.0, %v1980
    %v1982 = vpop.f32.mrb[0].mxu0
    %v1983 = vadd.f32 0.0, %v1982
    %v1984 = vpop.f32.mrb[0].mxu0
    %v1985 = vadd.f32 0.0, %v1984
    %1986 = vmatprep.mubr.bf16.mxu0 0
    %1987 = vmatmul.mubr.bf16.gmra.mrb[0].mxu0 %v1852
    %v1988 = vpop.f32.mrb[0].mxu0
    %v1989 = vadd.f32 0.0, %v1988
    %v1990 = vpop.f32.mrb[0].mxu0
    %v1991 = vadd.f32 0.0, %v1990
    %v1992 = vpop.f32.mrb[0].mxu0
    %v1993 = vadd.f32 0.0, %v1992
    %v1994 = vpop.f32.mrb[0].mxu0
    %v1995 = vadd.f32 0.0, %v1994
    %1996 = vdwg.mxu0
    %1997 = vmatprep.subr.bf16.mxu0 0
    %1998 = vmatpush1.bf16.msra.mxu0 %v1860
    %1999 = vmatprep.subr.bf16.mxu0 0
    %2000 = vmatpush1.bf16.msra.mxu0 %v1866
    %2001 = vmatprep.subr.bf16.mxu0 0
    %2002 = vmatpush1.bf16.msra.mxu0 %v1872
    %2003 = vmatprep.subr.bf16.mxu0 0
    %2004 = vmatpush1.bf16.msra.mxu0 %v1878
    %2005 = vmatprep.subr.bf16.mxu0 0
    %2006 = vmatpush1.bf16.msra.mxu0 %v1884
    %2007 = vmatprep.subr.bf16.mxu0 0
    %2008 = vmatpush1.bf16.msra.mxu0 %v1890
    %2009 = vmatprep.subr.bf16.mxu0 0
    %2010 = vmatpush1.bf16.msra.mxu0 %v1896
    %2011 = vmatprep.subr.bf16.mxu0 0
    %2012 = vmatpush1.bf16.msra.mxu0 %v1902
    %2013 = vmatprep.subr.bf16.mxu0 0
    %2014 = vmatpush1.bf16.msra.mxu0 0
    %2015 = vmatprep.subr.bf16.mxu0 0
    %2016 = vmatpush1.bf16.msra.mxu0 0
    %2017 = vmatprep.subr.bf16.mxu0 0
    %2018 = vmatpush1.bf16.msra.mxu0 0
    %2019 = vmatprep.subr.bf16.mxu0 0
    %2020 = vmatpush1.bf16.msra.mxu0 0
    %2021 = vmatprep.subr.bf16.mxu0 0
    %2022 = vmatpush1.bf16.msra.mxu0 0
    %2023 = vmatprep.subr.bf16.mxu0 0
    %2024 = vmatpush1.bf16.msra.mxu0 0
    %2025 = vmatprep.subr.bf16.mxu0 0
    %2026 = vmatpush1.bf16.msra.mxu0 0
    %2027 = vmatprep.subr.bf16.mxu0 0
    %2028 = vmatpush1.bf16.msra.mxu0 0
    %2029 = vmatprep.mubr.bf16.mxu0 0
    %2030 = vmatmul.mubr.bf16.gmra.mrb[0].mxu0 %v1851
    %v2031 = vpop.f32.mrb[0].mxu0
    %v2032 = vadd.f32 0.0, %v2031
    %v2033 = vpop.f32.mrb[0].mxu0
    %v2034 = vpop.f32.mrb[0].mxu0
    %v2035 = vadd.f32 0.0, %v2034
    %v2036 = vpop.f32.mrb[0].mxu0
    %2037 = vmatprep.mubr.bf16.mxu0 0
    %2038 = vmatmul.mubr.bf16.gmra.mrb[0].mxu0 %v1852
    %v2039 = vpop.f32.mrb[0].mxu0
    %v2040 = vadd.f32 0.0, %v2039
    %v2041 = vpop.f32.mrb[0].mxu0
    %v2042 = vpop.f32.mrb[0].mxu0
    %v2043 = vadd.f32 0.0, %v2042
    %v2044 = vpop.f32.mrb[0].mxu0
    %2045 = vdwg.mxu0
    %v2046 = vadd.f32 %v1826, %v1979
    %v2047 = vadd.f32 %v1827, %v1981
    %v2048 = vadd.f32 %v1828, %v2032
    %v2049 = vadd.f32 %v1829, %v1983
    %v2050 = vadd.f32 %v1830, %v1985
    %v2051 = vadd.f32 %v1831, %v2035
    %v2052 = vadd.f32 %v1832, %v1989
    %v2053 = vadd.f32 %v1833, %v1991
    %v2054 = vadd.f32 %v1834, %v2040
    %v2055 = vadd.f32 %v1835, %v1993
    %v2056 = vadd.f32 %v1836, %v1995
    %v2057 = vadd.f32 %v1837, %v2043
    %2059 = vset.pattern.permute.xlu0 0
    %2060 = vperm.xlu0 %2059, %v23
    %v2061 = vpop.permute.xlu0 %2060
    %2064 = vset.pattern.permute.xlu0 0
    %2065 = vperm.xlu0 %2064, %v24
    %v2066 = vpop.permute.xlu0 %2065
    %2069 = vset.pattern.permute.xlu0 0
    %2070 = vperm.xlu0 %2069, %v25
    %v2071 = vpop.permute.xlu0 %2070
    %2074 = vset.pattern.permute.xlu0 0
    %2075 = vperm.xlu0 %2074, %v26
    %v2076 = vpop.permute.xlu0 %2075
    %v2078 = vadd.f32 %v2046, %v2061
    %v2079 = vadd.f32 %v2047, %v2061
    %v2080 = vadd.f32 %v2048, %v2061
    %v2081 = vadd.f32 %v2049, %v2066
    %v2082 = vadd.f32 %v2050, %v2066
    %v2083 = vadd.f32 %v2051, %v2066
    %v2084 = vadd.f32 %v2052, %v2071
    %v2085 = vadd.f32 %v2053, %v2071
    %v2086 = vadd.f32 %v2054, %v2071
    %v2087 = vadd.f32 %v2055, %v2076
    %v2088 = vadd.f32 %v2056, %v2076
    %v2089 = vadd.f32 %v2057, %v2076
    %v2090 = vmax.f32 %v2078, 0.0
    %v2091 = vmax.f32 %v2079, 0.0
    %v2092 = vmax.f32 %v2080, 0.0
    %v2093 = vmax.f32 %v2081, 0.0
    %v2094 = vmax.f32 %v2082, 0.0
    %v2095 = vmax.f32 %v2083, 0.0
    %v2096 = vmax.f32 %v2084, 0.0
    %v2097 = vmax.f32 %v2085, 0.0
    %v2098 = vmax.f32 %v2086, 0.0
    %v2099 = vmax.f32 %v2087, 0.0
    %v2100 = vmax.f32 %v2088, 0.0
    %v2101 = vmax.f32 %v2089, 0.0
    %2103 = vset.pattern.permute.xlu0 0
    %2104 = vperm.xlu0 %2103, %v27
    %v2105 = vpop.permute.xlu0 %2104
    %2108 = vset.pattern.permute.xlu0 0
    %2109 = vperm.xlu0 %2108, %v28
    %v2110 = vpop.permute.xlu0 %2109
    %2113 = vset.pattern.permute.xlu0 0
    %2114 = vperm.xlu0 %2113, %v29
    %v2115 = vpop.permute.xlu0 %2114
    %2118 = vset.pattern.permute.xlu0 0
    %2119 = vperm.xlu0 %2118, %v30
    %v2120 = vpop.permute.xlu0 %2119
    %v2122 = vmul.f32 %v2090, %v2105
    %v2123 = vmul.f32 %v2091, %v2105
    %v2124 = vmul.f32 %v2092, %v2105
    %v2125 = vmul.f32 %v2093, %v2110
    %v2126 = vmul.f32 %v2094, %v2110
    %v2127 = vmul.f32 %v2095, %v2110
    %v2128 = vmul.f32 %v2096, %v2115
    %v2129 = vmul.f32 %v2097, %v2115
    %v2130 = vmul.f32 %v2098, %v2115
    %v2131 = vmul.f32 %v2099, %v2120
    %v2132 = vmul.f32 %v2100, %v2120
    %v2133 = vmul.f32 %v2101, %v2120
    %v2134 = vadd.f32 %v2122, %v2125
    %v2135 = vadd.f32 %v2134, %v2128
    %v2136 = vadd.f32 %v2135, %v2131
    %v2137 = vrot.slane %v2136, 4
    %v2138 = vadd.f32 %v2136, %v2137
    %v2139 = vrot.slane %v2138, 2
    %v2140 = vadd.f32 %v2138, %v2139
    %v2141 = vrot.slane %v2140, 1
    %v2142 = vadd.f32 %v2140, %v2141
    %v2143 = vadd.f32 %v2123, %v2126
    %v2144 = vadd.f32 %v2143, %v2129
    %v2145 = vadd.f32 %v2144, %v2132
    %v2146 = vrot.slane %v2145, 4
    %v2147 = vadd.f32 %v2145, %v2146
    %v2148 = vrot.slane %v2147, 2
    %v2149 = vadd.f32 %v2147, %v2148
    %v2150 = vrot.slane %v2149, 1
    %v2151 = vadd.f32 %v2149, %v2150
    %vm2152 = vcmask 261120
    %v2153 = vsel %vm2152, %v2124, 0.0
    %v2154 = vsel %vm2152, %v2127, 0.0
    %v2155 = vadd.f32 %v2153, %v2154
    %v2156 = vsel %vm2152, %v2130, 0.0
    %v2157 = vadd.f32 %v2155, %v2156
    %v2158 = vsel %vm2152, %v2133, 0.0
    %v2159 = vadd.f32 %v2157, %v2158
    %v2160 = vrot.slane %v2159, 4
    %v2161 = vadd.f32 %v2159, %v2160
    %v2162 = vrot.slane %v2161, 2
    %v2163 = vadd.f32 %v2161, %v2162
    %v2164 = vrot.slane %v2163, 1
    %v2165 = vadd.f32 %v2163, %v2164
    %v2166 = vstv %s31
    %v2167 = vadd.f32 %v2142, %v2166
    %v2168 = vadd.f32 %v2151, %v2166
    %v2169 = vadd.f32 %v2165, %v2166
    %v2173 = vcombine.low %v2167, %v2168
    %v2175 = vunpack.c.l.s4 1966171168
    %v2176 = vunpack.c.0.s8 %v2175
    %v2177 = vlaneseq
    %v2178 = vshrl.u32 %v2177, 7
    %v2179 = vsub.s32 %v2176, %v2178
    %v2180 = vrot.slane %v2173, %v2179
    %v2182 = vunpack.c.l.s4 1966171168
    %v2183 = vunpack.c.0.s8 %v2182
    %v2184 = vlaneseq
    %v2185 = vshrl.u32 %v2184, 7
    %v2186 = vsub.s32 %v2183, %v2185
    %v2187 = vrot.slane %v2169, %v2186
    %v2188 = vcombine.low %v2180, %v2187
    %v2190 = vunpack.c.l.s4 1966171168
    %v2191 = vunpack.c.0.s8 %v2190
    %v2192 = vlaneseq
    %v2193 = vshrl.u32 %v2192, 7
    %v2194 = vsub.s32 %v2191, %v2193
    %v2195 = vrot.slane %v2188, %v2194
    %v2197 = vlaneseq
    %vm2198 = vcmp.ge.s32.totalorder %v2197, 0
    %vm2199 = vcmp.lt.s32.totalorder %v2197, 288
    %vm2200 = vmand %vm2198, %vm2199
    %2201 = vst.msk [vmem:[#allocation3] ss:$2 sm:$0x7] %vm2200, %v2195
    %v2202 = vld [vmem:[%s1] sm:$0xf]
    %v2203 = vld [vmem:[%s1 + $0x4] sm:$0xf]
    %v2204 = vld [vmem:[%s1 + $0x8] sm:$0xf]
    %v2205 = vld [vmem:[%s1 + $0xc] sm:$0xf]
    %s2206 = scalar_lea.vmem %s0, 192
    %v2207 = vld [vmem:[%s2206] sm:$0xff]
    %v2208 = vld [vmem:[%s2206 + $0x8] sm:$0xf]
    %v2209 = vld [vmem:[%s2206 + $0xc] sm:$0xff]
    %v2210 = vld [vmem:[%s2206 + $0x14] sm:$0xf]
    %v2211 = vld [vmem:[%s2206 + $0x18] sm:$0xff]
    %v2212 = vld [vmem:[%s2206 + $0x20] sm:$0xf]
    %v2213 = vld [vmem:[%s2206 + $0x24] sm:$0xff]
    %v2214 = vld [vmem:[%s2206 + $0x2c] sm:$0xf]
    %v2215 = vld [vmem:[%s2206 + $0x30] sm:$0xff]
    %v2216 = vld [vmem:[%s2206 + $0x38] sm:$0xf]
    %v2217 = vld [vmem:[%s2206 + $0x3c] sm:$0xff]
    %v2218 = vld [vmem:[%s2206 + $0x44] sm:$0xf]
    %v2219 = vld [vmem:[%s2206 + $0x48] sm:$0xff]
    %v2220 = vld [vmem:[%s2206 + $0x50] sm:$0xf]
    %v2221 = vld [vmem:[%s2206 + $0x54] sm:$0xff]
    %v2222 = vld [vmem:[%s2206 + $0x5c] sm:$0xf]
    %v2223 = vld [vmem:[%s2206 + $0x60] sm:$0xff]
    %v2224 = vld [vmem:[%s2206 + $0x68] sm:$0xf]
    %v2225 = vld [vmem:[%s2206 + $0x6c] sm:$0xff]
    %v2226 = vld [vmem:[%s2206 + $0x74] sm:$0xf]
    %v2227 = vld [vmem:[%s2206 + $0x78] sm:$0xff]
    %v2228 = vld [vmem:[%s2206 + $0x80] sm:$0xf]
    %v2229 = vld [vmem:[%s2206 + $0x84] sm:$0xff]
    %v2230 = vld [vmem:[%s2206 + $0x8c] sm:$0xf]
    %v2231 = vld [vmem:[%s2206 + $0x90] sm:$0xff]
    %v2232 = vld [vmem:[%s2206 + $0x98] sm:$0xf]
    %v2233 = vld [vmem:[%s2206 + $0x9c] sm:$0xff]
    %v2234 = vld [vmem:[%s2206 + $0xa4] sm:$0xf]
    %v2235 = vld [vmem:[%s2206 + $0xa8] sm:$0xff]
    %v2236 = vld [vmem:[%s2206 + $0xb0] sm:$0xf]
    %v2237 = vld [vmem:[%s2206 + $0xb4] sm:$0xff]
    %v2238 = vld [vmem:[%s2206 + $0xbc] sm:$0xf]
    %v2239 = vld [vmem:[%s68] sm:$0xf]
    %v2240 = vld [vmem:[%s68 + $0x4] sm:$0xf]
    %v2241 = vld [vmem:[%s68 + $0x8] sm:$0xf]
    %v2242 = vld [vmem:[%s68 + $0xc] sm:$0xf]
    %v2247 = vunpack.c.l.b16 %v2239
    %v2248 = vunpack.c.l.b16 %v2240
    %v2249 = vunpack.c.l.b16 %v2241
    %v2250 = vunpack.c.l.b16 %v2242
    %v2251 = vpack.c.b16 %v2248, %v2247
    %v2252 = vpack.c.b16 %v2250, %v2249
    %v2287 = vunpack.c.l.b16 %v2207
    %v2288 = vunpack.c.h.b16 %v2207
    %v2289 = vunpack.c.l.b16 %v2208
    %v2290 = vunpack.c.l.b16 %v2209
    %v2291 = vunpack.c.h.b16 %v2209
    %v2292 = vunpack.c.l.b16 %v2210
    %v2293 = vunpack.c.l.b16 %v2211
    %v2294 = vunpack.c.h.b16 %v2211
    %v2295 = vunpack.c.l.b16 %v2212
    %v2296 = vunpack.c.l.b16 %v2213
    %v2297 = vunpack.c.h.b16 %v2213
    %v2298 = vunpack.c.l.b16 %v2214
    %v2299 = vunpack.c.l.b16 %v2215
    %v2300 = vunpack.c.h.b16 %v2215
    %v2301 = vunpack.c.l.b16 %v2216
    %v2302 = vunpack.c.l.b16 %v2217
    %v2303 = vunpack.c.h.b16 %v2217
    %v2304 = vunpack.c.l.b16 %v2218
    %v2305 = vunpack.c.l.b16 %v2219
    %v2306 = vunpack.c.h.b16 %v2219
    %v2307 = vunpack.c.l.b16 %v2220
    %v2308 = vunpack.c.l.b16 %v2221
    %v2309 = vunpack.c.h.b16 %v2221
    %v2310 = vunpack.c.l.b16 %v2222
    %v2311 = vunpack.c.l.b16 %v2223
    %v2312 = vunpack.c.h.b16 %v2223
    %v2313 = vunpack.c.l.b16 %v2224
    %v2314 = vunpack.c.l.b16 %v2225
    %v2315 = vunpack.c.h.b16 %v2225
    %v2316 = vunpack.c.l.b16 %v2226
    %v2317 = vunpack.c.l.b16 %v2227
    %v2318 = vunpack.c.h.b16 %v2227
    %v2319 = vunpack.c.l.b16 %v2228
    %v2320 = vunpack.c.l.b16 %v2229
    %v2321 = vunpack.c.h.b16 %v2229
    %v2322 = vunpack.c.l.b16 %v2230
    %v2323 = vunpack.c.l.b16 %v2231
    %v2324 = vunpack.c.h.b16 %v2231
    %v2325 = vunpack.c.l.b16 %v2232
    %v2326 = vunpack.c.l.b16 %v2233
    %v2327 = vunpack.c.h.b16 %v2233
    %v2328 = vunpack.c.l.b16 %v2234
    %v2329 = vunpack.c.l.b16 %v2235
    %v2330 = vunpack.c.h.b16 %v2235
    %v2331 = vunpack.c.l.b16 %v2236
    %v2332 = vunpack.c.l.b16 %v2237
    %v2333 = vunpack.c.h.b16 %v2237
    %v2334 = vunpack.c.l.b16 %v2238
    %v2335 = vpack.c.b16 %v2290, %v2287
    %v2336 = vpack.c.b16 %v2291, %v2288
    %v2337 = vpack.c.b16 %v2292, %v2289
    %v2338 = vpack.c.b16 %v2296, %v2293
    %v2339 = vpack.c.b16 %v2297, %v2294
    %v2340 = vpack.c.b16 %v2298, %v2295
    %v2341 = vpack.c.b16 %v2302, %v2299
    %v2342 = vpack.c.b16 %v2303, %v2300
    %v2343 = vpack.c.b16 %v2304, %v2301
    %v2344 = vpack.c.b16 %v2308, %v2305
    %v2345 = vpack.c.b16 %v2309, %v2306
    %v2346 = vpack.c.b16 %v2310, %v2307
    %v2347 = vpack.c.b16 %v2314, %v2311
    %v2348 = vpack.c.b16 %v2315, %v2312
    %v2349 = vpack.c.b16 %v2316, %v2313
    %v2350 = vpack.c.b16 %v2320, %v2317
    %v2351 = vpack.c.b16 %v2321, %v2318
    %v2352 = vpack.c.b16 %v2322, %v2319
    %v2353 = vpack.c.b16 %v2326, %v2323
    %v2354 = vpack.c.b16 %v2327, %v2324
    %v2355 = vpack.c.b16 %v2328, %v2325
    %v2356 = vpack.c.b16 %v2332, %v2329
    %v2357 = vpack.c.b16 %v2333, %v2330
    %v2358 = vpack.c.b16 %v2334, %v2331
    %2359 = vrot.lane.b32.xlu0 %v2335, 127
    %v2360 = vpop.permute.xlu0 %2359
    %2361 = vrot.lane.b32.xlu0 %v2336, 127
    %v2362 = vpop.permute.xlu0 %2361
    %2363 = vrot.lane.b32.xlu0 %v2337, 127
    %v2364 = vpop.permute.xlu0 %2363
    %2365 = vrot.lane.b32.xlu0 %v2338, 127
    %v2366 = vpop.permute.xlu0 %2365
    %2367 = vrot.lane.b32.xlu0 %v2339, 127
    %v2368 = vpop.permute.xlu0 %2367
    %2369 = vrot.lane.b32.xlu0 %v2340, 127
    %v2370 = vpop.permute.xlu0 %2369
    %2371 = vrot.lane.b32.xlu0 %v2341, 127
    %v2372 = vpop.permute.xlu0 %2371
    %2373 = vrot.lane.b32.xlu0 %v2342, 127
    %v2374 = vpop.permute.xlu0 %2373
    %2375 = vrot.lane.b32.xlu0 %v2343, 127
    %v2376 = vpop.permute.xlu0 %2375
    %2377 = vrot.lane.b32.xlu0 %v2344, 127
    %v2378 = vpop.permute.xlu0 %2377
    %2379 = vrot.lane.b32.xlu0 %v2345, 127
    %v2380 = vpop.permute.xlu0 %2379
    %2381 = vrot.lane.b32.xlu0 %v2346, 127
    %v2382 = vpop.permute.xlu0 %2381
    %2383 = vrot.lane.b32.xlu0 %v2347, 127
    %v2384 = vpop.permute.xlu0 %2383
    %2385 = vrot.lane.b32.xlu0 %v2348, 127
    %v2386 = vpop.permute.xlu0 %2385
    %2387 = vrot.lane.b32.xlu0 %v2349, 127
    %v2388 = vpop.permute.xlu0 %2387
    %2389 = vrot.lane.b32.xlu0 %v2350, 127
    %v2390 = vpop.permute.xlu0 %2389
    %2391 = vrot.lane.b32.xlu0 %v2351, 127
    %v2392 = vpop.permute.xlu0 %2391
    %2393 = vrot.lane.b32.xlu0 %v2352, 127
    %v2394 = vpop.permute.xlu0 %2393
    %2395 = vrot.lane.b32.xlu0 %v2353, 127
    %v2396 = vpop.permute.xlu0 %2395
    %2397 = vrot.lane.b32.xlu0 %v2354, 127
    %v2398 = vpop.permute.xlu0 %2397
    %2399 = vrot.lane.b32.xlu0 %v2355, 127
    %v2400 = vpop.permute.xlu0 %2399
    %2401 = vrot.lane.b32.xlu0 %v2356, 127
    %v2402 = vpop.permute.xlu0 %2401
    %2403 = vrot.lane.b32.xlu0 %v2357, 127
    %v2404 = vpop.permute.xlu0 %2403
    %2405 = vrot.lane.b32.xlu0 %v2358, 127
    %v2406 = vpop.permute.xlu0 %2405
    %v2407 = vsel %vm237, %v2360, %v2362
    %v2408 = vsel %vm237, %v2362, %v2364
    %v2409 = vsel %vm237, %v2366, %v2368
    %v2410 = vsel %vm237, %v2368, %v2370
    %v2411 = vsel %vm237, %v2372, %v2374
    %v2412 = vsel %vm237, %v2374, %v2376
    %v2413 = vsel %vm237, %v2378, %v2380
    %v2414 = vsel %vm237, %v2380, %v2382
    %v2415 = vsel %vm237, %v2384, %v2386
    %v2416 = vsel %vm237, %v2386, %v2388
    %v2417 = vsel %vm237, %v2390, %v2392
    %v2418 = vsel %vm237, %v2392, %v2394
    %v2419 = vsel %vm237, %v2396, %v2398
    %v2420 = vsel %vm237, %v2398, %v2400
    %v2421 = vsel %vm237, %v2402, %v2404
    %v2422 = vsel %vm237, %v2404, %v2406
    %2447 = vmatprep.subr.bf16.mxu0 %v2408
    %2448 = vmatpush1.bf16.msra.mxu0 %v2407
    %2449 = vmatprep.subr.bf16.mxu0 %v2410
    %2450 = vmatpush1.bf16.msra.mxu0 %v2409
    %2451 = vmatprep.subr.bf16.mxu0 %v2412
    %2452 = vmatpush1.bf16.msra.mxu0 %v2411
    %2453 = vmatprep.subr.bf16.mxu0 %v2414
    %2454 = vmatpush1.bf16.msra.mxu0 %v2413
    %2455 = vmatprep.subr.bf16.mxu0 %v2416
    %2456 = vmatpush1.bf16.msra.mxu0 %v2415
    %2457 = vmatprep.subr.bf16.mxu0 %v2418
    %2458 = vmatpush1.bf16.msra.mxu0 %v2417
    %2459 = vmatprep.subr.bf16.mxu0 %v2420
    %2460 = vmatpush1.bf16.msra.mxu0 %v2419
    %2461 = vmatprep.subr.bf16.mxu0 %v2422
    %2462 = vmatpush1.bf16.msra.mxu0 %v2421
    %2463 = vmatprep.subr.bf16.mxu0 0
    %2464 = vmatpush1.bf16.msra.mxu0 0
    %2465 = vmatprep.subr.bf16.mxu0 0
    %2466 = vmatpush1.bf16.msra.mxu0 0
    %2467 = vmatprep.subr.bf16.mxu0 0
    %2468 = vmatpush1.bf16.msra.mxu0 0
    %2469 = vmatprep.subr.bf16.mxu0 0
    %2470 = vmatpush1.bf16.msra.mxu0 0
    %2471 = vmatprep.subr.bf16.mxu0 0
    %2472 = vmatpush1.bf16.msra.mxu0 0
    %2473 = vmatprep.subr.bf16.mxu0 0
    %2474 = vmatpush1.bf16.msra.mxu0 0
    %2475 = vmatprep.subr.bf16.mxu0 0
    %2476 = vmatpush1.bf16.msra.mxu0 0
    %2477 = vmatprep.subr.bf16.mxu0 0
    %2478 = vmatpush1.bf16.msra.mxu0 0
    %2479 = vmatprep.mubr.bf16.mxu0 0
    %2480 = vmatmul.mubr.bf16.gmra.mrb[0].mxu0 %v2251
    %v2481 = vpop.f32.mrb[0].mxu0
    %v2482 = vadd.f32 0.0, %v2481
    %v2483 = vpop.f32.mrb[0].mxu0
    %v2484 = vadd.f32 0.0, %v2483
    %v2485 = vpop.f32.mrb[0].mxu0
    %v2486 = vadd.f32 0.0, %v2485
    %v2487 = vpop.f32.mrb[0].mxu0
    %v2488 = vadd.f32 0.0, %v2487
    %2489 = vmatprep.mubr.bf16.mxu0 0
    %2490 = vmatmul.mubr.bf16.gmra.mrb[0].mxu0 %v2252
    %v2491 = vpop.f32.mrb[0].mxu0
    %v2492 = vadd.f32 0.0, %v2491
    %v2493 = vpop.f32.mrb[0].mxu0
    %v2494 = vadd.f32 0.0, %v2493
    %v2495 = vpop.f32.mrb[0].mxu0
    %v2496 = vadd.f32 0.0, %v2495
    %v2497 = vpop.f32.mrb[0].mxu0
    %v2498 = vadd.f32 0.0, %v2497
    %2499 = vdwg.mxu0
    %2500 = vmatprep.subr.bf16.mxu0 0
    %2501 = vmatpush1.bf16.msra.mxu0 %v2364
    %2502 = vmatprep.subr.bf16.mxu0 0
    %2503 = vmatpush1.bf16.msra.mxu0 %v2370
    %2504 = vmatprep.subr.bf16.mxu0 0
    %2505 = vmatpush1.bf16.msra.mxu0 %v2376
    %2506 = vmatprep.subr.bf16.mxu0 0
    %2507 = vmatpush1.bf16.msra.mxu0 %v2382
    %2508 = vmatprep.subr.bf16.mxu0 0
    %2509 = vmatpush1.bf16.msra.mxu0 %v2388
    %2510 = vmatprep.subr.bf16.mxu0 0
    %2511 = vmatpush1.bf16.msra.mxu0 %v2394
    %2512 = vmatprep.subr.bf16.mxu0 0
    %2513 = vmatpush1.bf16.msra.mxu0 %v2400
    %2514 = vmatprep.subr.bf16.mxu0 0
    %2515 = vmatpush1.bf16.msra.mxu0 %v2406
    %2516 = vmatprep.subr.bf16.mxu0 0
    %2517 = vmatpush1.bf16.msra.mxu0 0
    %2518 = vmatprep.subr.bf16.mxu0 0
    %2519 = vmatpush1.bf16.msra.mxu0 0
    %2520 = vmatprep.subr.bf16.mxu0 0
    %2521 = vmatpush1.bf16.msra.mxu0 0
    %2522 = vmatprep.subr.bf16.mxu0 0
    %2523 = vmatpush1.bf16.msra.mxu0 0
    %2524 = vmatprep.subr.bf16.mxu0 0
    %2525 = vmatpush1.bf16.msra.mxu0 0
    %2526 = vmatprep.subr.bf16.mxu0 0
    %2527 = vmatpush1.bf16.msra.mxu0 0
    %2528 = vmatprep.subr.bf16.mxu0 0
    %2529 = vmatpush1.bf16.msra.mxu0 0
    %2530 = vmatprep.subr.bf16.mxu0 0
    %2531 = vmatpush1.bf16.msra.mxu0 0
    %2532 = vmatprep.mubr.bf16.mxu0 0
    %2533 = vmatmul.mubr.bf16.gmra.mrb[0].mxu0 %v2251
    %v2534 = vpop.f32.mrb[0].mxu0
    %v2535 = vadd.f32 0.0, %v2534
    %v2536 = vpop.f32.mrb[0].mxu0
    %v2537 = vpop.f32.mrb[0].mxu0
    %v2538 = vadd.f32 0.0, %v2537
    %v2539 = vpop.f32.mrb[0].mxu0
    %2540 = vmatprep.mubr.bf16.mxu0 0
    %2541 = vmatmul.mubr.bf16.gmra.mrb[0].mxu0 %v2252
    %v2542 = vpop.f32.mrb[0].mxu0
    %v2543 = vadd.f32 0.0, %v2542
    %v2544 = vpop.f32.mrb[0].mxu0
    %v2545 = vpop.f32.mrb[0].mxu0
    %v2546 = vadd.f32 0.0, %v2545
    %v2547 = vpop.f32.mrb[0].mxu0
    %2548 = vdwg.mxu0
    %v2553 = vunpack.c.l.b16 %v2202
    %v2554 = vunpack.c.l.b16 %v2203
    %v2555 = vunpack.c.l.b16 %v2204
    %v2556 = vunpack.c.l.b16 %v2205
    %v2557 = vpack.c.b16 %v2554, %v2553
    %v2558 = vpack.c.b16 %v2556, %v2555
    %2585 = vmatprep.subr.bf16.mxu0 %v2336
    %2586 = vmatpush1.bf16.msra.mxu0 %v2335
    %2587 = vmatprep.subr.bf16.mxu0 %v2339
    %2588 = vmatpush1.bf16.msra.mxu0 %v2338
    %2589 = vmatprep.subr.bf16.mxu0 %v2342
    %2590 = vmatpush1.bf16.msra.mxu0 %v2341
    %2591 = vmatprep.subr.bf16.mxu0 %v2345
    %2592 = vmatpush1.bf16.msra.mxu0 %v2344
    %2593 = vmatprep.subr.bf16.mxu0 %v2348
    %2594 = vmatpush1.bf16.msra.mxu0 %v2347
    %2595 = vmatprep.subr.bf16.mxu0 %v2351
    %2596 = vmatpush1.bf16.msra.mxu0 %v2350
    %2597 = vmatprep.subr.bf16.mxu0 %v2354
    %2598 = vmatpush1.bf16.msra.mxu0 %v2353
    %2599 = vmatprep.subr.bf16.mxu0 %v2357
    %2600 = vmatpush1.bf16.msra.mxu0 %v2356
    %2601 = vmatprep.subr.bf16.mxu0 0
    %2602 = vmatpush1.bf16.msra.mxu0 0
    %2603 = vmatprep.subr.bf16.mxu0 0
    %2604 = vmatpush1.bf16.msra.mxu0 0
    %2605 = vmatprep.subr.bf16.mxu0 0
    %2606 = vmatpush1.bf16.msra.mxu0 0
    %2607 = vmatprep.subr.bf16.mxu0 0
    %2608 = vmatpush1.bf16.msra.mxu0 0
    %2609 = vmatprep.subr.bf16.mxu0 0
    %2610 = vmatpush1.bf16.msra.mxu0 0
    %2611 = vmatprep.subr.bf16.mxu0 0
    %2612 = vmatpush1.bf16.msra.mxu0 0
    %2613 = vmatprep.subr.bf16.mxu0 0
    %2614 = vmatpush1.bf16.msra.mxu0 0
    %2615 = vmatprep.subr.bf16.mxu0 0
    %2616 = vmatpush1.bf16.msra.mxu0 0
    %2617 = vmatprep.mubr.bf16.mxu0 0
    %2618 = vmatmul.mubr.bf16.gmra.mrb[0].mxu0 %v2557
    %v2619 = vpop.f32.mrb[0].mxu0
    %v2620 = vadd.f32 %v2482, %v2619
    %v2621 = vpop.f32.mrb[0].mxu0
    %v2622 = vadd.f32 %v2484, %v2621
    %v2623 = vpop.f32.mrb[0].mxu0
    %v2624 = vadd.f32 %v2486, %v2623
    %v2625 = vpop.f32.mrb[0].mxu0
    %v2626 = vadd.f32 %v2488, %v2625
    %2627 = vmatprep.mubr.bf16.mxu0 0
    %2628 = vmatmul.mubr.bf16.gmra.mrb[0].mxu0 %v2558
    %v2629 = vpop.f32.mrb[0].mxu0
    %v2630 = vadd.f32 %v2492, %v2629
    %v2631 = vpop.f32.mrb[0].mxu0
    %v2632 = vadd.f32 %v2494, %v2631
    %v2633 = vpop.f32.mrb[0].mxu0
    %v2634 = vadd.f32 %v2496, %v2633
    %v2635 = vpop.f32.mrb[0].mxu0
    %v2636 = vadd.f32 %v2498, %v2635
    %2637 = vdwg.mxu0
    %2638 = vmatprep.subr.bf16.mxu0 0
    %2639 = vmatpush1.bf16.msra.mxu0 %v2337
    %2640 = vmatprep.subr.bf16.mxu0 0
    %2641 = vmatpush1.bf16.msra.mxu0 %v2340
    %2642 = vmatprep.subr.bf16.mxu0 0
    %2643 = vmatpush1.bf16.msra.mxu0 %v2343
    %2644 = vmatprep.subr.bf16.mxu0 0
    %2645 = vmatpush1.bf16.msra.mxu0 %v2346
    %2646 = vmatprep.subr.bf16.mxu0 0
    %2647 = vmatpush1.bf16.msra.mxu0 %v2349
    %2648 = vmatprep.subr.bf16.mxu0 0
    %2649 = vmatpush1.bf16.msra.mxu0 %v2352
    %2650 = vmatprep.subr.bf16.mxu0 0
    %2651 = vmatpush1.bf16.msra.mxu0 %v2355
    %2652 = vmatprep.subr.bf16.mxu0 0
    %2653 = vmatpush1.bf16.msra.mxu0 %v2358
    %2654 = vmatprep.subr.bf16.mxu0 0
    %2655 = vmatpush1.bf16.msra.mxu0 0
    %2656 = vmatprep.subr.bf16.mxu0 0
    %2657 = vmatpush1.bf16.msra.mxu0 0
    %2658 = vmatprep.subr.bf16.mxu0 0
    %2659 = vmatpush1.bf16.msra.mxu0 0
    %2660 = vmatprep.subr.bf16.mxu0 0
    %2661 = vmatpush1.bf16.msra.mxu0 0
    %2662 = vmatprep.subr.bf16.mxu0 0
    %2663 = vmatpush1.bf16.msra.mxu0 0
    %2664 = vmatprep.subr.bf16.mxu0 0
    %2665 = vmatpush1.bf16.msra.mxu0 0
    %2666 = vmatprep.subr.bf16.mxu0 0
    %2667 = vmatpush1.bf16.msra.mxu0 0
    %2668 = vmatprep.subr.bf16.mxu0 0
    %2669 = vmatpush1.bf16.msra.mxu0 0
    %2670 = vmatprep.mubr.bf16.mxu0 0
    %2671 = vmatmul.mubr.bf16.gmra.mrb[0].mxu0 %v2557
    %v2672 = vpop.f32.mrb[0].mxu0
    %v2673 = vadd.f32 %v2535, %v2672
    %v2674 = vpop.f32.mrb[0].mxu0
    %v2675 = vpop.f32.mrb[0].mxu0
    %v2676 = vadd.f32 %v2538, %v2675
    %v2677 = vpop.f32.mrb[0].mxu0
    %2678 = vmatprep.mubr.bf16.mxu0 0
    %2679 = vmatmul.mubr.bf16.gmra.mrb[0].mxu0 %v2558
    %v2680 = vpop.f32.mrb[0].mxu0
    %v2681 = vadd.f32 %v2543, %v2680
    %v2682 = vpop.f32.mrb[0].mxu0
    %v2683 = vpop.f32.mrb[0].mxu0
    %v2684 = vadd.f32 %v2546, %v2683
    %v2685 = vpop.f32.mrb[0].mxu0
    %2686 = vdwg.mxu0
    %v2687 = vld [vmem:[%s518] sm:$0xf]
    %v2688 = vld [vmem:[%s518 + $0x4] sm:$0xf]
    %v2689 = vld [vmem:[%s518 + $0x8] sm:$0xf]
    %v2690 = vld [vmem:[%s518 + $0xc] sm:$0xf]
    %v2695 = vunpack.c.l.b16 %v2687
    %v2696 = vunpack.c.l.b16 %v2688
    %v2697 = vunpack.c.l.b16 %v2689
    %v2698 = vunpack.c.l.b16 %v2690
    %v2699 = vpack.c.b16 %v2696, %v2695
    %v2700 = vpack.c.b16 %v2698, %v2697
    %2703 = vrot.lane.b32.xlu0 %v2335, 126
    %v2704 = vpop.permute.xlu0 %2703
    %2705 = vrot.lane.b32.xlu0 %v2336, 126
    %v2706 = vpop.permute.xlu0 %2705
    %2707 = vrot.lane.b32.xlu0 %v2337, 126
    %v2708 = vpop.permute.xlu0 %2707
    %2709 = vrot.lane.b32.xlu0 %v2338, 126
    %v2710 = vpop.permute.xlu0 %2709
    %2711 = vrot.lane.b32.xlu0 %v2339, 126
    %v2712 = vpop.permute.xlu0 %2711
    %2713 = vrot.lane.b32.xlu0 %v2340, 126
    %v2714 = vpop.permute.xlu0 %2713
    %2715 = vrot.lane.b32.xlu0 %v2341, 126
    %v2716 = vpop.permute.xlu0 %2715
    %2717 = vrot.lane.b32.xlu0 %v2342, 126
    %v2718 = vpop.permute.xlu0 %2717
    %2719 = vrot.lane.b32.xlu0 %v2343, 126
    %v2720 = vpop.permute.xlu0 %2719
    %2721 = vrot.lane.b32.xlu0 %v2344, 126
    %v2722 = vpop.permute.xlu0 %2721
    %2723 = vrot.lane.b32.xlu0 %v2345, 126
    %v2724 = vpop.permute.xlu0 %2723
    %2725 = vrot.lane.b32.xlu0 %v2346, 126
    %v2726 = vpop.permute.xlu0 %2725
    %2727 = vrot.lane.b32.xlu0 %v2347, 126
    %v2728 = vpop.permute.xlu0 %2727
    %2729 = vrot.lane.b32.xlu0 %v2348, 126
    %v2730 = vpop.permute.xlu0 %2729
    %2731 = vrot.lane.b32.xlu0 %v2349, 126
    %v2732 = vpop.permute.xlu0 %2731
    %2733 = vrot.lane.b32.xlu0 %v2350, 126
    %v2734 = vpop.permute.xlu0 %2733
    %2735 = vrot.lane.b32.xlu0 %v2351, 126
    %v2736 = vpop.permute.xlu0 %2735
    %2737 = vrot.lane.b32.xlu0 %v2352, 126
    %v2738 = vpop.permute.xlu0 %2737
    %2739 = vrot.lane.b32.xlu0 %v2353, 126
    %v2740 = vpop.permute.xlu0 %2739
    %2741 = vrot.lane.b32.xlu0 %v2354, 126
    %v2742 = vpop.permute.xlu0 %2741
    %2743 = vrot.lane.b32.xlu0 %v2355, 126
    %v2744 = vpop.permute.xlu0 %2743
    %2745 = vrot.lane.b32.xlu0 %v2356, 126
    %v2746 = vpop.permute.xlu0 %2745
    %2747 = vrot.lane.b32.xlu0 %v2357, 126
    %v2748 = vpop.permute.xlu0 %2747
    %2749 = vrot.lane.b32.xlu0 %v2358, 126
    %v2750 = vpop.permute.xlu0 %2749
    %v2751 = vsel %vm583, %v2704, %v2706
    %v2752 = vsel %vm583, %v2706, %v2708
    %v2753 = vsel %vm583, %v2710, %v2712
    %v2754 = vsel %vm583, %v2712, %v2714
    %v2755 = vsel %vm583, %v2716, %v2718
    %v2756 = vsel %vm583, %v2718, %v2720
    %v2757 = vsel %vm583, %v2722, %v2724
    %v2758 = vsel %vm583, %v2724, %v2726
    %v2759 = vsel %vm583, %v2728, %v2730
    %v2760 = vsel %vm583, %v2730, %v2732
    %v2761 = vsel %vm583, %v2734, %v2736
    %v2762 = vsel %vm583, %v2736, %v2738
    %v2763 = vsel %vm583, %v2740, %v2742
    %v2764 = vsel %vm583, %v2742, %v2744
    %v2765 = vsel %vm583, %v2746, %v2748
    %v2766 = vsel %vm583, %v2748, %v2750
    %2791 = vmatprep.subr.bf16.mxu0 %v2752
    %2792 = vmatpush1.bf16.msra.mxu0 %v2751
    %2793 = vmatprep.subr.bf16.mxu0 %v2754
    %2794 = vmatpush1.bf16.msra.mxu0 %v2753
    %2795 = vmatprep.subr.bf16.mxu0 %v2756
    %2796 = vmatpush1.bf16.msra.mxu0 %v2755
    %2797 = vmatprep.subr.bf16.mxu0 %v2758
    %2798 = vmatpush1.bf16.msra.mxu0 %v2757
    %2799 = vmatprep.subr.bf16.mxu0 %v2760
    %2800 = vmatpush1.bf16.msra.mxu0 %v2759
    %2801 = vmatprep.subr.bf16.mxu0 %v2762
    %2802 = vmatpush1.bf16.msra.mxu0 %v2761
    %2803 = vmatprep.subr.bf16.mxu0 %v2764
    %2804 = vmatpush1.bf16.msra.mxu0 %v2763
    %2805 = vmatprep.subr.bf16.mxu0 %v2766
    %2806 = vmatpush1.bf16.msra.mxu0 %v2765
    %2807 = vmatprep.subr.bf16.mxu0 0
    %2808 = vmatpush1.bf16.msra.mxu0 0
    %2809 = vmatprep.subr.bf16.mxu0 0
    %2810 = vmatpush1.bf16.msra.mxu0 0
    %2811 = vmatprep.subr.bf16.mxu0 0
    %2812 = vmatpush1.bf16.msra.mxu0 0
    %2813 = vmatprep.subr.bf16.mxu0 0
    %2814 = vmatpush1.bf16.msra.mxu0 0
    %2815 = vmatprep.subr.bf16.mxu0 0
    %2816 = vmatpush1.bf16.msra.mxu0 0
    %2817 = vmatprep.subr.bf16.mxu0 0
    %2818 = vmatpush1.bf16.msra.mxu0 0
    %2819 = vmatprep.subr.bf16.mxu0 0
    %2820 = vmatpush1.bf16.msra.mxu0 0
    %2821 = vmatprep.subr.bf16.mxu0 0
    %2822 = vmatpush1.bf16.msra.mxu0 0
    %2823 = vmatprep.mubr.bf16.mxu0 0
    %2824 = vmatmul.mubr.bf16.gmra.mrb[0].mxu0 %v2699
    %v2825 = vpop.f32.mrb[0].mxu0
    %v2826 = vadd.f32 0.0, %v2825
    %v2827 = vpop.f32.mrb[0].mxu0
    %v2828 = vadd.f32 0.0, %v2827
    %v2829 = vpop.f32.mrb[0].mxu0
    %v2830 = vadd.f32 0.0, %v2829
    %v2831 = vpop.f32.mrb[0].mxu0
    %v2832 = vadd.f32 0.0, %v2831
    %2833 = vmatprep.mubr.bf16.mxu0 0
    %2834 = vmatmul.mubr.bf16.gmra.mrb[0].mxu0 %v2700
    %v2835 = vpop.f32.mrb[0].mxu0
    %v2836 = vadd.f32 0.0, %v2835
    %v2837 = vpop.f32.mrb[0].mxu0
    %v2838 = vadd.f32 0.0, %v2837
    %v2839 = vpop.f32.mrb[0].mxu0
    %v2840 = vadd.f32 0.0, %v2839
    %v2841 = vpop.f32.mrb[0].mxu0
    %v2842 = vadd.f32 0.0, %v2841
    %2843 = vdwg.mxu0
    %2844 = vmatprep.subr.bf16.mxu0 0
    %2845 = vmatpush1.bf16.msra.mxu0 %v2708
    %2846 = vmatprep.subr.bf16.mxu0 0
    %2847 = vmatpush1.bf16.msra.mxu0 %v2714
    %2848 = vmatprep.subr.bf16.mxu0 0
    %2849 = vmatpush1.bf16.msra.mxu0 %v2720
    %2850 = vmatprep.subr.bf16.mxu0 0
    %2851 = vmatpush1.bf16.msra.mxu0 %v2726
    %2852 = vmatprep.subr.bf16.mxu0 0
    %2853 = vmatpush1.bf16.msra.mxu0 %v2732
    %2854 = vmatprep.subr.bf16.mxu0 0
    %2855 = vmatpush1.bf16.msra.mxu0 %v2738
    %2856 = vmatprep.subr.bf16.mxu0 0
    %2857 = vmatpush1.bf16.msra.mxu0 %v2744
    %2858 = vmatprep.subr.bf16.mxu0 0
    %2859 = vmatpush1.bf16.msra.mxu0 %v2750
    %2860 = vmatprep.subr.bf16.mxu0 0
    %2861 = vmatpush1.bf16.msra.mxu0 0
    %2862 = vmatprep.subr.bf16.mxu0 0
    %2863 = vmatpush1.bf16.msra.mxu0 0
    %2864 = vmatprep.subr.bf16.mxu0 0
    %2865 = vmatpush1.bf16.msra.mxu0 0
    %2866 = vmatprep.subr.bf16.mxu0 0
    %2867 = vmatpush1.bf16.msra.mxu0 0
    %2868 = vmatprep.subr.bf16.mxu0 0
    %2869 = vmatpush1.bf16.msra.mxu0 0
    %2870 = vmatprep.subr.bf16.mxu0 0
    %2871 = vmatpush1.bf16.msra.mxu0 0
    %2872 = vmatprep.subr.bf16.mxu0 0
    %2873 = vmatpush1.bf16.msra.mxu0 0
    %2874 = vmatprep.subr.bf16.mxu0 0
    %2875 = vmatpush1.bf16.msra.mxu0 0
    %2876 = vmatprep.mubr.bf16.mxu0 0
    %2877 = vmatmul.mubr.bf16.gmra.mrb[0].mxu0 %v2699
    %v2878 = vpop.f32.mrb[0].mxu0
    %v2879 = vadd.f32 0.0, %v2878
    %v2880 = vpop.f32.mrb[0].mxu0
    %v2881 = vpop.f32.mrb[0].mxu0
    %v2882 = vadd.f32 0.0, %v2881
    %v2883 = vpop.f32.mrb[0].mxu0
    %2884 = vmatprep.mubr.bf16.mxu0 0
    %2885 = vmatmul.mubr.bf16.gmra.mrb[0].mxu0 %v2700
    %v2886 = vpop.f32.mrb[0].mxu0
    %v2887 = vadd.f32 0.0, %v2886
    %v2888 = vpop.f32.mrb[0].mxu0
    %v2889 = vpop.f32.mrb[0].mxu0
    %v2890 = vadd.f32 0.0, %v2889
    %v2891 = vpop.f32.mrb[0].mxu0
    %2892 = vdwg.mxu0
    %v2893 = vadd.f32 %v2620, %v2826
    %v2894 = vadd.f32 %v2622, %v2828
    %v2895 = vadd.f32 %v2673, %v2879
    %v2896 = vadd.f32 %v2624, %v2830
    %v2897 = vadd.f32 %v2626, %v2832
    %v2898 = vadd.f32 %v2676, %v2882
    %v2899 = vadd.f32 %v2630, %v2836
    %v2900 = vadd.f32 %v2632, %v2838
    %v2901 = vadd.f32 %v2681, %v2887
    %v2902 = vadd.f32 %v2634, %v2840
    %v2903 = vadd.f32 %v2636, %v2842
    %v2904 = vadd.f32 %v2684, %v2890
    %v2905 = vld [vmem:[%s738] sm:$0xf]
    %v2906 = vld [vmem:[%s738 + $0x4] sm:$0xf]
    %v2907 = vld [vmem:[%s738 + $0x8] sm:$0xf]
    %v2908 = vld [vmem:[%s738 + $0xc] sm:$0xf]
    %v2913 = vunpack.c.l.b16 %v2905
    %v2914 = vunpack.c.l.b16 %v2906
    %v2915 = vunpack.c.l.b16 %v2907
    %v2916 = vunpack.c.l.b16 %v2908
    %v2917 = vpack.c.b16 %v2914, %v2913
    %v2918 = vpack.c.b16 %v2916, %v2915
    %2921 = vrot.lane.b32.xlu0 %v2335, 110
    %v2922 = vpop.permute.xlu0 %2921
    %2923 = vrot.lane.b32.xlu0 %v2336, 110
    %v2924 = vpop.permute.xlu0 %2923
    %2925 = vrot.lane.b32.xlu0 %v2337, 110
    %v2926 = vpop.permute.xlu0 %2925
    %2927 = vrot.lane.b32.xlu0 %v2338, 110
    %v2928 = vpop.permute.xlu0 %2927
    %2929 = vrot.lane.b32.xlu0 %v2339, 110
    %v2930 = vpop.permute.xlu0 %2929
    %2931 = vrot.lane.b32.xlu0 %v2340, 110
    %v2932 = vpop.permute.xlu0 %2931
    %2933 = vrot.lane.b32.xlu0 %v2341, 110
    %v2934 = vpop.permute.xlu0 %2933
    %2935 = vrot.lane.b32.xlu0 %v2342, 110
    %v2936 = vpop.permute.xlu0 %2935
    %2937 = vrot.lane.b32.xlu0 %v2343, 110
    %v2938 = vpop.permute.xlu0 %2937
    %2939 = vrot.lane.b32.xlu0 %v2344, 110
    %v2940 = vpop.permute.xlu0 %2939
    %2941 = vrot.lane.b32.xlu0 %v2345, 110
    %v2942 = vpop.permute.xlu0 %2941
    %2943 = vrot.lane.b32.xlu0 %v2346, 110
    %v2944 = vpop.permute.xlu0 %2943
    %2945 = vrot.lane.b32.xlu0 %v2347, 110
    %v2946 = vpop.permute.xlu0 %2945
    %2947 = vrot.lane.b32.xlu0 %v2348, 110
    %v2948 = vpop.permute.xlu0 %2947
    %2949 = vrot.lane.b32.xlu0 %v2349, 110
    %v2950 = vpop.permute.xlu0 %2949
    %2951 = vrot.lane.b32.xlu0 %v2350, 110
    %v2952 = vpop.permute.xlu0 %2951
    %2953 = vrot.lane.b32.xlu0 %v2351, 110
    %v2954 = vpop.permute.xlu0 %2953
    %2955 = vrot.lane.b32.xlu0 %v2352, 110
    %v2956 = vpop.permute.xlu0 %2955
    %2957 = vrot.lane.b32.xlu0 %v2353, 110
    %v2958 = vpop.permute.xlu0 %2957
    %2959 = vrot.lane.b32.xlu0 %v2354, 110
    %v2960 = vpop.permute.xlu0 %2959
    %2961 = vrot.lane.b32.xlu0 %v2355, 110
    %v2962 = vpop.permute.xlu0 %2961
    %2963 = vrot.lane.b32.xlu0 %v2356, 110
    %v2964 = vpop.permute.xlu0 %2963
    %2965 = vrot.lane.b32.xlu0 %v2357, 110
    %v2966 = vpop.permute.xlu0 %2965
    %2967 = vrot.lane.b32.xlu0 %v2358, 110
    %v2968 = vpop.permute.xlu0 %2967
    %v2969 = vsel %vm803, %v2922, %v2924
    %v2970 = vsel %vm803, %v2924, %v2926
    %v2971 = vsel %vm803, %v2928, %v2930
    %v2972 = vsel %vm803, %v2930, %v2932
    %v2973 = vsel %vm803, %v2934, %v2936
    %v2974 = vsel %vm803, %v2936, %v2938
    %v2975 = vsel %vm803, %v2940, %v2942
    %v2976 = vsel %vm803, %v2942, %v2944
    %v2977 = vsel %vm803, %v2946, %v2948
    %v2978 = vsel %vm803, %v2948, %v2950
    %v2979 = vsel %vm803, %v2952, %v2954
    %v2980 = vsel %vm803, %v2954, %v2956
    %v2981 = vsel %vm803, %v2958, %v2960
    %v2982 = vsel %vm803, %v2960, %v2962
    %v2983 = vsel %vm803, %v2964, %v2966
    %v2984 = vsel %vm803, %v2966, %v2968
    %3009 = vmatprep.subr.bf16.mxu0 %v2970
    %3010 = vmatpush1.bf16.msra.mxu0 %v2969
    %3011 = vmatprep.subr.bf16.mxu0 %v2972
    %3012 = vmatpush1.bf16.msra.mxu0 %v2971
    %3013 = vmatprep.subr.bf16.mxu0 %v2974
    %3014 = vmatpush1.bf16.msra.mxu0 %v2973
    %3015 = vmatprep.subr.bf16.mxu0 %v2976
    %3016 = vmatpush1.bf16.msra.mxu0 %v2975
    %3017 = vmatprep.subr.bf16.mxu0 %v2978
    %3018 = vmatpush1.bf16.msra.mxu0 %v2977
    %3019 = vmatprep.subr.bf16.mxu0 %v2980
    %3020 = vmatpush1.bf16.msra.mxu0 %v2979
    %3021 = vmatprep.subr.bf16.mxu0 %v2982
    %3022 = vmatpush1.bf16.msra.mxu0 %v2981
    %3023 = vmatprep.subr.bf16.mxu0 %v2984
    %3024 = vmatpush1.bf16.msra.mxu0 %v2983
    %3025 = vmatprep.subr.bf16.mxu0 0
    %3026 = vmatpush1.bf16.msra.mxu0 0
    %3027 = vmatprep.subr.bf16.mxu0 0
    %3028 = vmatpush1.bf16.msra.mxu0 0
    %3029 = vmatprep.subr.bf16.mxu0 0
    %3030 = vmatpush1.bf16.msra.mxu0 0
    %3031 = vmatprep.subr.bf16.mxu0 0
    %3032 = vmatpush1.bf16.msra.mxu0 0
    %3033 = vmatprep.subr.bf16.mxu0 0
    %3034 = vmatpush1.bf16.msra.mxu0 0
    %3035 = vmatprep.subr.bf16.mxu0 0
    %3036 = vmatpush1.bf16.msra.mxu0 0
    %3037 = vmatprep.subr.bf16.mxu0 0
    %3038 = vmatpush1.bf16.msra.mxu0 0
    %3039 = vmatprep.subr.bf16.mxu0 0
    %3040 = vmatpush1.bf16.msra.mxu0 0
    %3041 = vmatprep.mubr.bf16.mxu0 0
    %3042 = vmatmul.mubr.bf16.gmra.mrb[0].mxu0 %v2917
    %v3043 = vpop.f32.mrb[0].mxu0
    %v3044 = vadd.f32 0.0, %v3043
    %v3045 = vpop.f32.mrb[0].mxu0
    %v3046 = vadd.f32 0.0, %v3045
    %v3047 = vpop.f32.mrb[0].mxu0
    %v3048 = vadd.f32 0.0, %v3047
    %v3049 = vpop.f32.mrb[0].mxu0
    %v3050 = vadd.f32 0.0, %v3049
    %3051 = vmatprep.mubr.bf16.mxu0 0
    %3052 = vmatmul.mubr.bf16.gmra.mrb[0].mxu0 %v2918
    %v3053 = vpop.f32.mrb[0].mxu0
    %v3054 = vadd.f32 0.0, %v3053
    %v3055 = vpop.f32.mrb[0].mxu0
    %v3056 = vadd.f32 0.0, %v3055
    %v3057 = vpop.f32.mrb[0].mxu0
    %v3058 = vadd.f32 0.0, %v3057
    %v3059 = vpop.f32.mrb[0].mxu0
    %v3060 = vadd.f32 0.0, %v3059
    %3061 = vdwg.mxu0
    %3062 = vmatprep.subr.bf16.mxu0 0
    %3063 = vmatpush1.bf16.msra.mxu0 %v2926
    %3064 = vmatprep.subr.bf16.mxu0 0
    %3065 = vmatpush1.bf16.msra.mxu0 %v2932
    %3066 = vmatprep.subr.bf16.mxu0 0
    %3067 = vmatpush1.bf16.msra.mxu0 %v2938
    %3068 = vmatprep.subr.bf16.mxu0 0
    %3069 = vmatpush1.bf16.msra.mxu0 %v2944
    %3070 = vmatprep.subr.bf16.mxu0 0
    %3071 = vmatpush1.bf16.msra.mxu0 %v2950
    %3072 = vmatprep.subr.bf16.mxu0 0
    %3073 = vmatpush1.bf16.msra.mxu0 %v2956
    %3074 = vmatprep.subr.bf16.mxu0 0
    %3075 = vmatpush1.bf16.msra.mxu0 %v2962
    %3076 = vmatprep.subr.bf16.mxu0 0
    %3077 = vmatpush1.bf16.msra.mxu0 %v2968
    %3078 = vmatprep.subr.bf16.mxu0 0
    %3079 = vmatpush1.bf16.msra.mxu0 0
    %3080 = vmatprep.subr.bf16.mxu0 0
    %3081 = vmatpush1.bf16.msra.mxu0 0
    %3082 = vmatprep.subr.bf16.mxu0 0
    %3083 = vmatpush1.bf16.msra.mxu0 0
    %3084 = vmatprep.subr.bf16.mxu0 0
    %3085 = vmatpush1.bf16.msra.mxu0 0
    %3086 = vmatprep.subr.bf16.mxu0 0
    %3087 = vmatpush1.bf16.msra.mxu0 0
    %3088 = vmatprep.subr.bf16.mxu0 0
    %3089 = vmatpush1.bf16.msra.mxu0 0
    %3090 = vmatprep.subr.bf16.mxu0 0
    %3091 = vmatpush1.bf16.msra.mxu0 0
    %3092 = vmatprep.subr.bf16.mxu0 0
    %3093 = vmatpush1.bf16.msra.mxu0 0
    %3094 = vmatprep.mubr.bf16.mxu0 0
    %3095 = vmatmul.mubr.bf16.gmra.mrb[0].mxu0 %v2917
    %v3096 = vpop.f32.mrb[0].mxu0
    %v3097 = vadd.f32 0.0, %v3096
    %v3098 = vpop.f32.mrb[0].mxu0
    %v3099 = vpop.f32.mrb[0].mxu0
    %v3100 = vadd.f32 0.0, %v3099
    %v3101 = vpop.f32.mrb[0].mxu0
    %3102 = vmatprep.mubr.bf16.mxu0 0
    %3103 = vmatmul.mubr.bf16.gmra.mrb[0].mxu0 %v2918
    %v3104 = vpop.f32.mrb[0].mxu0
    %v3105 = vadd.f32 0.0, %v3104
    %v3106 = vpop.f32.mrb[0].mxu0
    %v3107 = vpop.f32.mrb[0].mxu0
    %v3108 = vadd.f32 0.0, %v3107
    %v3109 = vpop.f32.mrb[0].mxu0
    %3110 = vdwg.mxu0
    %v3111 = vadd.f32 %v2893, %v3044
    %v3112 = vadd.f32 %v2894, %v3046
    %v3113 = vadd.f32 %v2895, %v3097
    %v3114 = vadd.f32 %v2896, %v3048
    %v3115 = vadd.f32 %v2897, %v3050
    %v3116 = vadd.f32 %v2898, %v3100
    %v3117 = vadd.f32 %v2899, %v3054
    %v3118 = vadd.f32 %v2900, %v3056
    %v3119 = vadd.f32 %v2901, %v3105
    %v3120 = vadd.f32 %v2902, %v3058
    %v3121 = vadd.f32 %v2903, %v3060
    %v3122 = vadd.f32 %v2904, %v3108
    %v3123 = vld [vmem:[%s958] sm:$0xf]
    %v3124 = vld [vmem:[%s958 + $0x4] sm:$0xf]
    %v3125 = vld [vmem:[%s958 + $0x8] sm:$0xf]
    %v3126 = vld [vmem:[%s958 + $0xc] sm:$0xf]
    %v3131 = vunpack.c.l.b16 %v3123
    %v3132 = vunpack.c.l.b16 %v3124
    %v3133 = vunpack.c.l.b16 %v3125
    %v3134 = vunpack.c.l.b16 %v3126
    %v3135 = vpack.c.b16 %v3132, %v3131
    %v3136 = vpack.c.b16 %v3134, %v3133
    %3139 = vrot.lane.b32.xlu0 %v2335, 109
    %v3140 = vpop.permute.xlu0 %3139
    %3141 = vrot.lane.b32.xlu0 %v2336, 109
    %v3142 = vpop.permute.xlu0 %3141
    %3143 = vrot.lane.b32.xlu0 %v2337, 109
    %v3144 = vpop.permute.xlu0 %3143
    %3145 = vrot.lane.b32.xlu0 %v2338, 109
    %v3146 = vpop.permute.xlu0 %3145
    %3147 = vrot.lane.b32.xlu0 %v2339, 109
    %v3148 = vpop.permute.xlu0 %3147
    %3149 = vrot.lane.b32.xlu0 %v2340, 109
    %v3150 = vpop.permute.xlu0 %3149
    %3151 = vrot.lane.b32.xlu0 %v2341, 109
    %v3152 = vpop.permute.xlu0 %3151
    %3153 = vrot.lane.b32.xlu0 %v2342, 109
    %v3154 = vpop.permute.xlu0 %3153
    %3155 = vrot.lane.b32.xlu0 %v2343, 109
    %v3156 = vpop.permute.xlu0 %3155
    %3157 = vrot.lane.b32.xlu0 %v2344, 109
    %v3158 = vpop.permute.xlu0 %3157
    %3159 = vrot.lane.b32.xlu0 %v2345, 109
    %v3160 = vpop.permute.xlu0 %3159
    %3161 = vrot.lane.b32.xlu0 %v2346, 109
    %v3162 = vpop.permute.xlu0 %3161
    %3163 = vrot.lane.b32.xlu0 %v2347, 109
    %v3164 = vpop.permute.xlu0 %3163
    %3165 = vrot.lane.b32.xlu0 %v2348, 109
    %v3166 = vpop.permute.xlu0 %3165
    %3167 = vrot.lane.b32.xlu0 %v2349, 109
    %v3168 = vpop.permute.xlu0 %3167
    %3169 = vrot.lane.b32.xlu0 %v2350, 109
    %v3170 = vpop.permute.xlu0 %3169
    %3171 = vrot.lane.b32.xlu0 %v2351, 109
    %v3172 = vpop.permute.xlu0 %3171
    %3173 = vrot.lane.b32.xlu0 %v2352, 109
    %v3174 = vpop.permute.xlu0 %3173
    %3175 = vrot.lane.b32.xlu0 %v2353, 109
    %v3176 = vpop.permute.xlu0 %3175
    %3177 = vrot.lane.b32.xlu0 %v2354, 109
    %v3178 = vpop.permute.xlu0 %3177
    %3179 = vrot.lane.b32.xlu0 %v2355, 109
    %v3180 = vpop.permute.xlu0 %3179
    %3181 = vrot.lane.b32.xlu0 %v2356, 109
    %v3182 = vpop.permute.xlu0 %3181
    %3183 = vrot.lane.b32.xlu0 %v2357, 109
    %v3184 = vpop.permute.xlu0 %3183
    %3185 = vrot.lane.b32.xlu0 %v2358, 109
    %v3186 = vpop.permute.xlu0 %3185
    %v3187 = vsel %vm1023, %v3140, %v3142
    %v3188 = vsel %vm1023, %v3142, %v3144
    %v3189 = vsel %vm1023, %v3146, %v3148
    %v3190 = vsel %vm1023, %v3148, %v3150
    %v3191 = vsel %vm1023, %v3152, %v3154
    %v3192 = vsel %vm1023, %v3154, %v3156
    %v3193 = vsel %vm1023, %v3158, %v3160
    %v3194 = vsel %vm1023, %v3160, %v3162
    %v3195 = vsel %vm1023, %v3164, %v3166
    %v3196 = vsel %vm1023, %v3166, %v3168
    %v3197 = vsel %vm1023, %v3170, %v3172
    %v3198 = vsel %vm1023, %v3172, %v3174
    %v3199 = vsel %vm1023, %v3176, %v3178
    %v3200 = vsel %vm1023, %v3178, %v3180
    %v3201 = vsel %vm1023, %v3182, %v3184
    %v3202 = vsel %vm1023, %v3184, %v3186
    %3227 = vmatprep.subr.bf16.mxu0 %v3188
    %3228 = vmatpush1.bf16.msra.mxu0 %v3187
    %3229 = vmatprep.subr.bf16.mxu0 %v3190
    %3230 = vmatpush1.bf16.msra.mxu0 %v3189
    %3231 = vmatprep.subr.bf16.mxu0 %v3192
    %3232 = vmatpush1.bf16.msra.mxu0 %v3191
    %3233 = vmatprep.subr.bf16.mxu0 %v3194
    %3234 = vmatpush1.bf16.msra.mxu0 %v3193
    %3235 = vmatprep.subr.bf16.mxu0 %v3196
    %3236 = vmatpush1.bf16.msra.mxu0 %v3195
    %3237 = vmatprep.subr.bf16.mxu0 %v3198
    %3238 = vmatpush1.bf16.msra.mxu0 %v3197
    %3239 = vmatprep.subr.bf16.mxu0 %v3200
    %3240 = vmatpush1.bf16.msra.mxu0 %v3199
    %3241 = vmatprep.subr.bf16.mxu0 %v3202
    %3242 = vmatpush1.bf16.msra.mxu0 %v3201
    %3243 = vmatprep.subr.bf16.mxu0 0
    %3244 = vmatpush1.bf16.msra.mxu0 0
    %3245 = vmatprep.subr.bf16.mxu0 0
    %3246 = vmatpush1.bf16.msra.mxu0 0
    %3247 = vmatprep.subr.bf16.mxu0 0
    %3248 = vmatpush1.bf16.msra.mxu0 0
    %3249 = vmatprep.subr.bf16.mxu0 0
    %3250 = vmatpush1.bf16.msra.mxu0 0
    %3251 = vmatprep.subr.bf16.mxu0 0
    %3252 = vmatpush1.bf16.msra.mxu0 0
    %3253 = vmatprep.subr.bf16.mxu0 0
    %3254 = vmatpush1.bf16.msra.mxu0 0
    %3255 = vmatprep.subr.bf16.mxu0 0
    %3256 = vmatpush1.bf16.msra.mxu0 0
    %3257 = vmatprep.subr.bf16.mxu0 0
    %3258 = vmatpush1.bf16.msra.mxu0 0
    %3259 = vmatprep.mubr.bf16.mxu0 0
    %3260 = vmatmul.mubr.bf16.gmra.mrb[0].mxu0 %v3135
    %v3261 = vpop.f32.mrb[0].mxu0
    %v3262 = vadd.f32 0.0, %v3261
    %v3263 = vpop.f32.mrb[0].mxu0
    %v3264 = vadd.f32 0.0, %v3263
    %v3265 = vpop.f32.mrb[0].mxu0
    %v3266 = vadd.f32 0.0, %v3265
    %v3267 = vpop.f32.mrb[0].mxu0
    %v3268 = vadd.f32 0.0, %v3267
    %3269 = vmatprep.mubr.bf16.mxu0 0
    %3270 = vmatmul.mubr.bf16.gmra.mrb[0].mxu0 %v3136
    %v3271 = vpop.f32.mrb[0].mxu0
    %v3272 = vadd.f32 0.0, %v3271
    %v3273 = vpop.f32.mrb[0].mxu0
    %v3274 = vadd.f32 0.0, %v3273
    %v3275 = vpop.f32.mrb[0].mxu0
    %v3276 = vadd.f32 0.0, %v3275
    %v3277 = vpop.f32.mrb[0].mxu0
    %v3278 = vadd.f32 0.0, %v3277
    %3279 = vdwg.mxu0
    %3280 = vmatprep.subr.bf16.mxu0 0
    %3281 = vmatpush1.bf16.msra.mxu0 %v3144
    %3282 = vmatprep.subr.bf16.mxu0 0
    %3283 = vmatpush1.bf16.msra.mxu0 %v3150
    %3284 = vmatprep.subr.bf16.mxu0 0
    %3285 = vmatpush1.bf16.msra.mxu0 %v3156
    %3286 = vmatprep.subr.bf16.mxu0 0
    %3287 = vmatpush1.bf16.msra.mxu0 %v3162
    %3288 = vmatprep.subr.bf16.mxu0 0
    %3289 = vmatpush1.bf16.msra.mxu0 %v3168
    %3290 = vmatprep.subr.bf16.mxu0 0
    %3291 = vmatpush1.bf16.msra.mxu0 %v3174
    %3292 = vmatprep.subr.bf16.mxu0 0
    %3293 = vmatpush1.bf16.msra.mxu0 %v3180
    %3294 = vmatprep.subr.bf16.mxu0 0
    %3295 = vmatpush1.bf16.msra.mxu0 %v3186
    %3296 = vmatprep.subr.bf16.mxu0 0
    %3297 = vmatpush1.bf16.msra.mxu0 0
    %3298 = vmatprep.subr.bf16.mxu0 0
    %3299 = vmatpush1.bf16.msra.mxu0 0
    %3300 = vmatprep.subr.bf16.mxu0 0
    %3301 = vmatpush1.bf16.msra.mxu0 0
    %3302 = vmatprep.subr.bf16.mxu0 0
    %3303 = vmatpush1.bf16.msra.mxu0 0
    %3304 = vmatprep.subr.bf16.mxu0 0
    %3305 = vmatpush1.bf16.msra.mxu0 0
    %3306 = vmatprep.subr.bf16.mxu0 0
    %3307 = vmatpush1.bf16.msra.mxu0 0
    %3308 = vmatprep.subr.bf16.mxu0 0
    %3309 = vmatpush1.bf16.msra.mxu0 0
    %3310 = vmatprep.subr.bf16.mxu0 0
    %3311 = vmatpush1.bf16.msra.mxu0 0
    %3312 = vmatprep.mubr.bf16.mxu0 0
    %3313 = vmatmul.mubr.bf16.gmra.mrb[0].mxu0 %v3135
    %v3314 = vpop.f32.mrb[0].mxu0
    %v3315 = vadd.f32 0.0, %v3314
    %v3316 = vpop.f32.mrb[0].mxu0
    %v3317 = vpop.f32.mrb[0].mxu0
    %v3318 = vadd.f32 0.0, %v3317
    %v3319 = vpop.f32.mrb[0].mxu0
    %3320 = vmatprep.mubr.bf16.mxu0 0
    %3321 = vmatmul.mubr.bf16.gmra.mrb[0].mxu0 %v3136
    %v3322 = vpop.f32.mrb[0].mxu0
    %v3323 = vadd.f32 0.0, %v3322
    %v3324 = vpop.f32.mrb[0].mxu0
    %v3325 = vpop.f32.mrb[0].mxu0
    %v3326 = vadd.f32 0.0, %v3325
    %v3327 = vpop.f32.mrb[0].mxu0
    %3328 = vdwg.mxu0
    %v3329 = vadd.f32 %v3111, %v3262
    %v3330 = vadd.f32 %v3112, %v3264
    %v3331 = vadd.f32 %v3113, %v3315
    %v3332 = vadd.f32 %v3114, %v3266
    %v3333 = vadd.f32 %v3115, %v3268
    %v3334 = vadd.f32 %v3116, %v3318
    %v3335 = vadd.f32 %v3117, %v3272
    %v3336 = vadd.f32 %v3118, %v3274
    %v3337 = vadd.f32 %v3119, %v3323
    %v3338 = vadd.f32 %v3120, %v3276
    %v3339 = vadd.f32 %v3121, %v3278
    %v3340 = vadd.f32 %v3122, %v3326
    %v3341 = vld [vmem:[%s1178] sm:$0xf]
    %v3342 = vld [vmem:[%s1178 + $0x4] sm:$0xf]
    %v3343 = vld [vmem:[%s1178 + $0x8] sm:$0xf]
    %v3344 = vld [vmem:[%s1178 + $0xc] sm:$0xf]
    %v3349 = vunpack.c.l.b16 %v3341
    %v3350 = vunpack.c.l.b16 %v3342
    %v3351 = vunpack.c.l.b16 %v3343
    %v3352 = vunpack.c.l.b16 %v3344
    %v3353 = vpack.c.b16 %v3350, %v3349
    %v3354 = vpack.c.b16 %v3352, %v3351
    %3357 = vrot.lane.b32.xlu0 %v2335, 108
    %v3358 = vpop.permute.xlu0 %3357
    %3359 = vrot.lane.b32.xlu0 %v2336, 108
    %v3360 = vpop.permute.xlu0 %3359
    %3361 = vrot.lane.b32.xlu0 %v2337, 108
    %v3362 = vpop.permute.xlu0 %3361
    %3363 = vrot.lane.b32.xlu0 %v2338, 108
    %v3364 = vpop.permute.xlu0 %3363
    %3365 = vrot.lane.b32.xlu0 %v2339, 108
    %v3366 = vpop.permute.xlu0 %3365
    %3367 = vrot.lane.b32.xlu0 %v2340, 108
    %v3368 = vpop.permute.xlu0 %3367
    %3369 = vrot.lane.b32.xlu0 %v2341, 108
    %v3370 = vpop.permute.xlu0 %3369
    %3371 = vrot.lane.b32.xlu0 %v2342, 108
    %v3372 = vpop.permute.xlu0 %3371
    %3373 = vrot.lane.b32.xlu0 %v2343, 108
    %v3374 = vpop.permute.xlu0 %3373
    %3375 = vrot.lane.b32.xlu0 %v2344, 108
    %v3376 = vpop.permute.xlu0 %3375
    %3377 = vrot.lane.b32.xlu0 %v2345, 108
    %v3378 = vpop.permute.xlu0 %3377
    %3379 = vrot.lane.b32.xlu0 %v2346, 108
    %v3380 = vpop.permute.xlu0 %3379
    %3381 = vrot.lane.b32.xlu0 %v2347, 108
    %v3382 = vpop.permute.xlu0 %3381
    %3383 = vrot.lane.b32.xlu0 %v2348, 108
    %v3384 = vpop.permute.xlu0 %3383
    %3385 = vrot.lane.b32.xlu0 %v2349, 108
    %v3386 = vpop.permute.xlu0 %3385
    %3387 = vrot.lane.b32.xlu0 %v2350, 108
    %v3388 = vpop.permute.xlu0 %3387
    %3389 = vrot.lane.b32.xlu0 %v2351, 108
    %v3390 = vpop.permute.xlu0 %3389
    %3391 = vrot.lane.b32.xlu0 %v2352, 108
    %v3392 = vpop.permute.xlu0 %3391
    %3393 = vrot.lane.b32.xlu0 %v2353, 108
    %v3394 = vpop.permute.xlu0 %3393
    %3395 = vrot.lane.b32.xlu0 %v2354, 108
    %v3396 = vpop.permute.xlu0 %3395
    %3397 = vrot.lane.b32.xlu0 %v2355, 108
    %v3398 = vpop.permute.xlu0 %3397
    %3399 = vrot.lane.b32.xlu0 %v2356, 108
    %v3400 = vpop.permute.xlu0 %3399
    %3401 = vrot.lane.b32.xlu0 %v2357, 108
    %v3402 = vpop.permute.xlu0 %3401
    %3403 = vrot.lane.b32.xlu0 %v2358, 108
    %v3404 = vpop.permute.xlu0 %3403
    %v3405 = vsel %vm1243, %v3358, %v3360
    %v3406 = vsel %vm1243, %v3360, %v3362
    %v3407 = vsel %vm1243, %v3364, %v3366
    %v3408 = vsel %vm1243, %v3366, %v3368
    %v3409 = vsel %vm1243, %v3370, %v3372
    %v3410 = vsel %vm1243, %v3372, %v3374
    %v3411 = vsel %vm1243, %v3376, %v3378
    %v3412 = vsel %vm1243, %v3378, %v3380
    %v3413 = vsel %vm1243, %v3382, %v3384
    %v3414 = vsel %vm1243, %v3384, %v3386
    %v3415 = vsel %vm1243, %v3388, %v3390
    %v3416 = vsel %vm1243, %v3390, %v3392
    %v3417 = vsel %vm1243, %v3394, %v3396
    %v3418 = vsel %vm1243, %v3396, %v3398
    %v3419 = vsel %vm1243, %v3400, %v3402
    %v3420 = vsel %vm1243, %v3402, %v3404
    %3445 = vmatprep.subr.bf16.mxu0 %v3406
    %3446 = vmatpush1.bf16.msra.mxu0 %v3405
    %3447 = vmatprep.subr.bf16.mxu0 %v3408
    %3448 = vmatpush1.bf16.msra.mxu0 %v3407
    %3449 = vmatprep.subr.bf16.mxu0 %v3410
    %3450 = vmatpush1.bf16.msra.mxu0 %v3409
    %3451 = vmatprep.subr.bf16.mxu0 %v3412
    %3452 = vmatpush1.bf16.msra.mxu0 %v3411
    %3453 = vmatprep.subr.bf16.mxu0 %v3414
    %3454 = vmatpush1.bf16.msra.mxu0 %v3413
    %3455 = vmatprep.subr.bf16.mxu0 %v3416
    %3456 = vmatpush1.bf16.msra.mxu0 %v3415
    %3457 = vmatprep.subr.bf16.mxu0 %v3418
    %3458 = vmatpush1.bf16.msra.mxu0 %v3417
    %3459 = vmatprep.subr.bf16.mxu0 %v3420
    %3460 = vmatpush1.bf16.msra.mxu0 %v3419
    %3461 = vmatprep.subr.bf16.mxu0 0
    %3462 = vmatpush1.bf16.msra.mxu0 0
    %3463 = vmatprep.subr.bf16.mxu0 0
    %3464 = vmatpush1.bf16.msra.mxu0 0
    %3465 = vmatprep.subr.bf16.mxu0 0
    %3466 = vmatpush1.bf16.msra.mxu0 0
    %3467 = vmatprep.subr.bf16.mxu0 0
    %3468 = vmatpush1.bf16.msra.mxu0 0
    %3469 = vmatprep.subr.bf16.mxu0 0
    %3470 = vmatpush1.bf16.msra.mxu0 0
    %3471 = vmatprep.subr.bf16.mxu0 0
    %3472 = vmatpush1.bf16.msra.mxu0 0
    %3473 = vmatprep.subr.bf16.mxu0 0
    %3474 = vmatpush1.bf16.msra.mxu0 0
    %3475 = vmatprep.subr.bf16.mxu0 0
    %3476 = vmatpush1.bf16.msra.mxu0 0
    %3477 = vmatprep.mubr.bf16.mxu0 0
    %3478 = vmatmul.mubr.bf16.gmra.mrb[0].mxu0 %v3353
    %v3479 = vpop.f32.mrb[0].mxu0
    %v3480 = vadd.f32 0.0, %v3479
    %v3481 = vpop.f32.mrb[0].mxu0
    %v3482 = vadd.f32 0.0, %v3481
    %v3483 = vpop.f32.mrb[0].mxu0
    %v3484 = vadd.f32 0.0, %v3483
    %v3485 = vpop.f32.mrb[0].mxu0
    %v3486 = vadd.f32 0.0, %v3485
    %3487 = vmatprep.mubr.bf16.mxu0 0
    %3488 = vmatmul.mubr.bf16.gmra.mrb[0].mxu0 %v3354
    %v3489 = vpop.f32.mrb[0].mxu0
    %v3490 = vadd.f32 0.0, %v3489
    %v3491 = vpop.f32.mrb[0].mxu0
    %v3492 = vadd.f32 0.0, %v3491
    %v3493 = vpop.f32.mrb[0].mxu0
    %v3494 = vadd.f32 0.0, %v3493
    %v3495 = vpop.f32.mrb[0].mxu0
    %v3496 = vadd.f32 0.0, %v3495
    %3497 = vdwg.mxu0
    %3498 = vmatprep.subr.bf16.mxu0 0
    %3499 = vmatpush1.bf16.msra.mxu0 %v3362
    %3500 = vmatprep.subr.bf16.mxu0 0
    %3501 = vmatpush1.bf16.msra.mxu0 %v3368
    %3502 = vmatprep.subr.bf16.mxu0 0
    %3503 = vmatpush1.bf16.msra.mxu0 %v3374
    %3504 = vmatprep.subr.bf16.mxu0 0
    %3505 = vmatpush1.bf16.msra.mxu0 %v3380
    %3506 = vmatprep.subr.bf16.mxu0 0
    %3507 = vmatpush1.bf16.msra.mxu0 %v3386
    %3508 = vmatprep.subr.bf16.mxu0 0
    %3509 = vmatpush1.bf16.msra.mxu0 %v3392
    %3510 = vmatprep.subr.bf16.mxu0 0
    %3511 = vmatpush1.bf16.msra.mxu0 %v3398
    %3512 = vmatprep.subr.bf16.mxu0 0
    %3513 = vmatpush1.bf16.msra.mxu0 %v3404
    %3514 = vmatprep.subr.bf16.mxu0 0
    %3515 = vmatpush1.bf16.msra.mxu0 0
    %3516 = vmatprep.subr.bf16.mxu0 0
    %3517 = vmatpush1.bf16.msra.mxu0 0
    %3518 = vmatprep.subr.bf16.mxu0 0
    %3519 = vmatpush1.bf16.msra.mxu0 0
    %3520 = vmatprep.subr.bf16.mxu0 0
    %3521 = vmatpush1.bf16.msra.mxu0 0
    %3522 = vmatprep.subr.bf16.mxu0 0
    %3523 = vmatpush1.bf16.msra.mxu0 0
    %3524 = vmatprep.subr.bf16.mxu0 0
    %3525 = vmatpush1.bf16.msra.mxu0 0
    %3526 = vmatprep.subr.bf16.mxu0 0
    %3527 = vmatpush1.bf16.msra.mxu0 0
    %3528 = vmatprep.subr.bf16.mxu0 0
    %3529 = vmatpush1.bf16.msra.mxu0 0
    %3530 = vmatprep.mubr.bf16.mxu0 0
    %3531 = vmatmul.mubr.bf16.gmra.mrb[0].mxu0 %v3353
    %v3532 = vpop.f32.mrb[0].mxu0
    %v3533 = vadd.f32 0.0, %v3532
    %v3534 = vpop.f32.mrb[0].mxu0
    %v3535 = vpop.f32.mrb[0].mxu0
    %v3536 = vadd.f32 0.0, %v3535
    %v3537 = vpop.f32.mrb[0].mxu0
    %3538 = vmatprep.mubr.bf16.mxu0 0
    %3539 = vmatmul.mubr.bf16.gmra.mrb[0].mxu0 %v3354
    %v3540 = vpop.f32.mrb[0].mxu0
    %v3541 = vadd.f32 0.0, %v3540
    %v3542 = vpop.f32.mrb[0].mxu0
    %v3543 = vpop.f32.mrb[0].mxu0
    %v3544 = vadd.f32 0.0, %v3543
    %v3545 = vpop.f32.mrb[0].mxu0
    %3546 = vdwg.mxu0
    %v3547 = vadd.f32 %v3329, %v3480
    %v3548 = vadd.f32 %v3330, %v3482
    %v3549 = vadd.f32 %v3331, %v3533
    %v3550 = vadd.f32 %v3332, %v3484
    %v3551 = vadd.f32 %v3333, %v3486
    %v3552 = vadd.f32 %v3334, %v3536
    %v3553 = vadd.f32 %v3335, %v3490
    %v3554 = vadd.f32 %v3336, %v3492
    %v3555 = vadd.f32 %v3337, %v3541
    %v3556 = vadd.f32 %v3338, %v3494
    %v3557 = vadd.f32 %v3339, %v3496
    %v3558 = vadd.f32 %v3340, %v3544
    %v3559 = vld [vmem:[%s1398] sm:$0xf]
    %v3560 = vld [vmem:[%s1398 + $0x4] sm:$0xf]
    %v3561 = vld [vmem:[%s1398 + $0x8] sm:$0xf]
    %v3562 = vld [vmem:[%s1398 + $0xc] sm:$0xf]
    %v3567 = vunpack.c.l.b16 %v3559
    %v3568 = vunpack.c.l.b16 %v3560
    %v3569 = vunpack.c.l.b16 %v3561
    %v3570 = vunpack.c.l.b16 %v3562
    %v3571 = vpack.c.b16 %v3568, %v3567
    %v3572 = vpack.c.b16 %v3570, %v3569
    %3575 = vrot.lane.b32.xlu0 %v2335, 92
    %v3576 = vpop.permute.xlu0 %3575
    %3577 = vrot.lane.b32.xlu0 %v2336, 92
    %v3578 = vpop.permute.xlu0 %3577
    %3579 = vrot.lane.b32.xlu0 %v2337, 92
    %v3580 = vpop.permute.xlu0 %3579
    %3581 = vrot.lane.b32.xlu0 %v2338, 92
    %v3582 = vpop.permute.xlu0 %3581
    %3583 = vrot.lane.b32.xlu0 %v2339, 92
    %v3584 = vpop.permute.xlu0 %3583
    %3585 = vrot.lane.b32.xlu0 %v2340, 92
    %v3586 = vpop.permute.xlu0 %3585
    %3587 = vrot.lane.b32.xlu0 %v2341, 92
    %v3588 = vpop.permute.xlu0 %3587
    %3589 = vrot.lane.b32.xlu0 %v2342, 92
    %v3590 = vpop.permute.xlu0 %3589
    %3591 = vrot.lane.b32.xlu0 %v2343, 92
    %v3592 = vpop.permute.xlu0 %3591
    %3593 = vrot.lane.b32.xlu0 %v2344, 92
    %v3594 = vpop.permute.xlu0 %3593
    %3595 = vrot.lane.b32.xlu0 %v2345, 92
    %v3596 = vpop.permute.xlu0 %3595
    %3597 = vrot.lane.b32.xlu0 %v2346, 92
    %v3598 = vpop.permute.xlu0 %3597
    %3599 = vrot.lane.b32.xlu0 %v2347, 92
    %v3600 = vpop.permute.xlu0 %3599
    %3601 = vrot.lane.b32.xlu0 %v2348, 92
    %v3602 = vpop.permute.xlu0 %3601
    %3603 = vrot.lane.b32.xlu0 %v2349, 92
    %v3604 = vpop.permute.xlu0 %3603
    %3605 = vrot.lane.b32.xlu0 %v2350, 92
    %v3606 = vpop.permute.xlu0 %3605
    %3607 = vrot.lane.b32.xlu0 %v2351, 92
    %v3608 = vpop.permute.xlu0 %3607
    %3609 = vrot.lane.b32.xlu0 %v2352, 92
    %v3610 = vpop.permute.xlu0 %3609
    %3611 = vrot.lane.b32.xlu0 %v2353, 92
    %v3612 = vpop.permute.xlu0 %3611
    %3613 = vrot.lane.b32.xlu0 %v2354, 92
    %v3614 = vpop.permute.xlu0 %3613
    %3615 = vrot.lane.b32.xlu0 %v2355, 92
    %v3616 = vpop.permute.xlu0 %3615
    %3617 = vrot.lane.b32.xlu0 %v2356, 92
    %v3618 = vpop.permute.xlu0 %3617
    %3619 = vrot.lane.b32.xlu0 %v2357, 92
    %v3620 = vpop.permute.xlu0 %3619
    %3621 = vrot.lane.b32.xlu0 %v2358, 92
    %v3622 = vpop.permute.xlu0 %3621
    %v3623 = vsel %vm1463, %v3576, %v3578
    %v3624 = vsel %vm1463, %v3578, %v3580
    %v3625 = vsel %vm1463, %v3582, %v3584
    %v3626 = vsel %vm1463, %v3584, %v3586
    %v3627 = vsel %vm1463, %v3588, %v3590
    %v3628 = vsel %vm1463, %v3590, %v3592
    %v3629 = vsel %vm1463, %v3594, %v3596
    %v3630 = vsel %vm1463, %v3596, %v3598
    %v3631 = vsel %vm1463, %v3600, %v3602
    %v3632 = vsel %vm1463, %v3602, %v3604
    %v3633 = vsel %vm1463, %v3606, %v3608
    %v3634 = vsel %vm1463, %v3608, %v3610
    %v3635 = vsel %vm1463, %v3612, %v3614
    %v3636 = vsel %vm1463, %v3614, %v3616
    %v3637 = vsel %vm1463, %v3618, %v3620
    %v3638 = vsel %vm1463, %v3620, %v3622
    %3663 = vmatprep.subr.bf16.mxu0 %v3624
    %3664 = vmatpush1.bf16.msra.mxu0 %v3623
    %3665 = vmatprep.subr.bf16.mxu0 %v3626
    %3666 = vmatpush1.bf16.msra.mxu0 %v3625
    %3667 = vmatprep.subr.bf16.mxu0 %v3628
    %3668 = vmatpush1.bf16.msra.mxu0 %v3627
    %3669 = vmatprep.subr.bf16.mxu0 %v3630
    %3670 = vmatpush1.bf16.msra.mxu0 %v3629
    %3671 = vmatprep.subr.bf16.mxu0 %v3632
    %3672 = vmatpush1.bf16.msra.mxu0 %v3631
    %3673 = vmatprep.subr.bf16.mxu0 %v3634
    %3674 = vmatpush1.bf16.msra.mxu0 %v3633
    %3675 = vmatprep.subr.bf16.mxu0 %v3636
    %3676 = vmatpush1.bf16.msra.mxu0 %v3635
    %3677 = vmatprep.subr.bf16.mxu0 %v3638
    %3678 = vmatpush1.bf16.msra.mxu0 %v3637
    %3679 = vmatprep.subr.bf16.mxu0 0
    %3680 = vmatpush1.bf16.msra.mxu0 0
    %3681 = vmatprep.subr.bf16.mxu0 0
    %3682 = vmatpush1.bf16.msra.mxu0 0
    %3683 = vmatprep.subr.bf16.mxu0 0
    %3684 = vmatpush1.bf16.msra.mxu0 0
    %3685 = vmatprep.subr.bf16.mxu0 0
    %3686 = vmatpush1.bf16.msra.mxu0 0
    %3687 = vmatprep.subr.bf16.mxu0 0
    %3688 = vmatpush1.bf16.msra.mxu0 0
    %3689 = vmatprep.subr.bf16.mxu0 0
    %3690 = vmatpush1.bf16.msra.mxu0 0
    %3691 = vmatprep.subr.bf16.mxu0 0
    %3692 = vmatpush1.bf16.msra.mxu0 0
    %3693 = vmatprep.subr.bf16.mxu0 0
    %3694 = vmatpush1.bf16.msra.mxu0 0
    %3695 = vmatprep.mubr.bf16.mxu0 0
    %3696 = vmatmul.mubr.bf16.gmra.mrb[0].mxu0 %v3571
    %v3697 = vpop.f32.mrb[0].mxu0
    %v3698 = vadd.f32 0.0, %v3697
    %v3699 = vpop.f32.mrb[0].mxu0
    %v3700 = vadd.f32 0.0, %v3699
    %v3701 = vpop.f32.mrb[0].mxu0
    %v3702 = vadd.f32 0.0, %v3701
    %v3703 = vpop.f32.mrb[0].mxu0
    %v3704 = vadd.f32 0.0, %v3703
    %3705 = vmatprep.mubr.bf16.mxu0 0
    %3706 = vmatmul.mubr.bf16.gmra.mrb[0].mxu0 %v3572
    %v3707 = vpop.f32.mrb[0].mxu0
    %v3708 = vadd.f32 0.0, %v3707
    %v3709 = vpop.f32.mrb[0].mxu0
    %v3710 = vadd.f32 0.0, %v3709
    %v3711 = vpop.f32.mrb[0].mxu0
    %v3712 = vadd.f32 0.0, %v3711
    %v3713 = vpop.f32.mrb[0].mxu0
    %v3714 = vadd.f32 0.0, %v3713
    %3715 = vdwg.mxu0
    %3716 = vmatprep.subr.bf16.mxu0 0
    %3717 = vmatpush1.bf16.msra.mxu0 %v3580
    %3718 = vmatprep.subr.bf16.mxu0 0
    %3719 = vmatpush1.bf16.msra.mxu0 %v3586
    %3720 = vmatprep.subr.bf16.mxu0 0
    %3721 = vmatpush1.bf16.msra.mxu0 %v3592
    %3722 = vmatprep.subr.bf16.mxu0 0
    %3723 = vmatpush1.bf16.msra.mxu0 %v3598
    %3724 = vmatprep.subr.bf16.mxu0 0
    %3725 = vmatpush1.bf16.msra.mxu0 %v3604
    %3726 = vmatprep.subr.bf16.mxu0 0
    %3727 = vmatpush1.bf16.msra.mxu0 %v3610
    %3728 = vmatprep.subr.bf16.mxu0 0
    %3729 = vmatpush1.bf16.msra.mxu0 %v3616
    %3730 = vmatprep.subr.bf16.mxu0 0
    %3731 = vmatpush1.bf16.msra.mxu0 %v3622
    %3732 = vmatprep.subr.bf16.mxu0 0
    %3733 = vmatpush1.bf16.msra.mxu0 0
    %3734 = vmatprep.subr.bf16.mxu0 0
    %3735 = vmatpush1.bf16.msra.mxu0 0
    %3736 = vmatprep.subr.bf16.mxu0 0
    %3737 = vmatpush1.bf16.msra.mxu0 0
    %3738 = vmatprep.subr.bf16.mxu0 0
    %3739 = vmatpush1.bf16.msra.mxu0 0
    %3740 = vmatprep.subr.bf16.mxu0 0
    %3741 = vmatpush1.bf16.msra.mxu0 0
    %3742 = vmatprep.subr.bf16.mxu0 0
    %3743 = vmatpush1.bf16.msra.mxu0 0
    %3744 = vmatprep.subr.bf16.mxu0 0
    %3745 = vmatpush1.bf16.msra.mxu0 0
    %3746 = vmatprep.subr.bf16.mxu0 0
    %3747 = vmatpush1.bf16.msra.mxu0 0
    %3748 = vmatprep.mubr.bf16.mxu0 0
    %3749 = vmatmul.mubr.bf16.gmra.mrb[0].mxu0 %v3571
    %v3750 = vpop.f32.mrb[0].mxu0
    %v3751 = vadd.f32 0.0, %v3750
    %v3752 = vpop.f32.mrb[0].mxu0
    %v3753 = vpop.f32.mrb[0].mxu0
    %v3754 = vadd.f32 0.0, %v3753
    %v3755 = vpop.f32.mrb[0].mxu0
    %3756 = vmatprep.mubr.bf16.mxu0 0
    %3757 = vmatmul.mubr.bf16.gmra.mrb[0].mxu0 %v3572
    %v3758 = vpop.f32.mrb[0].mxu0
    %v3759 = vadd.f32 0.0, %v3758
    %v3760 = vpop.f32.mrb[0].mxu0
    %v3761 = vpop.f32.mrb[0].mxu0
    %v3762 = vadd.f32 0.0, %v3761
    %v3763 = vpop.f32.mrb[0].mxu0
    %3764 = vdwg.mxu0
    %v3765 = vadd.f32 %v3547, %v3698
    %v3766 = vadd.f32 %v3548, %v3700
    %v3767 = vadd.f32 %v3549, %v3751
    %v3768 = vadd.f32 %v3550, %v3702
    %v3769 = vadd.f32 %v3551, %v3704
    %v3770 = vadd.f32 %v3552, %v3754
    %v3771 = vadd.f32 %v3553, %v3708
    %v3772 = vadd.f32 %v3554, %v3710
    %v3773 = vadd.f32 %v3555, %v3759
    %v3774 = vadd.f32 %v3556, %v3712
    %v3775 = vadd.f32 %v3557, %v3714
    %v3776 = vadd.f32 %v3558, %v3762
    %v3777 = vld [vmem:[%s1618] sm:$0xf]
    %v3778 = vld [vmem:[%s1618 + $0x4] sm:$0xf]
    %v3779 = vld [vmem:[%s1618 + $0x8] sm:$0xf]
    %v3780 = vld [vmem:[%s1618 + $0xc] sm:$0xf]
    %v3785 = vunpack.c.l.b16 %v3777
    %v3786 = vunpack.c.l.b16 %v3778
    %v3787 = vunpack.c.l.b16 %v3779
    %v3788 = vunpack.c.l.b16 %v3780
    %v3789 = vpack.c.b16 %v3786, %v3785
    %v3790 = vpack.c.b16 %v3788, %v3787
    %3793 = vrot.lane.b32.xlu0 %v2335, 91
    %v3794 = vpop.permute.xlu0 %3793
    %3795 = vrot.lane.b32.xlu0 %v2336, 91
    %v3796 = vpop.permute.xlu0 %3795
    %3797 = vrot.lane.b32.xlu0 %v2337, 91
    %v3798 = vpop.permute.xlu0 %3797
    %3799 = vrot.lane.b32.xlu0 %v2338, 91
    %v3800 = vpop.permute.xlu0 %3799
    %3801 = vrot.lane.b32.xlu0 %v2339, 91
    %v3802 = vpop.permute.xlu0 %3801
    %3803 = vrot.lane.b32.xlu0 %v2340, 91
    %v3804 = vpop.permute.xlu0 %3803
    %3805 = vrot.lane.b32.xlu0 %v2341, 91
    %v3806 = vpop.permute.xlu0 %3805
    %3807 = vrot.lane.b32.xlu0 %v2342, 91
    %v3808 = vpop.permute.xlu0 %3807
    %3809 = vrot.lane.b32.xlu0 %v2343, 91
    %v3810 = vpop.permute.xlu0 %3809
    %3811 = vrot.lane.b32.xlu0 %v2344, 91
    %v3812 = vpop.permute.xlu0 %3811
    %3813 = vrot.lane.b32.xlu0 %v2345, 91
    %v3814 = vpop.permute.xlu0 %3813
    %3815 = vrot.lane.b32.xlu0 %v2346, 91
    %v3816 = vpop.permute.xlu0 %3815
    %3817 = vrot.lane.b32.xlu0 %v2347, 91
    %v3818 = vpop.permute.xlu0 %3817
    %3819 = vrot.lane.b32.xlu0 %v2348, 91
    %v3820 = vpop.permute.xlu0 %3819
    %3821 = vrot.lane.b32.xlu0 %v2349, 91
    %v3822 = vpop.permute.xlu0 %3821
    %3823 = vrot.lane.b32.xlu0 %v2350, 91
    %v3824 = vpop.permute.xlu0 %3823
    %3825 = vrot.lane.b32.xlu0 %v2351, 91
    %v3826 = vpop.permute.xlu0 %3825
    %3827 = vrot.lane.b32.xlu0 %v2352, 91
    %v3828 = vpop.permute.xlu0 %3827
    %3829 = vrot.lane.b32.xlu0 %v2353, 91
    %v3830 = vpop.permute.xlu0 %3829
    %3831 = vrot.lane.b32.xlu0 %v2354, 91
    %v3832 = vpop.permute.xlu0 %3831
    %3833 = vrot.lane.b32.xlu0 %v2355, 91
    %v3834 = vpop.permute.xlu0 %3833
    %3835 = vrot.lane.b32.xlu0 %v2356, 91
    %v3836 = vpop.permute.xlu0 %3835
    %3837 = vrot.lane.b32.xlu0 %v2357, 91
    %v3838 = vpop.permute.xlu0 %3837
    %3839 = vrot.lane.b32.xlu0 %v2358, 91
    %v3840 = vpop.permute.xlu0 %3839
    %v3841 = vsel %vm1683, %v3794, %v3796
    %v3842 = vsel %vm1683, %v3796, %v3798
    %v3843 = vsel %vm1683, %v3800, %v3802
    %v3844 = vsel %vm1683, %v3802, %v3804
    %v3845 = vsel %vm1683, %v3806, %v3808
    %v3846 = vsel %vm1683, %v3808, %v3810
    %v3847 = vsel %vm1683, %v3812, %v3814
    %v3848 = vsel %vm1683, %v3814, %v3816
    %v3849 = vsel %vm1683, %v3818, %v3820
    %v3850 = vsel %vm1683, %v3820, %v3822
    %v3851 = vsel %vm1683, %v3824, %v3826
    %v3852 = vsel %vm1683, %v3826, %v3828
    %v3853 = vsel %vm1683, %v3830, %v3832
    %v3854 = vsel %vm1683, %v3832, %v3834
    %v3855 = vsel %vm1683, %v3836, %v3838
    %v3856 = vsel %vm1683, %v3838, %v3840
    %3881 = vmatprep.subr.bf16.mxu0 %v3842
    %3882 = vmatpush1.bf16.msra.mxu0 %v3841
    %3883 = vmatprep.subr.bf16.mxu0 %v3844
    %3884 = vmatpush1.bf16.msra.mxu0 %v3843
    %3885 = vmatprep.subr.bf16.mxu0 %v3846
    %3886 = vmatpush1.bf16.msra.mxu0 %v3845
    %3887 = vmatprep.subr.bf16.mxu0 %v3848
    %3888 = vmatpush1.bf16.msra.mxu0 %v3847
    %3889 = vmatprep.subr.bf16.mxu0 %v3850
    %3890 = vmatpush1.bf16.msra.mxu0 %v3849
    %3891 = vmatprep.subr.bf16.mxu0 %v3852
    %3892 = vmatpush1.bf16.msra.mxu0 %v3851
    %3893 = vmatprep.subr.bf16.mxu0 %v3854
    %3894 = vmatpush1.bf16.msra.mxu0 %v3853
    %3895 = vmatprep.subr.bf16.mxu0 %v3856
    %3896 = vmatpush1.bf16.msra.mxu0 %v3855
    %3897 = vmatprep.subr.bf16.mxu0 0
    %3898 = vmatpush1.bf16.msra.mxu0 0
    %3899 = vmatprep.subr.bf16.mxu0 0
    %3900 = vmatpush1.bf16.msra.mxu0 0
    %3901 = vmatprep.subr.bf16.mxu0 0
    %3902 = vmatpush1.bf16.msra.mxu0 0
    %3903 = vmatprep.subr.bf16.mxu0 0
    %3904 = vmatpush1.bf16.msra.mxu0 0
    %3905 = vmatprep.subr.bf16.mxu0 0
    %3906 = vmatpush1.bf16.msra.mxu0 0
    %3907 = vmatprep.subr.bf16.mxu0 0
    %3908 = vmatpush1.bf16.msra.mxu0 0
    %3909 = vmatprep.subr.bf16.mxu0 0
    %3910 = vmatpush1.bf16.msra.mxu0 0
    %3911 = vmatprep.subr.bf16.mxu0 0
    %3912 = vmatpush1.bf16.msra.mxu0 0
    %3913 = vmatprep.mubr.bf16.mxu0 0
    %3914 = vmatmul.mubr.bf16.gmra.mrb[0].mxu0 %v3789
    %v3915 = vpop.f32.mrb[0].mxu0
    %v3916 = vadd.f32 0.0, %v3915
    %v3917 = vpop.f32.mrb[0].mxu0
    %v3918 = vadd.f32 0.0, %v3917
    %v3919 = vpop.f32.mrb[0].mxu0
    %v3920 = vadd.f32 0.0, %v3919
    %v3921 = vpop.f32.mrb[0].mxu0
    %v3922 = vadd.f32 0.0, %v3921
    %3923 = vmatprep.mubr.bf16.mxu0 0
    %3924 = vmatmul.mubr.bf16.gmra.mrb[0].mxu0 %v3790
    %v3925 = vpop.f32.mrb[0].mxu0
    %v3926 = vadd.f32 0.0, %v3925
    %v3927 = vpop.f32.mrb[0].mxu0
    %v3928 = vadd.f32 0.0, %v3927
    %v3929 = vpop.f32.mrb[0].mxu0
    %v3930 = vadd.f32 0.0, %v3929
    %v3931 = vpop.f32.mrb[0].mxu0
    %v3932 = vadd.f32 0.0, %v3931
    %3933 = vdwg.mxu0
    %3934 = vmatprep.subr.bf16.mxu0 0
    %3935 = vmatpush1.bf16.msra.mxu0 %v3798
    %3936 = vmatprep.subr.bf16.mxu0 0
    %3937 = vmatpush1.bf16.msra.mxu0 %v3804
    %3938 = vmatprep.subr.bf16.mxu0 0
    %3939 = vmatpush1.bf16.msra.mxu0 %v3810
    %3940 = vmatprep.subr.bf16.mxu0 0
    %3941 = vmatpush1.bf16.msra.mxu0 %v3816
    %3942 = vmatprep.subr.bf16.mxu0 0
    %3943 = vmatpush1.bf16.msra.mxu0 %v3822
    %3944 = vmatprep.subr.bf16.mxu0 0
    %3945 = vmatpush1.bf16.msra.mxu0 %v3828
    %3946 = vmatprep.subr.bf16.mxu0 0
    %3947 = vmatpush1.bf16.msra.mxu0 %v3834
    %3948 = vmatprep.subr.bf16.mxu0 0
    %3949 = vmatpush1.bf16.msra.mxu0 %v3840
    %3950 = vmatprep.subr.bf16.mxu0 0
    %3951 = vmatpush1.bf16.msra.mxu0 0
    %3952 = vmatprep.subr.bf16.mxu0 0
    %3953 = vmatpush1.bf16.msra.mxu0 0
    %3954 = vmatprep.subr.bf16.mxu0 0
    %3955 = vmatpush1.bf16.msra.mxu0 0
    %3956 = vmatprep.subr.bf16.mxu0 0
    %3957 = vmatpush1.bf16.msra.mxu0 0
    %3958 = vmatprep.subr.bf16.mxu0 0
    %3959 = vmatpush1.bf16.msra.mxu0 0
    %3960 = vmatprep.subr.bf16.mxu0 0
    %3961 = vmatpush1.bf16.msra.mxu0 0
    %3962 = vmatprep.subr.bf16.mxu0 0
    %3963 = vmatpush1.bf16.msra.mxu0 0
    %3964 = vmatprep.subr.bf16.mxu0 0
    %3965 = vmatpush1.bf16.msra.mxu0 0
    %3966 = vmatprep.mubr.bf16.mxu0 0
    %3967 = vmatmul.mubr.bf16.gmra.mrb[0].mxu0 %v3789
    %v3968 = vpop.f32.mrb[0].mxu0
    %v3969 = vadd.f32 0.0, %v3968
    %v3970 = vpop.f32.mrb[0].mxu0
    %v3971 = vpop.f32.mrb[0].mxu0
    %v3972 = vadd.f32 0.0, %v3971
    %v3973 = vpop.f32.mrb[0].mxu0
    %3974 = vmatprep.mubr.bf16.mxu0 0
    %3975 = vmatmul.mubr.bf16.gmra.mrb[0].mxu0 %v3790
    %v3976 = vpop.f32.mrb[0].mxu0
    %v3977 = vadd.f32 0.0, %v3976
    %v3978 = vpop.f32.mrb[0].mxu0
    %v3979 = vpop.f32.mrb[0].mxu0
    %v3980 = vadd.f32 0.0, %v3979
    %v3981 = vpop.f32.mrb[0].mxu0
    %3982 = vdwg.mxu0
    %v3983 = vadd.f32 %v3765, %v3916
    %v3984 = vadd.f32 %v3766, %v3918
    %v3985 = vadd.f32 %v3767, %v3969
    %v3986 = vadd.f32 %v3768, %v3920
    %v3987 = vadd.f32 %v3769, %v3922
    %v3988 = vadd.f32 %v3770, %v3972
    %v3989 = vadd.f32 %v3771, %v3926
    %v3990 = vadd.f32 %v3772, %v3928
    %v3991 = vadd.f32 %v3773, %v3977
    %v3992 = vadd.f32 %v3774, %v3930
    %v3993 = vadd.f32 %v3775, %v3932
    %v3994 = vadd.f32 %v3776, %v3980
    %v3995 = vld [vmem:[%s1838] sm:$0xf]
    %v3996 = vld [vmem:[%s1838 + $0x4] sm:$0xf]
    %v3997 = vld [vmem:[%s1838 + $0x8] sm:$0xf]
    %v3998 = vld [vmem:[%s1838 + $0xc] sm:$0xf]
    %v4003 = vunpack.c.l.b16 %v3995
    %v4004 = vunpack.c.l.b16 %v3996
    %v4005 = vunpack.c.l.b16 %v3997
    %v4006 = vunpack.c.l.b16 %v3998
    %v4007 = vpack.c.b16 %v4004, %v4003
    %v4008 = vpack.c.b16 %v4006, %v4005
    %4011 = vrot.lane.b32.xlu0 %v2335, 90
    %v4012 = vpop.permute.xlu0 %4011
    %4013 = vrot.lane.b32.xlu0 %v2336, 90
    %v4014 = vpop.permute.xlu0 %4013
    %4015 = vrot.lane.b32.xlu0 %v2337, 90
    %v4016 = vpop.permute.xlu0 %4015
    %4017 = vrot.lane.b32.xlu0 %v2338, 90
    %v4018 = vpop.permute.xlu0 %4017
    %4019 = vrot.lane.b32.xlu0 %v2339, 90
    %v4020 = vpop.permute.xlu0 %4019
    %4021 = vrot.lane.b32.xlu0 %v2340, 90
    %v4022 = vpop.permute.xlu0 %4021
    %4023 = vrot.lane.b32.xlu0 %v2341, 90
    %v4024 = vpop.permute.xlu0 %4023
    %4025 = vrot.lane.b32.xlu0 %v2342, 90
    %v4026 = vpop.permute.xlu0 %4025
    %4027 = vrot.lane.b32.xlu0 %v2343, 90
    %v4028 = vpop.permute.xlu0 %4027
    %4029 = vrot.lane.b32.xlu0 %v2344, 90
    %v4030 = vpop.permute.xlu0 %4029
    %4031 = vrot.lane.b32.xlu0 %v2345, 90
    %v4032 = vpop.permute.xlu0 %4031
    %4033 = vrot.lane.b32.xlu0 %v2346, 90
    %v4034 = vpop.permute.xlu0 %4033
    %4035 = vrot.lane.b32.xlu0 %v2347, 90
    %v4036 = vpop.permute.xlu0 %4035
    %4037 = vrot.lane.b32.xlu0 %v2348, 90
    %v4038 = vpop.permute.xlu0 %4037
    %4039 = vrot.lane.b32.xlu0 %v2349, 90
    %v4040 = vpop.permute.xlu0 %4039
    %4041 = vrot.lane.b32.xlu0 %v2350, 90
    %v4042 = vpop.permute.xlu0 %4041
    %4043 = vrot.lane.b32.xlu0 %v2351, 90
    %v4044 = vpop.permute.xlu0 %4043
    %4045 = vrot.lane.b32.xlu0 %v2352, 90
    %v4046 = vpop.permute.xlu0 %4045
    %4047 = vrot.lane.b32.xlu0 %v2353, 90
    %v4048 = vpop.permute.xlu0 %4047
    %4049 = vrot.lane.b32.xlu0 %v2354, 90
    %v4050 = vpop.permute.xlu0 %4049
    %4051 = vrot.lane.b32.xlu0 %v2355, 90
    %v4052 = vpop.permute.xlu0 %4051
    %4053 = vrot.lane.b32.xlu0 %v2356, 90
    %v4054 = vpop.permute.xlu0 %4053
    %4055 = vrot.lane.b32.xlu0 %v2357, 90
    %v4056 = vpop.permute.xlu0 %4055
    %4057 = vrot.lane.b32.xlu0 %v2358, 90
    %v4058 = vpop.permute.xlu0 %4057
    %v4059 = vsel %vm1903, %v4012, %v4014
    %v4060 = vsel %vm1903, %v4014, %v4016
    %v4061 = vsel %vm1903, %v4018, %v4020
    %v4062 = vsel %vm1903, %v4020, %v4022
    %v4063 = vsel %vm1903, %v4024, %v4026
    %v4064 = vsel %vm1903, %v4026, %v4028
    %v4065 = vsel %vm1903, %v4030, %v4032
    %v4066 = vsel %vm1903, %v4032, %v4034
    %v4067 = vsel %vm1903, %v4036, %v4038
    %v4068 = vsel %vm1903, %v4038, %v4040
    %v4069 = vsel %vm1903, %v4042, %v4044
    %v4070 = vsel %vm1903, %v4044, %v4046
    %v4071 = vsel %vm1903, %v4048, %v4050
    %v4072 = vsel %vm1903, %v4050, %v4052
    %v4073 = vsel %vm1903, %v4054, %v4056
    %v4074 = vsel %vm1903, %v4056, %v4058
    %4099 = vmatprep.subr.bf16.mxu0 %v4060
    %4100 = vmatpush1.bf16.msra.mxu0 %v4059
    %4101 = vmatprep.subr.bf16.mxu0 %v4062
    %4102 = vmatpush1.bf16.msra.mxu0 %v4061
    %4103 = vmatprep.subr.bf16.mxu0 %v4064
    %4104 = vmatpush1.bf16.msra.mxu0 %v4063
    %4105 = vmatprep.subr.bf16.mxu0 %v4066
    %4106 = vmatpush1.bf16.msra.mxu0 %v4065
    %4107 = vmatprep.subr.bf16.mxu0 %v4068
    %4108 = vmatpush1.bf16.msra.mxu0 %v4067
    %4109 = vmatprep.subr.bf16.mxu0 %v4070
    %4110 = vmatpush1.bf16.msra.mxu0 %v4069
    %4111 = vmatprep.subr.bf16.mxu0 %v4072
    %4112 = vmatpush1.bf16.msra.mxu0 %v4071
    %4113 = vmatprep.subr.bf16.mxu0 %v4074
    %4114 = vmatpush1.bf16.msra.mxu0 %v4073
    %4115 = vmatprep.subr.bf16.mxu0 0
    %4116 = vmatpush1.bf16.msra.mxu0 0
    %4117 = vmatprep.subr.bf16.mxu0 0
    %4118 = vmatpush1.bf16.msra.mxu0 0
    %4119 = vmatprep.subr.bf16.mxu0 0
    %4120 = vmatpush1.bf16.msra.mxu0 0
    %4121 = vmatprep.subr.bf16.mxu0 0
    %4122 = vmatpush1.bf16.msra.mxu0 0
    %4123 = vmatprep.subr.bf16.mxu0 0
    %4124 = vmatpush1.bf16.msra.mxu0 0
    %4125 = vmatprep.subr.bf16.mxu0 0
    %4126 = vmatpush1.bf16.msra.mxu0 0
    %4127 = vmatprep.subr.bf16.mxu0 0
    %4128 = vmatpush1.bf16.msra.mxu0 0
    %4129 = vmatprep.subr.bf16.mxu0 0
    %4130 = vmatpush1.bf16.msra.mxu0 0
    %4131 = vmatprep.mubr.bf16.mxu0 0
    %4132 = vmatmul.mubr.bf16.gmra.mrb[0].mxu0 %v4007
    %v4133 = vpop.f32.mrb[0].mxu0
    %v4134 = vadd.f32 0.0, %v4133
    %v4135 = vpop.f32.mrb[0].mxu0
    %v4136 = vadd.f32 0.0, %v4135
    %v4137 = vpop.f32.mrb[0].mxu0
    %v4138 = vadd.f32 0.0, %v4137
    %v4139 = vpop.f32.mrb[0].mxu0
    %v4140 = vadd.f32 0.0, %v4139
    %4141 = vmatprep.mubr.bf16.mxu0 0
    %4142 = vmatmul.mubr.bf16.gmra.mrb[0].mxu0 %v4008
    %v4143 = vpop.f32.mrb[0].mxu0
    %v4144 = vadd.f32 0.0, %v4143
    %v4145 = vpop.f32.mrb[0].mxu0
    %v4146 = vadd.f32 0.0, %v4145
    %v4147 = vpop.f32.mrb[0].mxu0
    %v4148 = vadd.f32 0.0, %v4147
    %v4149 = vpop.f32.mrb[0].mxu0
    %v4150 = vadd.f32 0.0, %v4149
    %4151 = vdwg.mxu0
    %4152 = vmatprep.subr.bf16.mxu0 0
    %4153 = vmatpush1.bf16.msra.mxu0 %v4016
    %4154 = vmatprep.subr.bf16.mxu0 0
    %4155 = vmatpush1.bf16.msra.mxu0 %v4022
    %4156 = vmatprep.subr.bf16.mxu0 0
    %4157 = vmatpush1.bf16.msra.mxu0 %v4028
    %4158 = vmatprep.subr.bf16.mxu0 0
    %4159 = vmatpush1.bf16.msra.mxu0 %v4034
    %4160 = vmatprep.subr.bf16.mxu0 0
    %4161 = vmatpush1.bf16.msra.mxu0 %v4040
    %4162 = vmatprep.subr.bf16.mxu0 0
    %4163 = vmatpush1.bf16.msra.mxu0 %v4046
    %4164 = vmatprep.subr.bf16.mxu0 0
    %4165 = vmatpush1.bf16.msra.mxu0 %v4052
    %4166 = vmatprep.subr.bf16.mxu0 0
    %4167 = vmatpush1.bf16.msra.mxu0 %v4058
    %4168 = vmatprep.subr.bf16.mxu0 0
    %4169 = vmatpush1.bf16.msra.mxu0 0
    %4170 = vmatprep.subr.bf16.mxu0 0
    %4171 = vmatpush1.bf16.msra.mxu0 0
    %4172 = vmatprep.subr.bf16.mxu0 0
    %4173 = vmatpush1.bf16.msra.mxu0 0
    %4174 = vmatprep.subr.bf16.mxu0 0
    %4175 = vmatpush1.bf16.msra.mxu0 0
    %4176 = vmatprep.subr.bf16.mxu0 0
    %4177 = vmatpush1.bf16.msra.mxu0 0
    %4178 = vmatprep.subr.bf16.mxu0 0
    %4179 = vmatpush1.bf16.msra.mxu0 0
    %4180 = vmatprep.subr.bf16.mxu0 0
    %4181 = vmatpush1.bf16.msra.mxu0 0
    %4182 = vmatprep.subr.bf16.mxu0 0
    %4183 = vmatpush1.bf16.msra.mxu0 0
    %4184 = vmatprep.mubr.bf16.mxu0 0
    %4185 = vmatmul.mubr.bf16.gmra.mrb[0].mxu0 %v4007
    %v4186 = vpop.f32.mrb[0].mxu0
    %v4187 = vadd.f32 0.0, %v4186
    %v4188 = vpop.f32.mrb[0].mxu0
    %v4189 = vpop.f32.mrb[0].mxu0
    %v4190 = vadd.f32 0.0, %v4189
    %v4191 = vpop.f32.mrb[0].mxu0
    %4192 = vmatprep.mubr.bf16.mxu0 0
    %4193 = vmatmul.mubr.bf16.gmra.mrb[0].mxu0 %v4008
    %v4194 = vpop.f32.mrb[0].mxu0
    %v4195 = vadd.f32 0.0, %v4194
    %v4196 = vpop.f32.mrb[0].mxu0
    %v4197 = vpop.f32.mrb[0].mxu0
    %v4198 = vadd.f32 0.0, %v4197
    %v4199 = vpop.f32.mrb[0].mxu0
    %4200 = vdwg.mxu0
    %v4201 = vadd.f32 %v3983, %v4134
    %v4202 = vadd.f32 %v3984, %v4136
    %v4203 = vadd.f32 %v3985, %v4187
    %v4204 = vadd.f32 %v3986, %v4138
    %v4205 = vadd.f32 %v3987, %v4140
    %v4206 = vadd.f32 %v3988, %v4190
    %v4207 = vadd.f32 %v3989, %v4144
    %v4208 = vadd.f32 %v3990, %v4146
    %v4209 = vadd.f32 %v3991, %v4195
    %v4210 = vadd.f32 %v3992, %v4148
    %v4211 = vadd.f32 %v3993, %v4150
    %v4212 = vadd.f32 %v3994, %v4198
    %v4213 = vadd.f32 %v4201, %v2061
    %v4214 = vadd.f32 %v4202, %v2061
    %v4215 = vadd.f32 %v4203, %v2061
    %v4216 = vadd.f32 %v4204, %v2066
    %v4217 = vadd.f32 %v4205, %v2066
    %v4218 = vadd.f32 %v4206, %v2066
    %v4219 = vadd.f32 %v4207, %v2071
    %v4220 = vadd.f32 %v4208, %v2071
    %v4221 = vadd.f32 %v4209, %v2071
    %v4222 = vadd.f32 %v4210, %v2076
    %v4223 = vadd.f32 %v4211, %v2076
    %v4224 = vadd.f32 %v4212, %v2076
    %v4225 = vmax.f32 %v4213, 0.0
    %v4226 = vmax.f32 %v4214, 0.0
    %v4227 = vmax.f32 %v4215, 0.0
    %v4228 = vmax.f32 %v4216, 0.0
    %v4229 = vmax.f32 %v4217, 0.0
    %v4230 = vmax.f32 %v4218, 0.0
    %v4231 = vmax.f32 %v4219, 0.0
    %v4232 = vmax.f32 %v4220, 0.0
    %v4233 = vmax.f32 %v4221, 0.0
    %v4234 = vmax.f32 %v4222, 0.0
    %v4235 = vmax.f32 %v4223, 0.0
    %v4236 = vmax.f32 %v4224, 0.0
    %v4237 = vmul.f32 %v4225, %v2105
    %v4238 = vmul.f32 %v4226, %v2105
    %v4239 = vmul.f32 %v4227, %v2105
    %v4240 = vmul.f32 %v4228, %v2110
    %v4241 = vmul.f32 %v4229, %v2110
    %v4242 = vmul.f32 %v4230, %v2110
    %v4243 = vmul.f32 %v4231, %v2115
    %v4244 = vmul.f32 %v4232, %v2115
    %v4245 = vmul.f32 %v4233, %v2115
    %v4246 = vmul.f32 %v4234, %v2120
    %v4247 = vmul.f32 %v4235, %v2120
    %v4248 = vmul.f32 %v4236, %v2120
    %v4249 = vadd.f32 %v4237, %v4240
    %v4250 = vadd.f32 %v4249, %v4243
    %v4251 = vadd.f32 %v4250, %v4246
    %v4252 = vrot.slane %v4251, 4
    %v4253 = vadd.f32 %v4251, %v4252
    %v4254 = vrot.slane %v4253, 2
    %v4255 = vadd.f32 %v4253, %v4254
    %v4256 = vrot.slane %v4255, 1
    %v4257 = vadd.f32 %v4255, %v4256
    %v4258 = vadd.f32 %v4238, %v4241
    %v4259 = vadd.f32 %v4258, %v4244
    %v4260 = vadd.f32 %v4259, %v4247
    %v4261 = vrot.slane %v4260, 4
    %v4262 = vadd.f32 %v4260, %v4261
    %v4263 = vrot.slane %v4262, 2
    %v4264 = vadd.f32 %v4262, %v4263
    %v4265 = vrot.slane %v4264, 1
    %v4266 = vadd.f32 %v4264, %v4265
    %v4267 = vsel %vm2152, %v4239, 0.0
    %v4268 = vsel %vm2152, %v4242, 0.0
    %v4269 = vadd.f32 %v4267, %v4268
    %v4270 = vsel %vm2152, %v4245, 0.0
    %v4271 = vadd.f32 %v4269, %v4270
    %v4272 = vsel %vm2152, %v4248, 0.0
    %v4273 = vadd.f32 %v4271, %v4272
    %v4274 = vrot.slane %v4273, 4
    %v4275 = vadd.f32 %v4273, %v4274
    %v4276 = vrot.slane %v4275, 2
    %v4277 = vadd.f32 %v4275, %v4276
    %v4278 = vrot.slane %v4277, 1
    %v4279 = vadd.f32 %v4277, %v4278
    %v4280 = vadd.f32 %v4257, %v2166
    %v4281 = vadd.f32 %v4266, %v2166
    %v4282 = vadd.f32 %v4279, %v2166
    %v4286 = vcombine.low %v4280, %v4281
    %v4288 = vunpack.c.l.s4 1966171168
    %v4289 = vunpack.c.0.s8 %v4288
    %v4290 = vlaneseq
    %v4291 = vshrl.u32 %v4290, 7
    %v4292 = vsub.s32 %v4289, %v4291
    %v4293 = vrot.slane %v4286, %v4292
    %v4295 = vunpack.c.l.s4 1966171168
    %v4296 = vunpack.c.0.s8 %v4295
    %v4297 = vlaneseq
    %v4298 = vshrl.u32 %v4297, 7
    %v4299 = vsub.s32 %v4296, %v4298
    %v4300 = vrot.slane %v4282, %v4299
    %v4301 = vcombine.low %v4293, %v4300
    %v4303 = vunpack.c.l.s4 1966171168
    %v4304 = vunpack.c.0.s8 %v4303
    %v4305 = vlaneseq
    %v4306 = vshrl.u32 %v4305, 7
    %v4307 = vsub.s32 %v4304, %v4306
    %v4308 = vrot.slane %v4301, %v4307
    %s4310 = scalar_lea.vmem [#allocation3], 1
    %4311 = vst.msk [vmem:[%s4310] ss:$2 sm:$0x7] %vm2200, %v4308
    // Predicated region
    $region22: #{tpu_custom_call.1} parent=1 // pred_check
      _
    $region23: #{tpu_custom_call.1} parent=1 // pred_check_branch
      %4313 = sbr.rel (0) target = $region25
    $region24: #{tpu_custom_call.1} parent=1 // pred_region
      %s4315 = ssub.s32 96, 96
      %4316 = vsyncadd [#allocation4], %s4315
      %s4318 = sshll.u32 [#allocation3], 4
      %s4319 = int_to_ptr.vmem [resolvable:$true] %s4318
      %4321 = dma.vmem_to_hbm [thread:$0]  %s4319, 96, %s5, [#allocation4]
    $region25: #{tpu_custom_call.1} parent=1 // pred_fallthru
      _
    // Predicated region
    $region26: #{tpu_custom_call.1} parent=1 // pred_check
      _
    $region27: #{tpu_custom_call.1} parent=1 // pred_check_branch
      %4323 = sbr.rel (0) target = $region29
    $region28: #{tpu_custom_call.1} parent=1 // pred_region
      %4324 = dma.done [#allocation4], 96
    $region29: #{tpu_custom_call.1} parent=1 // pred_fallthru
      _
    %4325 = vsyncpa [#allocation4], 1

</llo_original>
